<compile_context>
chip_gen: v6e
topology: v6e:2x2x1
jax: 0.10.0
libtpu: 0.0.40
codegen_flags: <defaults>
</compile_context>

<pallas_src>
import jax
import jax.numpy as jnp
from jax.experimental import pallas as pl
from jax.experimental.pallas import tpu as pltpu

HIDDEN = 1024
BN_EPS = 1e-5


# --------------------------------------------------------------------------
# Kernel
# --------------------------------------------------------------------------
def _decoder_kernel(x_ref, w1_ref, w2_hbm, w3_hbm, bn_ref, b3d3_ref,
                    out_ref, w2_vmem, w3_vmem, dma_sems):
    """x: (B,1024) bf16.  w1: (1024,1024) int8 (auto-DMA'd to VMEM).
    w2/w3: int8 left in HBM (pl.ANY), streamed manually so the copies overlap
    layer-1 compute.  bn: (6,1024) f32 rows = [g1, be1, g2, be2, d1, d2]
    (d* = per-output-channel dequant scales).  b3d3: (2, out_dim) = [b3, d3].
    """
    # Kick off the W2 / W3 streams immediately; they overlap layer-1 work.
    w2_cp = pltpu.make_async_copy(w2_hbm, w2_vmem, dma_sems.at[0])
    w3_cp = pltpu.make_async_copy(w3_hbm, w3_vmem, dma_sems.at[1])
    w2_cp.start()
    w3_cp.start()

    x = x_ref[...]                          # (B, 1024) bf16
    bn = bn_ref[...]                        # (6, 1024) f32
    g1, be1 = bn[0:1, :], bn[1:2, :]
    g2, be2 = bn[2:3, :], bn[3:4, :]
    d1, d2 = bn[4:5, :], bn[5:6, :]
    b3 = b3d3_ref[0:1, :]
    d3 = b3d3_ref[1:2, :]

    def deq_bf16(w_q):
        # int8 values are exactly representable in bf16.  The dequant scale
        # is NOT applied here: it is folded into the BN scale (layers 1/2) or
        # into the post-matmul scale (layer 3).  Two-step cast keeps the
        # lowering on well-supported convert ops.
        return w_q.astype(jnp.float32).astype(jnp.bfloat16)

    def bn_relu(h_q, d, g, be):
        # True pre-BN activation is h = h_q * d (d broadcast per channel).
        # Stats are computed on h_q and the scale folded into one fused
        # scale/shift:
        #   s     = g * rsqrt(var_q * d^2 + eps)
        #   y     = h_q * (d*s) + (be - mu_q * d*s)
        # (b1/b2 omitted: they cancel exactly under batch-stat BN.)
        mu_q = jnp.mean(h_q, axis=0, keepdims=True)
        var_q = jnp.mean((h_q - mu_q) * (h_q - mu_q), axis=0, keepdims=True)
        s = g * jax.lax.rsqrt(var_q * (d * d) + BN_EPS)     # EUP rsqrt
        s_eff = d * s
        return jnp.maximum(h_q * s_eff + (be - mu_q * s_eff), 0.0)

    # ---- layer 1: linear (int8-deq) -> BN(batch stats) -> relu -----------
    h_q = jnp.dot(x, deq_bf16(w1_ref[...]),
                  preferred_element_type=jnp.float32)
    h = bn_relu(h_q, d1, g1, be1)

    # ---- layer 2 ----------------------------------------------------------
    w2_cp.wait()
    h_q = jnp.dot(h.astype(jnp.bfloat16), deq_bf16(w2_vmem[...]),
                  preferred_element_type=jnp.float32)
    h = bn_relu(h_q, d2, g2, be2)

    # ---- layer 3: linear + bias (dequant scale applied post-matmul) -------
    w3_cp.wait()
    y_q = jnp.dot(h.astype(jnp.bfloat16), deq_bf16(w3_vmem[...]),
                  preferred_element_type=jnp.float32)
    out_ref[...] = (y_q * d3 + b3).astype(out_ref.dtype)


# --------------------------------------------------------------------------
# Wrapper
# --------------------------------------------------------------------------
def _quantize_per_out_channel(w):
    """Symmetric per-output-channel int8 quantization. Returns (w_q, scale)."""
    amax = jnp.max(jnp.abs(w), axis=0, keepdims=True)            # (1, N)
    scale = jnp.maximum(amax, 1e-12) / 127.0
    w_q = jnp.clip(jnp.round(w / scale), -127.0, 127.0).astype(jnp.int8)
    return w_q, scale


def quantize_params(params):
    """Pack module params into the kernel's quantized/fused layout."""
    w1, b1, g1, be1, w2, b2, g2, be2, w3, b3 = params
    w1_q, d1 = _quantize_per_out_channel(w1)
    w2_q, d2 = _quantize_per_out_channel(w2)
    w3_q, d3 = _quantize_per_out_channel(w3)
    # b1 / b2 intentionally dropped (no-op before train-mode BN).
    bn_packed = jnp.concatenate([g1, be1, g2, be2, d1, d2], axis=0)  # (6,1024)
    b3d3 = jnp.concatenate([b3, d3], axis=0)                         # (2,out)
    return (w1_q, w2_q, w3_q, bn_packed, b3d3)


def decoder_forward(x, qparams, num_coarse):
    """x: (B, 1024) float32 -> y_coarse: (B, 3, num_coarse) float32."""
    B = x.shape[0]
    out_dim = 3 * num_coarse
    assert out_dim % 128 == 0, "keep 3*num_coarse lane-dense (multiple of 128)"

    w1_q, w2_q, w3_q, bn_packed, b3d3 = qparams
    x_bf = x.astype(jnp.bfloat16)       # cast once in the wrapper

    inputs = (x_bf, w1_q, w2_q, w3_q, bn_packed, b3d3)

    def full_spec(shape):
        return pl.BlockSpec(shape, lambda: (0,) * len(shape))

    in_specs = [
        full_spec(x_bf.shape),
        full_spec(w1_q.shape),
        pl.BlockSpec(memory_space=pl.ANY),     # W2: streamed manually
        pl.BlockSpec(memory_space=pl.ANY),     # W3: streamed manually
        full_spec(bn_packed.shape),
        full_spec(b3d3.shape),
    ]

    bytes_accessed = sum(int(a.size) * a.dtype.itemsize for a in inputs) \
        + B * out_dim * 4
    cost = pl.CostEstimate(
        flops=2 * B * HIDDEN * (HIDDEN + HIDDEN + out_dim),
        transcendentals=2 * HIDDEN,
        bytes_accessed=bytes_accessed)

    y_flat = pl.pallas_call(
        _decoder_kernel,
        out_shape=jax.ShapeDtypeStruct((B, out_dim), jnp.float32),
        grid=(),
        in_specs=in_specs,
        out_specs=full_spec((B, out_dim)),
        scratch_shapes=[
            pltpu.VMEM((HIDDEN, HIDDEN), jnp.int8),    # W2 landing buffer
            pltpu.VMEM((HIDDEN, out_dim), jnp.int8),   # W3 landing buffer
            pltpu.SemaphoreType.DMA((2,)),
        ],
        # ~2.75 MiB int8 weights + dequant temporaries + tiny activations;
        # 24 MiB leaves headroom on every generation (v7x scoped default 32).
        compiler_params=pltpu.CompilerParams(vmem_limit_bytes=24 << 20),
        cost_estimate=cost,
    )(*inputs)

    return y_flat.reshape(B, 3, num_coarse)


# --------------------------------------------------------------------------
# Parameters & references
# --------------------------------------------------------------------------
def init_params(key, num_coarse):
    """Deterministic synthetic parameters with the same shapes as the module."""
    out_dim = 3 * num_coarse
    ks = jax.random.split(key, 6)

    # nn.Linear weight is (out, in); we store the transpose (in, out).
    w1 = jax.random.normal(ks[0], (HIDDEN, HIDDEN), jnp.float32) * 0.02
    b1 = jax.random.normal(ks[1], (1, HIDDEN), jnp.float32) * 0.02
    w2 = jax.random.normal(ks[2], (HIDDEN, HIDDEN), jnp.float32) * 0.02
    b2 = jax.random.normal(ks[3], (1, HIDDEN), jnp.float32) * 0.02
    w3 = jax.random.normal(ks[4], (HIDDEN, out_dim), jnp.float32) * 0.02
    b3 = jax.random.normal(ks[5], (1, out_dim), jnp.float32) * 0.02

    # BatchNorm1d affine params (gamma=1, beta=0 at init).
    g1 = jnp.ones((1, HIDDEN), jnp.float32)
    be1 = jnp.zeros((1, HIDDEN), jnp.float32)
    g2 = jnp.ones((1, HIDDEN), jnp.float32)
    be2 = jnp.zeros((1, HIDDEN), jnp.float32)

    return (w1, b1, g1, be1, w2, b2, g2, be2, w3, b3)


def _bn_train(h, g, be):
    mu = jnp.mean(h, axis=0, keepdims=True)
    var = jnp.mean((h - mu) ** 2, axis=0, keepdims=True)
    return (h - mu) / jnp.sqrt(var + BN_EPS) * g + be


def decoder_reference_f32(x, params, num_coarse):
    """Pure-JAX f32 reference (exact module semantics, biases included)."""
    w1, b1, g1, be1, w2, b2, g2, be2, w3, b3 = params
    h = jax.nn.relu(_bn_train(x @ w1 + b1, g1, be1))
    h = jax.nn.relu(_bn_train(h @ w2 + b2, g2, be2))
    y = h @ w3 + b3
    return y.reshape(x.shape[0], 3, num_coarse)


def decoder_reference_matched(x, params, qparams, num_coarse):
    """Reference that mirrors the kernel's numerics (int8-dequant bf16 weights,
    bf16 matmul inputs, f32 accumulation / BN).  Biases b1/b2 are kept here on
    purpose to confirm they cancel under batch-stat BN."""
    _, b1, g1, be1, _, b2, g2, be2, _, b3 = params
    w1_q, w2_q, w3_q, bn_packed, b3d3 = qparams
    d1, d2 = bn_packed[4:5, :], bn_packed[5:6, :]
    d3 = b3d3[1:2, :]

    def mm_deq(a, wq, d):
        w_bf = wq.astype(jnp.float32).astype(jnp.bfloat16)
        return jnp.dot(a.astype(jnp.bfloat16), w_bf,
                       preferred_element_type=jnp.float32) * d

    h = jax.nn.relu(_bn_train(mm_deq(x, w1_q, d1) + b1, g1, be1))
    h = jax.nn.relu(_bn_train(mm_deq(h, w2_q, d2) + b2, g2, be2))
    y = mm_deq(h, w3_q, d3) + b3
    return y.reshape(x.shape[0], 3, num_coarse)


# --------------------------------------------------------------------------
if __name__ == "__main__":
    # Small shapes: batch=8, feature dim fixed at 1024 by the module,
    # num_coarse shrunk to 256 (constructor argument) -> output (8, 3, 256).
    B = 8
    NUM_COARSE = 256   # 3 * 256 = 768 output features, lane-dense

    key = jax.random.PRNGKey(0)
    k_x, k_p = jax.random.split(key)

    x = jax.random.normal(k_x, (B, HIDDEN), jnp.float32)
    params = init_params(k_p, NUM_COARSE)
    qparams = quantize_params(params)

    y = decoder_forward(x, qparams, NUM_COARSE)
    y = jax.block_until_ready(y)
    assert y.shape == (B, 3, NUM_COARSE), y.shape

    # Tight check vs a reference that reproduces the kernel's exact numerics.
    y_matched = decoder_reference_matched(x, params, qparams, NUM_COARSE)
    assert jnp.allclose(y, y_matched, atol=1e-2, rtol=1e-2), \
        float(jnp.max(jnp.abs(y - y_matched)))

    # Looser sanity check vs the exact f32 module semantics (int8 weight
    # quantization + bf16 matmuls introduce a few-percent deviation).
    y_f32 = decoder_reference_f32(x, params, NUM_COARSE)
    rel = jnp.linalg.norm((y - y_f32).ravel()) / jnp.linalg.norm(y_f32.ravel())
    assert float(rel) < 0.1, float(rel)

    print("KERNEL_OK")
</pallas_src>

<mosaic_0001>
module attributes {stable_mosaic.version = 11 : i64} {
  func.func @_decoder_kernel(%arg0: memref<8x1024xbf16, #tpu.memory_space<vmem>>, %arg1: memref<1024x1024xi8, #tpu.memory_space<vmem>>, %arg2: memref<1024x1024xi8, #tpu.memory_space<any>>, %arg3: memref<1024x768xi8, #tpu.memory_space<any>>, %arg4: memref<6x1024xf32, #tpu.memory_space<vmem>>, %arg5: memref<2x768xf32, #tpu.memory_space<vmem>>, %arg6: memref<8x768xf32, #tpu.memory_space<vmem>>, %arg7: memref<1024x1024xi8, #tpu.memory_space<vmem>>, %arg8: memref<1024x768xi8, #tpu.memory_space<vmem>>, %arg9: memref<2x!tpu.dma_semaphore, #tpu.memory_space<semaphore_mem>>) attributes {dimension_semantics = [], scalar_prefetch = 0 : i64, scratch_operands = 3 : i64, tpu.core_type = #tpu.core_type<tc>} {
    %c0_i32 = arith.constant 0 : i32
    %0 = tpu.memref_slice %arg9[%c0_i32] : memref<2x!tpu.dma_semaphore, #tpu.memory_space<semaphore_mem>> -> memref<1x!tpu.dma_semaphore, #tpu.memory_space<semaphore_mem>>
    %1 = tpu.memref_squeeze %0 : memref<1x!tpu.dma_semaphore, #tpu.memory_space<semaphore_mem>> -> memref<!tpu.dma_semaphore, #tpu.memory_space<semaphore_mem>>
    tpu.enqueue_dma source(%arg2 : memref<1024x1024xi8, #tpu.memory_space<any>>) target(%arg7 : memref<1024x1024xi8, #tpu.memory_space<vmem>>) target_semaphore(%1 : memref<!tpu.dma_semaphore, #tpu.memory_space<semaphore_mem>>)
    %c1_i32 = arith.constant 1 : i32
    %2 = tpu.memref_slice %arg9[%c1_i32] : memref<2x!tpu.dma_semaphore, #tpu.memory_space<semaphore_mem>> -> memref<1x!tpu.dma_semaphore, #tpu.memory_space<semaphore_mem>>
    %3 = tpu.memref_squeeze %2 : memref<1x!tpu.dma_semaphore, #tpu.memory_space<semaphore_mem>> -> memref<!tpu.dma_semaphore, #tpu.memory_space<semaphore_mem>>
    tpu.enqueue_dma source(%arg3 : memref<1024x768xi8, #tpu.memory_space<any>>) target(%arg8 : memref<1024x768xi8, #tpu.memory_space<vmem>>) target_semaphore(%3 : memref<!tpu.dma_semaphore, #tpu.memory_space<semaphore_mem>>)
    %c0 = arith.constant 0 : index
    %c0_0 = arith.constant 0 : index
    %4 = vector.load %arg0[%c0, %c0_0] : memref<8x1024xbf16, #tpu.memory_space<vmem>>, vector<8x1024xbf16>
    %c0_1 = arith.constant 0 : index
    %c0_2 = arith.constant 0 : index
    %5 = vector.load %arg4[%c0_1, %c0_2] : memref<6x1024xf32, #tpu.memory_space<vmem>>, vector<6x1024xf32>
    %6 = vector.extract_strided_slice %5 {offsets = [0, 0], sizes = [1, 1024], strides = [1, 1]} : vector<6x1024xf32> to vector<1x1024xf32>
    %7 = vector.extract_strided_slice %5 {offsets = [1, 0], sizes = [1, 1024], strides = [1, 1]} : vector<6x1024xf32> to vector<1x1024xf32>
    %8 = vector.extract_strided_slice %5 {offsets = [2, 0], sizes = [1, 1024], strides = [1, 1]} : vector<6x1024xf32> to vector<1x1024xf32>
    %9 = vector.extract_strided_slice %5 {offsets = [3, 0], sizes = [1, 1024], strides = [1, 1]} : vector<6x1024xf32> to vector<1x1024xf32>
    %10 = vector.extract_strided_slice %5 {offsets = [4, 0], sizes = [1, 1024], strides = [1, 1]} : vector<6x1024xf32> to vector<1x1024xf32>
    %11 = vector.extract_strided_slice %5 {offsets = [5, 0], sizes = [1, 1024], strides = [1, 1]} : vector<6x1024xf32> to vector<1x1024xf32>
    %c0_3 = arith.constant 0 : index
    %c0_4 = arith.constant 0 : index
    %12 = vector.load %arg5[%c0_3, %c0_4] : memref<2x768xf32, #tpu.memory_space<vmem>>, vector<1x768xf32>
    %c1 = arith.constant 1 : index
    %c0_5 = arith.constant 0 : index
    %13 = vector.load %arg5[%c1, %c0_5] : memref<2x768xf32, #tpu.memory_space<vmem>>, vector<1x768xf32>
    %c0_6 = arith.constant 0 : index
    %c0_7 = arith.constant 0 : index
    %14 = vector.load %arg1[%c0_6, %c0_7] : memref<1024x1024xi8, #tpu.memory_space<vmem>>, vector<1024x1024xi8>
    %15 = arith.sitofp %14 : vector<1024x1024xi8> to vector<1024x1024xf32>
    %16 = arith.truncf %15 : vector<1024x1024xf32> to vector<1024x1024xbf16>
    %cst = arith.constant dense<0.000000e+00> : vector<8x1024xf32>
    %17 = tpu.matmul %4, %16, %cst {dimension_numbers = #tpu.dot_dimension_numbers<[1], [0], [0], [1], [0, 0, 1, 1], [], []>} : vector<8x1024xbf16>, vector<1024x1024xbf16>, vector<8x1024xf32> -> vector<8x1024xf32>
    %cst_8 = arith.constant dense<0.000000e+00> : vector<1024xf32>
    %18 = vector.multi_reduction <add>, %17, %cst_8 [0] : vector<8x1024xf32> to vector<1024xf32>
    %19 = vector.shape_cast %18 : vector<1024xf32> to vector<1x1024xf32>
    %cst_9 = arith.constant 8.000000e+00 : f32
    %20 = vector.broadcast %cst_9 : f32 to vector<1x1024xf32>
    %21 = arith.divf %19, %20 : vector<1x1024xf32>
    %22 = vector.broadcast %21 : vector<1x1024xf32> to vector<8x1024xf32>
    %23 = arith.subf %17, %22 : vector<8x1024xf32>
    %24 = vector.broadcast %21 : vector<1x1024xf32> to vector<8x1024xf32>
    %25 = arith.subf %17, %24 : vector<8x1024xf32>
    %26 = arith.mulf %23, %25 : vector<8x1024xf32>
    %cst_10 = arith.constant dense<0.000000e+00> : vector<1024xf32>
    %27 = vector.multi_reduction <add>, %26, %cst_10 [0] : vector<8x1024xf32> to vector<1024xf32>
    %28 = vector.shape_cast %27 : vector<1024xf32> to vector<1x1024xf32>
    %cst_11 = arith.constant 8.000000e+00 : f32
    %29 = vector.broadcast %cst_11 : f32 to vector<1x1024xf32>
    %30 = arith.divf %28, %29 : vector<1x1024xf32>
    %31 = arith.mulf %10, %10 : vector<1x1024xf32>
    %32 = arith.mulf %30, %31 : vector<1x1024xf32>
    %cst_12 = arith.constant 9.99999974E-6 : f32
    %33 = vector.broadcast %cst_12 : f32 to vector<1x1024xf32>
    %34 = arith.addf %32, %33 : vector<1x1024xf32>
    %35 = math.rsqrt %34 : vector<1x1024xf32>
    %36 = arith.mulf %6, %35 : vector<1x1024xf32>
    %37 = arith.mulf %10, %36 : vector<1x1024xf32>
    %38 = vector.broadcast %37 : vector<1x1024xf32> to vector<8x1024xf32>
    %39 = arith.mulf %17, %38 : vector<8x1024xf32>
    %40 = arith.mulf %21, %37 : vector<1x1024xf32>
    %41 = arith.subf %7, %40 : vector<1x1024xf32>
    %42 = vector.broadcast %41 : vector<1x1024xf32> to vector<8x1024xf32>
    %43 = arith.addf %39, %42 : vector<8x1024xf32>
    %cst_13 = arith.constant 0.000000e+00 : f32
    %44 = vector.broadcast %cst_13 : f32 to vector<8x1024xf32>
    %45 = arith.maximumf %43, %44 : vector<8x1024xf32>
    %c0_i32_14 = arith.constant 0 : i32
    %46 = tpu.memref_slice %arg9[%c0_i32_14] : memref<2x!tpu.dma_semaphore, #tpu.memory_space<semaphore_mem>> -> memref<1x!tpu.dma_semaphore, #tpu.memory_space<semaphore_mem>>
    %47 = tpu.memref_squeeze %46 : memref<1x!tpu.dma_semaphore, #tpu.memory_space<semaphore_mem>> -> memref<!tpu.dma_semaphore, #tpu.memory_space<semaphore_mem>>
    tpu.wait_dma2 semaphore(%47 : memref<!tpu.dma_semaphore, #tpu.memory_space<semaphore_mem>>) src(%arg2 : memref<1024x1024xi8, #tpu.memory_space<any>>) dst(%arg7 : memref<1024x1024xi8, #tpu.memory_space<vmem>>)
    %48 = arith.truncf %45 : vector<8x1024xf32> to vector<8x1024xbf16>
    %c0_15 = arith.constant 0 : index
    %c0_16 = arith.constant 0 : index
    %49 = vector.load %arg7[%c0_15, %c0_16] : memref<1024x1024xi8, #tpu.memory_space<vmem>>, vector<1024x1024xi8>
    %50 = arith.sitofp %49 : vector<1024x1024xi8> to vector<1024x1024xf32>
    %51 = arith.truncf %50 : vector<1024x1024xf32> to vector<1024x1024xbf16>
    %cst_17 = arith.constant dense<0.000000e+00> : vector<8x1024xf32>
    %52 = tpu.matmul %48, %51, %cst_17 {dimension_numbers = #tpu.dot_dimension_numbers<[1], [0], [0], [1], [0, 0, 1, 1], [], []>} : vector<8x1024xbf16>, vector<1024x1024xbf16>, vector<8x1024xf32> -> vector<8x1024xf32>
    %cst_18 = arith.constant dense<0.000000e+00> : vector<1024xf32>
    %53 = vector.multi_reduction <add>, %52, %cst_18 [0] : vector<8x1024xf32> to vector<1024xf32>
    %54 = vector.shape_cast %53 : vector<1024xf32> to vector<1x1024xf32>
    %cst_19 = arith.constant 8.000000e+00 : f32
    %55 = vector.broadcast %cst_19 : f32 to vector<1x1024xf32>
    %56 = arith.divf %54, %55 : vector<1x1024xf32>
    %57 = vector.broadcast %56 : vector<1x1024xf32> to vector<8x1024xf32>
    %58 = arith.subf %52, %57 : vector<8x1024xf32>
    %59 = vector.broadcast %56 : vector<1x1024xf32> to vector<8x1024xf32>
    %60 = arith.subf %52, %59 : vector<8x1024xf32>
    %61 = arith.mulf %58, %60 : vector<8x1024xf32>
    %cst_20 = arith.constant dense<0.000000e+00> : vector<1024xf32>
    %62 = vector.multi_reduction <add>, %61, %cst_20 [0] : vector<8x1024xf32> to vector<1024xf32>
    %63 = vector.shape_cast %62 : vector<1024xf32> to vector<1x1024xf32>
    %cst_21 = arith.constant 8.000000e+00 : f32
    %64 = vector.broadcast %cst_21 : f32 to vector<1x1024xf32>
    %65 = arith.divf %63, %64 : vector<1x1024xf32>
    %66 = arith.mulf %11, %11 : vector<1x1024xf32>
    %67 = arith.mulf %65, %66 : vector<1x1024xf32>
    %cst_22 = arith.constant 9.99999974E-6 : f32
    %68 = vector.broadcast %cst_22 : f32 to vector<1x1024xf32>
    %69 = arith.addf %67, %68 : vector<1x1024xf32>
    %70 = math.rsqrt %69 : vector<1x1024xf32>
    %71 = arith.mulf %8, %70 : vector<1x1024xf32>
    %72 = arith.mulf %11, %71 : vector<1x1024xf32>
    %73 = vector.broadcast %72 : vector<1x1024xf32> to vector<8x1024xf32>
    %74 = arith.mulf %52, %73 : vector<8x1024xf32>
    %75 = arith.mulf %56, %72 : vector<1x1024xf32>
    %76 = arith.subf %9, %75 : vector<1x1024xf32>
    %77 = vector.broadcast %76 : vector<1x1024xf32> to vector<8x1024xf32>
    %78 = arith.addf %74, %77 : vector<8x1024xf32>
    %cst_23 = arith.constant 0.000000e+00 : f32
    %79 = vector.broadcast %cst_23 : f32 to vector<8x1024xf32>
    %80 = arith.maximumf %78, %79 : vector<8x1024xf32>
    %c1_i32_24 = arith.constant 1 : i32
    %81 = tpu.memref_slice %arg9[%c1_i32_24] : memref<2x!tpu.dma_semaphore, #tpu.memory_space<semaphore_mem>> -> memref<1x!tpu.dma_semaphore, #tpu.memory_space<semaphore_mem>>
    %82 = tpu.memref_squeeze %81 : memref<1x!tpu.dma_semaphore, #tpu.memory_space<semaphore_mem>> -> memref<!tpu.dma_semaphore, #tpu.memory_space<semaphore_mem>>
    tpu.wait_dma2 semaphore(%82 : memref<!tpu.dma_semaphore, #tpu.memory_space<semaphore_mem>>) src(%arg3 : memref<1024x768xi8, #tpu.memory_space<any>>) dst(%arg8 : memref<1024x768xi8, #tpu.memory_space<vmem>>)
    %83 = arith.truncf %80 : vector<8x1024xf32> to vector<8x1024xbf16>
    %c0_25 = arith.constant 0 : index
    %c0_26 = arith.constant 0 : index
    %84 = vector.load %arg8[%c0_25, %c0_26] : memref<1024x768xi8, #tpu.memory_space<vmem>>, vector<1024x768xi8>
    %85 = arith.sitofp %84 : vector<1024x768xi8> to vector<1024x768xf32>
    %86 = arith.truncf %85 : vector<1024x768xf32> to vector<1024x768xbf16>
    %cst_27 = arith.constant dense<0.000000e+00> : vector<8x768xf32>
    %87 = tpu.matmul %83, %86, %cst_27 {dimension_numbers = #tpu.dot_dimension_numbers<[1], [0], [0], [1], [0, 0, 1, 1], [], []>} : vector<8x1024xbf16>, vector<1024x768xbf16>, vector<8x768xf32> -> vector<8x768xf32>
    %88 = vector.broadcast %13 : vector<1x768xf32> to vector<8x768xf32>
    %89 = arith.mulf %87, %88 : vector<8x768xf32>
    %90 = vector.broadcast %12 : vector<1x768xf32> to vector<8x768xf32>
    %91 = arith.addf %89, %90 : vector<8x768xf32>
    %c0_28 = arith.constant 0 : index
    %c0_29 = arith.constant 0 : index
    %92 = vector.load %arg6[%c0_28, %c0_29] : memref<8x768xf32, #tpu.memory_space<vmem>>, vector<8x768xf32>
    tpu.vector_store %arg6[%c0_28, %c0_29], %91 {strides = array<i32>} : memref<8x768xf32, #tpu.memory_space<vmem>>, vector<8x768xf32>,
    return
  }
}

</mosaic_0001>

<llo_original>
// kernel: tpu_custom_call.1
$region0: #{tpu_custom_call.1}
  #allocation0 [shape = 'u32[]', space=smem, size = 0x4, offset = 0x4, fixed_abs, tag = 'smem constant byte address 0x4 - core index']
  #allocation1 [shape = 'u32[144,128]{1,0:T(1,128)}', space=vmem, size = 0x12000, scoped, tag = 'internal scratch']
  #allocation2 [shape = 's8[1024,1024]{1,0:T(32,128)(4,1)}', space=vmem, size = 0x100000, scoped, tag = 'scratch operand']
  #allocation3 [shape = 's8[1024,768]{1,0:T(32,128)(4,1)}', space=vmem, size = 0xc0000, scoped, tag = 'scratch operand']
  #allocation4 [shape = 's32[2]{0}', space=sflag, size = 0x8, scoped, tag = 'scratch operand']
  #allocation14 [shape = 's32[]', space=sflag, size = 0x4, offset = 0, fixed_abs, tag = 'sflag constant byte address 0x0 - dummy sync flag']
  #allocation15 [shape = 's32[]', space=sflag, size = 0x4, offset = 0, fixed_abs, tag = 'sflag constant byte address 0x0 - dummy sync flag']
  #allocation16 [shape = 'u32[]', space=smem, size = 0x4, offset = 0x44, fixed_abs, tag = 'smem constant byte address 0x44 - assertion arg 0']
  #allocation17 [shape = 'u32[]', space=smem, size = 0x4, offset = 0x48, fixed_abs, tag = 'smem constant byte address 0x48 - assertion arg 1']
  #allocation18 [shape = 's32[]', space=sflag, size = 0x4, offset = 0, fixed_abs, tag = 'sflag constant byte address 0x0 - dummy sync flag']
  #allocation19 [shape = 's32[]', space=sflag, size = 0x4, offset = 0, fixed_abs, tag = 'sflag constant byte address 0x0 - dummy sync flag']
  %s0 = inlined_call_operand.hbm [shape: bf16[8,1024], index: 0, kind: input, shape index: {}]
  %s1 = inlined_call_operand.hbm [shape: s8[1024,1024], index: 1, kind: input, shape index: {}]
  %s2 = inlined_call_operand.hbm [shape: s8[1024,1024], index: 2, kind: input, shape index: {}]
  %s3 = inlined_call_operand.hbm [shape: s8[1024,768], index: 3, kind: input, shape index: {}]
  %s4 = inlined_call_operand.hbm [shape: f32[6,1024], index: 4, kind: input, shape index: {}]
  %s5 = inlined_call_operand.hbm [shape: f32[2,768], index: 5, kind: input, shape index: {}]
  %s6 = inlined_call_operand.hbm [shape: f32[8,768], index: 6, kind: output, shape index: {}]
  %s7 = sld [smem:[#allocation0]]
  $region50: #{tpu_custom_call.1} parent=0
    _
  %s9 = ssub.s32 1, %s7
  %s10 = scalar_select 0, %s9, %s7
  $region1: #{tpu_custom_call.1} parent=0
    #allocation5 [shape = 'u8[16384]{0}', space=vmem, size = 0x4000, scoped, tag = 'input window, operand 0, single buffered']
    #allocation6 [shape = 's32[1]{0}', space=sflag, size = 0x4, scoped, tag = 'scoped memory for tpu_custom_call.1']
    #allocation7 [shape = 's32[1]{0}', space=sflag, size = 0x4, scoped, tag = 'scoped memory for tpu_custom_call.1']
    #allocation8 [shape = 'u8[1048576]{0}', space=vmem, size = 0x100000, scoped, tag = 'input window, operand 1, single buffered']
    #allocation9 [shape = 's32[1]{0}', space=sflag, size = 0x4, scoped, tag = 'scoped memory for tpu_custom_call.1']
    #allocation10 [shape = 'u8[32768]{0}', space=vmem, size = 0x8000, scoped, tag = 'input window, operand 4, single buffered']
    #allocation11 [shape = 'u8[6144]{0}', space=vmem, size = 0x1800, scoped, tag = 'input window, operand 5, single buffered']
    #allocation12 [shape = 's32[1]{0}', space=sflag, size = 0x4, scoped, tag = 'scoped memory for tpu_custom_call.1']
    #allocation13 [shape = 'u8[24576]{0}', space=vmem, size = 0x6000, scoped, tag = 'output window, operand 0, single buffered']
    %11 = vsyncpa [#allocation6], 0
    %12 = vsyncpa [#allocation9], 0
    %13 = vsyncpa [#allocation12], 0
    %14 = vsyncpa [#allocation7], 0
    // Predicated region
    $region2: #{tpu_custom_call.1} parent=1 // pred_check
      _
    $region3: #{tpu_custom_call.1} parent=1 // pred_check_branch
      %16 = sbr.rel (0) target = $region5
    $region4: #{tpu_custom_call.1} parent=1 // pred_region
      %s18 = ssub.s32 512, 512
      %19 = vsyncadd [#allocation6], %s18
      %s21 = sshll.u32 [#allocation5], 4
      %s22 = int_to_ptr.vmem [resolvable:$true] %s21
      %24 = dma.hbm_to_vmem [thread:$0]  %s0, 512, %s22, [#allocation6]
    $region5: #{tpu_custom_call.1} parent=1 // pred_fallthru
      _
    // Predicated region
    $region6: #{tpu_custom_call.1} parent=1 // pred_check
      _
    $region7: #{tpu_custom_call.1} parent=1 // pred_check_branch
      %26 = sbr.rel (0) target = $region9
    $region8: #{tpu_custom_call.1} parent=1 // pred_region
      %s28 = ssub.s32 32768, 32768
      %29 = vsyncadd [#allocation9], %s28
      %s30 = sshll.u32 [#allocation8], 4
      %s31 = int_to_ptr.vmem [resolvable:$true] %s30
      %36 = dma.hbm_to_vmem [thread:$0]  %s1, 32768, %s31, [#allocation9], 1024, 1024, 64
    $region9: #{tpu_custom_call.1} parent=1 // pred_fallthru
      _
    // Predicated region
    $region10: #{tpu_custom_call.1} parent=1 // pred_check
      _
    $region11: #{tpu_custom_call.1} parent=1 // pred_check_branch
      %38 = sbr.rel (0) target = $region13
    $region12: #{tpu_custom_call.1} parent=1 // pred_region
      %s40 = ssub.s32 1024, 1024
      %41 = vsyncadd [#allocation9], %s40
      %s43 = sshll.u32 [#allocation10], 4
      %s44 = int_to_ptr.vmem [resolvable:$true] %s43
      %46 = dma.hbm_to_vmem [thread:$0]  %s4, 1024, %s44, [#allocation9]
    $region13: #{tpu_custom_call.1} parent=1 // pred_fallthru
      _
    // Predicated region
    $region14: #{tpu_custom_call.1} parent=1 // pred_check
      _
    $region15: #{tpu_custom_call.1} parent=1 // pred_check_branch
      %48 = sbr.rel (0) target = $region17
    $region16: #{tpu_custom_call.1} parent=1 // pred_region
      %s50 = ssub.s32 192, 192
      %51 = vsyncadd [#allocation12], %s50
      %s53 = sshll.u32 [#allocation11], 4
      %s54 = int_to_ptr.vmem [resolvable:$true] %s53
      %56 = dma.hbm_to_vmem [thread:$0]  %s5, 192, %s54, [#allocation12]
    $region17: #{tpu_custom_call.1} parent=1 // pred_fallthru
      _
    // Predicated region
    $region18: #{tpu_custom_call.1} parent=1 // pred_check
      _
    $region19: #{tpu_custom_call.1} parent=1 // pred_check_branch
      %58 = sbr.rel (0) target = $region21
    $region20: #{tpu_custom_call.1} parent=1 // pred_region
      %59 = dma.done [#allocation6], 512
    $region21: #{tpu_custom_call.1} parent=1 // pred_fallthru
      _
    // Predicated region
    $region22: #{tpu_custom_call.1} parent=1 // pred_check
      _
    $region23: #{tpu_custom_call.1} parent=1 // pred_check_branch
      %61 = sbr.rel (0) target = $region25
    $region24: #{tpu_custom_call.1} parent=1 // pred_region
      %62 = dma.done [#allocation9], 32768
    $region25: #{tpu_custom_call.1} parent=1 // pred_fallthru
      _
    // Predicated region
    $region26: #{tpu_custom_call.1} parent=1 // pred_check
      _
    $region27: #{tpu_custom_call.1} parent=1 // pred_check_branch
      %64 = sbr.rel (0) target = $region29
    $region28: #{tpu_custom_call.1} parent=1 // pred_region
      %65 = dma.done [#allocation9], 1024
    $region29: #{tpu_custom_call.1} parent=1 // pred_fallthru
      _
    // Predicated region
    $region30: #{tpu_custom_call.1} parent=1 // pred_check
      _
    $region31: #{tpu_custom_call.1} parent=1 // pred_check_branch
      %67 = sbr.rel (0) target = $region33
    $region32: #{tpu_custom_call.1} parent=1 // pred_region
      %68 = dma.done [#allocation12], 192
    $region33: #{tpu_custom_call.1} parent=1 // pred_fallthru
      _
    // Predicated region
    $region34: #{tpu_custom_call.1} parent=1 // pred_check
      _
    $region35: #{tpu_custom_call.1} parent=1 // pred_check_branch
      %70 = sbr.rel target = $region37
    $region36: #{tpu_custom_call.1} parent=1 // pred_region
      %71 = sst [smem:[#allocation16]] [#allocation15]
      %72 = sst [smem:[#allocation17]] [#allocation14]
    $region37: #{tpu_custom_call.1} parent=1 // pred_fallthru
      _
    %74 = shalt.err (0)
    %s76 = sshll.u32 [#allocation2], 4
    %s77 = int_to_ptr.vmem [resolvable:$true] %s76
    %79 = dma.hbm_to_vmem [thread:$0]  %s2, 32768, %s77, [#allocation4]
    %s80 = scalar_lea.sflag [#allocation4], 1
    // Predicated region
    $region38: #{tpu_custom_call.1} parent=1 // pred_check
      _
    $region39: #{tpu_custom_call.1} parent=1 // pred_check_branch
      %82 = sbr.rel target = $region41
    $region40: #{tpu_custom_call.1} parent=1 // pred_region
      %83 = sst [smem:[#allocation16]] [#allocation19]
      %84 = sst [smem:[#allocation17]] [#allocation18]
    $region41: #{tpu_custom_call.1} parent=1 // pred_fallthru
      _
    %86 = shalt.err (0)
    %s88 = sshll.u32 [#allocation3], 4
    %s89 = int_to_ptr.vmem [resolvable:$true] %s88
    %91 = dma.hbm_to_vmem [thread:$0]  %s3, 24576, %s89, %s80
    %v92 = vld [vmem:[#allocation5] sm:$0xff]
    %v93 = vld [vmem:[#allocation5 + $0x8] sm:$0xff]
    %v94 = vld [vmem:[#allocation5 + $0x10] sm:$0xff]
    %v95 = vld [vmem:[#allocation5 + $0x18] sm:$0xff]
    %v96 = vld [vmem:[#allocation10] sm:$0x3f]
    %v97 = vld [vmem:[#allocation10 + $0x8] sm:$0x3f]
    %v98 = vld [vmem:[#allocation10 + $0x10] sm:$0x3f]
    %v99 = vld [vmem:[#allocation10 + $0x18] sm:$0x3f]
    %v100 = vld [vmem:[#allocation10 + $0x20] sm:$0x3f]
    %v101 = vld [vmem:[#allocation10 + $0x28] sm:$0x3f]
    %v102 = vld [vmem:[#allocation10 + $0x30] sm:$0x3f]
    %v103 = vld [vmem:[#allocation10 + $0x38] sm:$0x3f]
    %v104 = vld [vmem:[#allocation11] ss:$2 sm:$0x3f]
    %s105 = scalar_lea.vmem [#allocation11], 1
    %v106 = vld [vmem:[%s105] ss:$2 sm:$0x3f]
    %v107 = vld [vmem:[#allocation8] sm:$0xff]
    %v108 = vld [vmem:[#allocation8 + $0x8] sm:$0xff]
    %v109 = vld [vmem:[#allocation8 + $0x10] sm:$0xff]
    %v110 = vld [vmem:[#allocation8 + $0x18] sm:$0xff]
    %v111 = vld [vmem:[#allocation8 + $0x20] sm:$0xff]
    %v112 = vld [vmem:[#allocation8 + $0x28] sm:$0xff]
    %v113 = vld [vmem:[#allocation8 + $0x30] sm:$0xff]
    %v114 = vld [vmem:[#allocation8 + $0x38] sm:$0xff]
    %v115 = vld [vmem:[#allocation8 + $0x40] sm:$0xff]
    %v116 = vld [vmem:[#allocation8 + $0x48] sm:$0xff]
    %v117 = vld [vmem:[#allocation8 + $0x50] sm:$0xff]
    %v118 = vld [vmem:[#allocation8 + $0x58] sm:$0xff]
    %v119 = vld [vmem:[#allocation8 + $0x60] sm:$0xff]
    %v120 = vld [vmem:[#allocation8 + $0x68] sm:$0xff]
    %v121 = vld [vmem:[#allocation8 + $0x70] sm:$0xff]
    %v122 = vld [vmem:[#allocation8 + $0x78] sm:$0xff]
    %v123 = vld [vmem:[#allocation8 + $0x80] sm:$0xff]
    %v124 = vld [vmem:[#allocation8 + $0x88] sm:$0xff]
    %v125 = vld [vmem:[#allocation8 + $0x90] sm:$0xff]
    %v126 = vld [vmem:[#allocation8 + $0x98] sm:$0xff]
    %v127 = vld [vmem:[#allocation8 + $0xa0] sm:$0xff]
    %v128 = vld [vmem:[#allocation8 + $0xa8] sm:$0xff]
    %v129 = vld [vmem:[#allocation8 + $0xb0] sm:$0xff]
    %v130 = vld [vmem:[#allocation8 + $0xb8] sm:$0xff]
    %v131 = vld [vmem:[#allocation8 + $0xc0] sm:$0xff]
    %v132 = vld [vmem:[#allocation8 + $0xc8] sm:$0xff]
    %v133 = vld [vmem:[#allocation8 + $0xd0] sm:$0xff]
    %v134 = vld [vmem:[#allocation8 + $0xd8] sm:$0xff]
    %v135 = vld [vmem:[#allocation8 + $0xe0] sm:$0xff]
    %v136 = vld [vmem:[#allocation8 + $0xe8] sm:$0xff]
    %v137 = vld [vmem:[#allocation8 + $0xf0] sm:$0xff]
    %v138 = vld [vmem:[#allocation8 + $0xf8] sm:$0xff]
    %v139 = vld [vmem:[#allocation8 + $0x100] sm:$0xff]
    %v140 = vld [vmem:[#allocation8 + $0x108] sm:$0xff]
    %v141 = vld [vmem:[#allocation8 + $0x110] sm:$0xff]
    %v142 = vld [vmem:[#allocation8 + $0x118] sm:$0xff]
    %v143 = vld [vmem:[#allocation8 + $0x120] sm:$0xff]
    %v144 = vld [vmem:[#allocation8 + $0x128] sm:$0xff]
    %v145 = vld [vmem:[#allocation8 + $0x130] sm:$0xff]
    %v146 = vld [vmem:[#allocation8 + $0x138] sm:$0xff]
    %v147 = vld [vmem:[#allocation8 + $0x140] sm:$0xff]
    %v148 = vld [vmem:[#allocation8 + $0x148] sm:$0xff]
    %v149 = vld [vmem:[#allocation8 + $0x150] sm:$0xff]
    %v150 = vld [vmem:[#allocation8 + $0x158] sm:$0xff]
    %v151 = vld [vmem:[#allocation8 + $0x160] sm:$0xff]
    %v152 = vld [vmem:[#allocation8 + $0x168] sm:$0xff]
    %v153 = vld [vmem:[#allocation8 + $0x170] sm:$0xff]
    %v154 = vld [vmem:[#allocation8 + $0x178] sm:$0xff]
    %v155 = vld [vmem:[#allocation8 + $0x180] sm:$0xff]
    %v156 = vld [vmem:[#allocation8 + $0x188] sm:$0xff]
    %v157 = vld [vmem:[#allocation8 + $0x190] sm:$0xff]
    %v158 = vld [vmem:[#allocation8 + $0x198] sm:$0xff]
    %v159 = vld [vmem:[#allocation8 + $0x1a0] sm:$0xff]
    %v160 = vld [vmem:[#allocation8 + $0x1a8] sm:$0xff]
    %v161 = vld [vmem:[#allocation8 + $0x1b0] sm:$0xff]
    %v162 = vld [vmem:[#allocation8 + $0x1b8] sm:$0xff]
    %v163 = vld [vmem:[#allocation8 + $0x1c0] sm:$0xff]
    %v164 = vld [vmem:[#allocation8 + $0x1c8] sm:$0xff]
    %v165 = vld [vmem:[#allocation8 + $0x1d0] sm:$0xff]
    %v166 = vld [vmem:[#allocation8 + $0x1d8] sm:$0xff]
    %v167 = vld [vmem:[#allocation8 + $0x1e0] sm:$0xff]
    %v168 = vld [vmem:[#allocation8 + $0x1e8] sm:$0xff]
    %v169 = vld [vmem:[#allocation8 + $0x1f0] sm:$0xff]
    %v170 = vld [vmem:[#allocation8 + $0x1f8] sm:$0xff]
    %v171 = vld [vmem:[#allocation8 + $0x200] sm:$0xff]
    %v172 = vld [vmem:[#allocation8 + $0x208] sm:$0xff]
    %v173 = vld [vmem:[#allocation8 + $0x210] sm:$0xff]
    %v174 = vld [vmem:[#allocation8 + $0x218] sm:$0xff]
    %v175 = vld [vmem:[#allocation8 + $0x220] sm:$0xff]
    %v176 = vld [vmem:[#allocation8 + $0x228] sm:$0xff]
    %v177 = vld [vmem:[#allocation8 + $0x230] sm:$0xff]
    %v178 = vld [vmem:[#allocation8 + $0x238] sm:$0xff]
    %v179 = vld [vmem:[#allocation8 + $0x240] sm:$0xff]
    %v180 = vld [vmem:[#allocation8 + $0x248] sm:$0xff]
    %v181 = vld [vmem:[#allocation8 + $0x250] sm:$0xff]
    %v182 = vld [vmem:[#allocation8 + $0x258] sm:$0xff]
    %v183 = vld [vmem:[#allocation8 + $0x260] sm:$0xff]
    %v184 = vld [vmem:[#allocation8 + $0x268] sm:$0xff]
    %v185 = vld [vmem:[#allocation8 + $0x270] sm:$0xff]
    %v186 = vld [vmem:[#allocation8 + $0x278] sm:$0xff]
    %v187 = vld [vmem:[#allocation8 + $0x280] sm:$0xff]
    %v188 = vld [vmem:[#allocation8 + $0x288] sm:$0xff]
    %v189 = vld [vmem:[#allocation8 + $0x290] sm:$0xff]
    %v190 = vld [vmem:[#allocation8 + $0x298] sm:$0xff]
    %v191 = vld [vmem:[#allocation8 + $0x2a0] sm:$0xff]
    %v192 = vld [vmem:[#allocation8 + $0x2a8] sm:$0xff]
    %v193 = vld [vmem:[#allocation8 + $0x2b0] sm:$0xff]
    %v194 = vld [vmem:[#allocation8 + $0x2b8] sm:$0xff]
    %v195 = vld [vmem:[#allocation8 + $0x2c0] sm:$0xff]
    %v196 = vld [vmem:[#allocation8 + $0x2c8] sm:$0xff]
    %v197 = vld [vmem:[#allocation8 + $0x2d0] sm:$0xff]
    %v198 = vld [vmem:[#allocation8 + $0x2d8] sm:$0xff]
    %v199 = vld [vmem:[#allocation8 + $0x2e0] sm:$0xff]
    %v200 = vld [vmem:[#allocation8 + $0x2e8] sm:$0xff]
    %v201 = vld [vmem:[#allocation8 + $0x2f0] sm:$0xff]
    %v202 = vld [vmem:[#allocation8 + $0x2f8] sm:$0xff]
    %v203 = vld [vmem:[#allocation8 + $0x300] sm:$0xff]
    %v204 = vld [vmem:[#allocation8 + $0x308] sm:$0xff]
    %v205 = vld [vmem:[#allocation8 + $0x310] sm:$0xff]
    %v206 = vld [vmem:[#allocation8 + $0x318] sm:$0xff]
    %v207 = vld [vmem:[#allocation8 + $0x320] sm:$0xff]
    %v208 = vld [vmem:[#allocation8 + $0x328] sm:$0xff]
    %v209 = vld [vmem:[#allocation8 + $0x330] sm:$0xff]
    %v210 = vld [vmem:[#allocation8 + $0x338] sm:$0xff]
    %v211 = vld [vmem:[#allocation8 + $0x340] sm:$0xff]
    %v212 = vld [vmem:[#allocation8 + $0x348] sm:$0xff]
    %v213 = vld [vmem:[#allocation8 + $0x350] sm:$0xff]
    %v214 = vld [vmem:[#allocation8 + $0x358] sm:$0xff]
    %v215 = vld [vmem:[#allocation8 + $0x360] sm:$0xff]
    %v216 = vld [vmem:[#allocation8 + $0x368] sm:$0xff]
    %v217 = vld [vmem:[#allocation8 + $0x370] sm:$0xff]
    %v218 = vld [vmem:[#allocation8 + $0x378] sm:$0xff]
    %v219 = vld [vmem:[#allocation8 + $0x380] sm:$0xff]
    %v220 = vld [vmem:[#allocation8 + $0x388] sm:$0xff]
    %v221 = vld [vmem:[#allocation8 + $0x390] sm:$0xff]
    %v222 = vld [vmem:[#allocation8 + $0x398] sm:$0xff]
    %v223 = vld [vmem:[#allocation8 + $0x3a0] sm:$0xff]
    %v224 = vld [vmem:[#allocation8 + $0x3a8] sm:$0xff]
    %v225 = vld [vmem:[#allocation8 + $0x3b0] sm:$0xff]
    %v226 = vld [vmem:[#allocation8 + $0x3b8] sm:$0xff]
    %v227 = vld [vmem:[#allocation8 + $0x3c0] sm:$0xff]
    %v228 = vld [vmem:[#allocation8 + $0x3c8] sm:$0xff]
    %v229 = vld [vmem:[#allocation8 + $0x3d0] sm:$0xff]
    %v230 = vld [vmem:[#allocation8 + $0x3d8] sm:$0xff]
    %v231 = vld [vmem:[#allocation8 + $0x3e0] sm:$0xff]
    %v232 = vld [vmem:[#allocation8 + $0x3e8] sm:$0xff]
    %v233 = vld [vmem:[#allocation8 + $0x3f0] sm:$0xff]
    %v234 = vld [vmem:[#allocation8 + $0x3f8] sm:$0xff]
    %v235 = vld [vmem:[#allocation8 + $0x400] sm:$0xff]
    %v236 = vld [vmem:[#allocation8 + $0x408] sm:$0xff]
    %v237 = vld [vmem:[#allocation8 + $0x410] sm:$0xff]
    %v238 = vld [vmem:[#allocation8 + $0x418] sm:$0xff]
    %v239 = vld [vmem:[#allocation8 + $0x420] sm:$0xff]
    %v240 = vld [vmem:[#allocation8 + $0x428] sm:$0xff]
    %v241 = vld [vmem:[#allocation8 + $0x430] sm:$0xff]
    %v242 = vld [vmem:[#allocation8 + $0x438] sm:$0xff]
    %v243 = vld [vmem:[#allocation8 + $0x440] sm:$0xff]
    %v244 = vld [vmem:[#allocation8 + $0x448] sm:$0xff]
    %v245 = vld [vmem:[#allocation8 + $0x450] sm:$0xff]
    %v246 = vld [vmem:[#allocation8 + $0x458] sm:$0xff]
    %v247 = vld [vmem:[#allocation8 + $0x460] sm:$0xff]
    %v248 = vld [vmem:[#allocation8 + $0x468] sm:$0xff]
    %v249 = vld [vmem:[#allocation8 + $0x470] sm:$0xff]
    %v250 = vld [vmem:[#allocation8 + $0x478] sm:$0xff]
    %v251 = vld [vmem:[#allocation8 + $0x480] sm:$0xff]
    %v252 = vld [vmem:[#allocation8 + $0x488] sm:$0xff]
    %v253 = vld [vmem:[#allocation8 + $0x490] sm:$0xff]
    %v254 = vld [vmem:[#allocation8 + $0x498] sm:$0xff]
    %v255 = vld [vmem:[#allocation8 + $0x4a0] sm:$0xff]
    %v256 = vld [vmem:[#allocation8 + $0x4a8] sm:$0xff]
    %v257 = vld [vmem:[#allocation8 + $0x4b0] sm:$0xff]
    %v258 = vld [vmem:[#allocation8 + $0x4b8] sm:$0xff]
    %v259 = vld [vmem:[#allocation8 + $0x4c0] sm:$0xff]
    %v260 = vld [vmem:[#allocation8 + $0x4c8] sm:$0xff]
    %v261 = vld [vmem:[#allocation8 + $0x4d0] sm:$0xff]
    %v262 = vld [vmem:[#allocation8 + $0x4d8] sm:$0xff]
    %v263 = vld [vmem:[#allocation8 + $0x4e0] sm:$0xff]
    %v264 = vld [vmem:[#allocation8 + $0x4e8] sm:$0xff]
    %v265 = vld [vmem:[#allocation8 + $0x4f0] sm:$0xff]
    %v266 = vld [vmem:[#allocation8 + $0x4f8] sm:$0xff]
    %v267 = vld [vmem:[#allocation8 + $0x500] sm:$0xff]
    %v268 = vld [vmem:[#allocation8 + $0x508] sm:$0xff]
    %v269 = vld [vmem:[#allocation8 + $0x510] sm:$0xff]
    %v270 = vld [vmem:[#allocation8 + $0x518] sm:$0xff]
    %v271 = vld [vmem:[#allocation8 + $0x520] sm:$0xff]
    %v272 = vld [vmem:[#allocation8 + $0x528] sm:$0xff]
    %v273 = vld [vmem:[#allocation8 + $0x530] sm:$0xff]
    %v274 = vld [vmem:[#allocation8 + $0x538] sm:$0xff]
    %v275 = vld [vmem:[#allocation8 + $0x540] sm:$0xff]
    %v276 = vld [vmem:[#allocation8 + $0x548] sm:$0xff]
    %v277 = vld [vmem:[#allocation8 + $0x550] sm:$0xff]
    %v278 = vld [vmem:[#allocation8 + $0x558] sm:$0xff]
    %v279 = vld [vmem:[#allocation8 + $0x560] sm:$0xff]
    %v280 = vld [vmem:[#allocation8 + $0x568] sm:$0xff]
    %v281 = vld [vmem:[#allocation8 + $0x570] sm:$0xff]
    %v282 = vld [vmem:[#allocation8 + $0x578] sm:$0xff]
    %v283 = vld [vmem:[#allocation8 + $0x580] sm:$0xff]
    %v284 = vld [vmem:[#allocation8 + $0x588] sm:$0xff]
    %v285 = vld [vmem:[#allocation8 + $0x590] sm:$0xff]
    %v286 = vld [vmem:[#allocation8 + $0x598] sm:$0xff]
    %v287 = vld [vmem:[#allocation8 + $0x5a0] sm:$0xff]
    %v288 = vld [vmem:[#allocation8 + $0x5a8] sm:$0xff]
    %v289 = vld [vmem:[#allocation8 + $0x5b0] sm:$0xff]
    %v290 = vld [vmem:[#allocation8 + $0x5b8] sm:$0xff]
    %v291 = vld [vmem:[#allocation8 + $0x5c0] sm:$0xff]
    %v292 = vld [vmem:[#allocation8 + $0x5c8] sm:$0xff]
    %v293 = vld [vmem:[#allocation8 + $0x5d0] sm:$0xff]
    %v294 = vld [vmem:[#allocation8 + $0x5d8] sm:$0xff]
    %v295 = vld [vmem:[#allocation8 + $0x5e0] sm:$0xff]
    %v296 = vld [vmem:[#allocation8 + $0x5e8] sm:$0xff]
    %v297 = vld [vmem:[#allocation8 + $0x5f0] sm:$0xff]
    %v298 = vld [vmem:[#allocation8 + $0x5f8] sm:$0xff]
    %v299 = vld [vmem:[#allocation8 + $0x600] sm:$0xff]
    %v300 = vld [vmem:[#allocation8 + $0x608] sm:$0xff]
    %v301 = vld [vmem:[#allocation8 + $0x610] sm:$0xff]
    %v302 = vld [vmem:[#allocation8 + $0x618] sm:$0xff]
    %v303 = vld [vmem:[#allocation8 + $0x620] sm:$0xff]
    %v304 = vld [vmem:[#allocation8 + $0x628] sm:$0xff]
    %v305 = vld [vmem:[#allocation8 + $0x630] sm:$0xff]
    %v306 = vld [vmem:[#allocation8 + $0x638] sm:$0xff]
    %v307 = vld [vmem:[#allocation8 + $0x640] sm:$0xff]
    %v308 = vld [vmem:[#allocation8 + $0x648] sm:$0xff]
    %v309 = vld [vmem:[#allocation8 + $0x650] sm:$0xff]
    %v310 = vld [vmem:[#allocation8 + $0x658] sm:$0xff]
    %v311 = vld [vmem:[#allocation8 + $0x660] sm:$0xff]
    %v312 = vld [vmem:[#allocation8 + $0x668] sm:$0xff]
    %v313 = vld [vmem:[#allocation8 + $0x670] sm:$0xff]
    %v314 = vld [vmem:[#allocation8 + $0x678] sm:$0xff]
    %v315 = vld [vmem:[#allocation8 + $0x680] sm:$0xff]
    %v316 = vld [vmem:[#allocation8 + $0x688] sm:$0xff]
    %v317 = vld [vmem:[#allocation8 + $0x690] sm:$0xff]
    %v318 = vld [vmem:[#allocation8 + $0x698] sm:$0xff]
    %v319 = vld [vmem:[#allocation8 + $0x6a0] sm:$0xff]
    %v320 = vld [vmem:[#allocation8 + $0x6a8] sm:$0xff]
    %v321 = vld [vmem:[#allocation8 + $0x6b0] sm:$0xff]
    %v322 = vld [vmem:[#allocation8 + $0x6b8] sm:$0xff]
    %v323 = vld [vmem:[#allocation8 + $0x6c0] sm:$0xff]
    %v324 = vld [vmem:[#allocation8 + $0x6c8] sm:$0xff]
    %v325 = vld [vmem:[#allocation8 + $0x6d0] sm:$0xff]
    %v326 = vld [vmem:[#allocation8 + $0x6d8] sm:$0xff]
    %v327 = vld [vmem:[#allocation8 + $0x6e0] sm:$0xff]
    %v328 = vld [vmem:[#allocation8 + $0x6e8] sm:$0xff]
    %v329 = vld [vmem:[#allocation8 + $0x6f0] sm:$0xff]
    %v330 = vld [vmem:[#allocation8 + $0x6f8] sm:$0xff]
    %v331 = vld [vmem:[#allocation8 + $0x700] sm:$0xff]
    %v332 = vld [vmem:[#allocation8 + $0x708] sm:$0xff]
    %v333 = vld [vmem:[#allocation8 + $0x710] sm:$0xff]
    %v334 = vld [vmem:[#allocation8 + $0x718] sm:$0xff]
    %v335 = vld [vmem:[#allocation8 + $0x720] sm:$0xff]
    %v336 = vld [vmem:[#allocation8 + $0x728] sm:$0xff]
    %v337 = vld [vmem:[#allocation8 + $0x730] sm:$0xff]
    %v338 = vld [vmem:[#allocation8 + $0x738] sm:$0xff]
    %v339 = vld [vmem:[#allocation8 + $0x740] sm:$0xff]
    %v340 = vld [vmem:[#allocation8 + $0x748] sm:$0xff]
    %v341 = vld [vmem:[#allocation8 + $0x750] sm:$0xff]
    %v342 = vld [vmem:[#allocation8 + $0x758] sm:$0xff]
    %v343 = vld [vmem:[#allocation8 + $0x760] sm:$0xff]
    %v344 = vld [vmem:[#allocation8 + $0x768] sm:$0xff]
    %v345 = vld [vmem:[#allocation8 + $0x770] sm:$0xff]
    %v346 = vld [vmem:[#allocation8 + $0x778] sm:$0xff]
    %v347 = vld [vmem:[#allocation8 + $0x780] sm:$0xff]
    %v348 = vld [vmem:[#allocation8 + $0x788] sm:$0xff]
    %v349 = vld [vmem:[#allocation8 + $0x790] sm:$0xff]
    %v350 = vld [vmem:[#allocation8 + $0x798] sm:$0xff]
    %v351 = vld [vmem:[#allocation8 + $0x7a0] sm:$0xff]
    %v352 = vld [vmem:[#allocation8 + $0x7a8] sm:$0xff]
    %v353 = vld [vmem:[#allocation8 + $0x7b0] sm:$0xff]
    %v354 = vld [vmem:[#allocation8 + $0x7b8] sm:$0xff]
    %v355 = vld [vmem:[#allocation8 + $0x7c0] sm:$0xff]
    %v356 = vld [vmem:[#allocation8 + $0x7c8] sm:$0xff]
    %v357 = vld [vmem:[#allocation8 + $0x7d0] sm:$0xff]
    %v358 = vld [vmem:[#allocation8 + $0x7d8] sm:$0xff]
    %v359 = vld [vmem:[#allocation8 + $0x7e0] sm:$0xff]
    %v360 = vld [vmem:[#allocation8 + $0x7e8] sm:$0xff]
    %v361 = vld [vmem:[#allocation8 + $0x7f0] sm:$0xff]
    %v362 = vld [vmem:[#allocation8 + $0x7f8] sm:$0xff]
    %v363 = vunpack.c.l.s8.bf16 %v107
    %v364 = vunpack.c.l.s8.bf16 %v108
    %v365 = vunpack.c.l.s8.bf16 %v109
    %v366 = vunpack.c.l.s8.bf16 %v110
    %v367 = vunpack.c.l.s8.bf16 %v111
    %v368 = vunpack.c.l.s8.bf16 %v112
    %v369 = vunpack.c.l.s8.bf16 %v113
    %v370 = vunpack.c.l.s8.bf16 %v114
    %v371 = vunpack.c.h.s8.bf16 %v107
    %v372 = vunpack.c.h.s8.bf16 %v108
    %v373 = vunpack.c.h.s8.bf16 %v109
    %v374 = vunpack.c.h.s8.bf16 %v110
    %v375 = vunpack.c.h.s8.bf16 %v111
    %v376 = vunpack.c.h.s8.bf16 %v112
    %v377 = vunpack.c.h.s8.bf16 %v113
    %v378 = vunpack.c.h.s8.bf16 %v114
    %v379 = vunpack.c.l.s8.bf16 %v115
    %v380 = vunpack.c.l.s8.bf16 %v116
    %v381 = vunpack.c.l.s8.bf16 %v117
    %v382 = vunpack.c.l.s8.bf16 %v118
    %v383 = vunpack.c.l.s8.bf16 %v119
    %v384 = vunpack.c.l.s8.bf16 %v120
    %v385 = vunpack.c.l.s8.bf16 %v121
    %v386 = vunpack.c.l.s8.bf16 %v122
    %v387 = vunpack.c.h.s8.bf16 %v115
    %v388 = vunpack.c.h.s8.bf16 %v116
    %v389 = vunpack.c.h.s8.bf16 %v117
    %v390 = vunpack.c.h.s8.bf16 %v118
    %v391 = vunpack.c.h.s8.bf16 %v119
    %v392 = vunpack.c.h.s8.bf16 %v120
    %v393 = vunpack.c.h.s8.bf16 %v121
    %v394 = vunpack.c.h.s8.bf16 %v122
    %v395 = vunpack.c.l.s8.bf16 %v123
    %v396 = vunpack.c.l.s8.bf16 %v124
    %v397 = vunpack.c.l.s8.bf16 %v125
    %v398 = vunpack.c.l.s8.bf16 %v126
    %v399 = vunpack.c.l.s8.bf16 %v127
    %v400 = vunpack.c.l.s8.bf16 %v128
    %v401 = vunpack.c.l.s8.bf16 %v129
    %v402 = vunpack.c.l.s8.bf16 %v130
    %v403 = vunpack.c.h.s8.bf16 %v123
    %v404 = vunpack.c.h.s8.bf16 %v124
    %v405 = vunpack.c.h.s8.bf16 %v125
    %v406 = vunpack.c.h.s8.bf16 %v126
    %v407 = vunpack.c.h.s8.bf16 %v127
    %v408 = vunpack.c.h.s8.bf16 %v128
    %v409 = vunpack.c.h.s8.bf16 %v129
    %v410 = vunpack.c.h.s8.bf16 %v130
    %v411 = vunpack.c.l.s8.bf16 %v131
    %v412 = vunpack.c.l.s8.bf16 %v132
    %v413 = vunpack.c.l.s8.bf16 %v133
    %v414 = vunpack.c.l.s8.bf16 %v134
    %v415 = vunpack.c.l.s8.bf16 %v135
    %v416 = vunpack.c.l.s8.bf16 %v136
    %v417 = vunpack.c.l.s8.bf16 %v137
    %v418 = vunpack.c.l.s8.bf16 %v138
    %v419 = vunpack.c.h.s8.bf16 %v131
    %v420 = vunpack.c.h.s8.bf16 %v132
    %v421 = vunpack.c.h.s8.bf16 %v133
    %v422 = vunpack.c.h.s8.bf16 %v134
    %v423 = vunpack.c.h.s8.bf16 %v135
    %v424 = vunpack.c.h.s8.bf16 %v136
    %v425 = vunpack.c.h.s8.bf16 %v137
    %v426 = vunpack.c.h.s8.bf16 %v138
    %v427 = vunpack.c.l.s8.bf16 %v139
    %v428 = vunpack.c.l.s8.bf16 %v140
    %v429 = vunpack.c.l.s8.bf16 %v141
    %v430 = vunpack.c.l.s8.bf16 %v142
    %v431 = vunpack.c.l.s8.bf16 %v143
    %v432 = vunpack.c.l.s8.bf16 %v144
    %v433 = vunpack.c.l.s8.bf16 %v145
    %v434 = vunpack.c.l.s8.bf16 %v146
    %v435 = vunpack.c.h.s8.bf16 %v139
    %v436 = vunpack.c.h.s8.bf16 %v140
    %v437 = vunpack.c.h.s8.bf16 %v141
    %v438 = vunpack.c.h.s8.bf16 %v142
    %v439 = vunpack.c.h.s8.bf16 %v143
    %v440 = vunpack.c.h.s8.bf16 %v144
    %v441 = vunpack.c.h.s8.bf16 %v145
    %v442 = vunpack.c.h.s8.bf16 %v146
    %v443 = vunpack.c.l.s8.bf16 %v147
    %v444 = vunpack.c.l.s8.bf16 %v148
    %v445 = vunpack.c.l.s8.bf16 %v149
    %v446 = vunpack.c.l.s8.bf16 %v150
    %v447 = vunpack.c.l.s8.bf16 %v151
    %v448 = vunpack.c.l.s8.bf16 %v152
    %v449 = vunpack.c.l.s8.bf16 %v153
    %v450 = vunpack.c.l.s8.bf16 %v154
    %v451 = vunpack.c.h.s8.bf16 %v147
    %v452 = vunpack.c.h.s8.bf16 %v148
    %v453 = vunpack.c.h.s8.bf16 %v149
    %v454 = vunpack.c.h.s8.bf16 %v150
    %v455 = vunpack.c.h.s8.bf16 %v151
    %v456 = vunpack.c.h.s8.bf16 %v152
    %v457 = vunpack.c.h.s8.bf16 %v153
    %v458 = vunpack.c.h.s8.bf16 %v154
    %v459 = vunpack.c.l.s8.bf16 %v155
    %v460 = vunpack.c.l.s8.bf16 %v156
    %v461 = vunpack.c.l.s8.bf16 %v157
    %v462 = vunpack.c.l.s8.bf16 %v158
    %v463 = vunpack.c.l.s8.bf16 %v159
    %v464 = vunpack.c.l.s8.bf16 %v160
    %v465 = vunpack.c.l.s8.bf16 %v161
    %v466 = vunpack.c.l.s8.bf16 %v162
    %v467 = vunpack.c.h.s8.bf16 %v155
    %v468 = vunpack.c.h.s8.bf16 %v156
    %v469 = vunpack.c.h.s8.bf16 %v157
    %v470 = vunpack.c.h.s8.bf16 %v158
    %v471 = vunpack.c.h.s8.bf16 %v159
    %v472 = vunpack.c.h.s8.bf16 %v160
    %v473 = vunpack.c.h.s8.bf16 %v161
    %v474 = vunpack.c.h.s8.bf16 %v162
    %v475 = vunpack.c.l.s8.bf16 %v163
    %v476 = vunpack.c.l.s8.bf16 %v164
    %v477 = vunpack.c.l.s8.bf16 %v165
    %v478 = vunpack.c.l.s8.bf16 %v166
    %v479 = vunpack.c.l.s8.bf16 %v167
    %v480 = vunpack.c.l.s8.bf16 %v168
    %v481 = vunpack.c.l.s8.bf16 %v169
    %v482 = vunpack.c.l.s8.bf16 %v170
    %v483 = vunpack.c.h.s8.bf16 %v163
    %v484 = vunpack.c.h.s8.bf16 %v164
    %v485 = vunpack.c.h.s8.bf16 %v165
    %v486 = vunpack.c.h.s8.bf16 %v166
    %v487 = vunpack.c.h.s8.bf16 %v167
    %v488 = vunpack.c.h.s8.bf16 %v168
    %v489 = vunpack.c.h.s8.bf16 %v169
    %v490 = vunpack.c.h.s8.bf16 %v170
    %v491 = vunpack.c.l.s8.bf16 %v171
    %v492 = vunpack.c.l.s8.bf16 %v172
    %v493 = vunpack.c.l.s8.bf16 %v173
    %v494 = vunpack.c.l.s8.bf16 %v174
    %v495 = vunpack.c.l.s8.bf16 %v175
    %v496 = vunpack.c.l.s8.bf16 %v176
    %v497 = vunpack.c.l.s8.bf16 %v177
    %v498 = vunpack.c.l.s8.bf16 %v178
    %v499 = vunpack.c.h.s8.bf16 %v171
    %v500 = vunpack.c.h.s8.bf16 %v172
    %v501 = vunpack.c.h.s8.bf16 %v173
    %v502 = vunpack.c.h.s8.bf16 %v174
    %v503 = vunpack.c.h.s8.bf16 %v175
    %v504 = vunpack.c.h.s8.bf16 %v176
    %v505 = vunpack.c.h.s8.bf16 %v177
    %v506 = vunpack.c.h.s8.bf16 %v178
    %v507 = vunpack.c.l.s8.bf16 %v179
    %v508 = vunpack.c.l.s8.bf16 %v180
    %v509 = vunpack.c.l.s8.bf16 %v181
    %v510 = vunpack.c.l.s8.bf16 %v182
    %v511 = vunpack.c.l.s8.bf16 %v183
    %v512 = vunpack.c.l.s8.bf16 %v184
    %v513 = vunpack.c.l.s8.bf16 %v185
    %v514 = vunpack.c.l.s8.bf16 %v186
    %v515 = vunpack.c.h.s8.bf16 %v179
    %v516 = vunpack.c.h.s8.bf16 %v180
    %v517 = vunpack.c.h.s8.bf16 %v181
    %v518 = vunpack.c.h.s8.bf16 %v182
    %v519 = vunpack.c.h.s8.bf16 %v183
    %v520 = vunpack.c.h.s8.bf16 %v184
    %v521 = vunpack.c.h.s8.bf16 %v185
    %v522 = vunpack.c.h.s8.bf16 %v186
    %v523 = vunpack.c.l.s8.bf16 %v187
    %v524 = vunpack.c.l.s8.bf16 %v188
    %v525 = vunpack.c.l.s8.bf16 %v189
    %v526 = vunpack.c.l.s8.bf16 %v190
    %v527 = vunpack.c.l.s8.bf16 %v191
    %v528 = vunpack.c.l.s8.bf16 %v192
    %v529 = vunpack.c.l.s8.bf16 %v193
    %v530 = vunpack.c.l.s8.bf16 %v194
    %v531 = vunpack.c.h.s8.bf16 %v187
    %v532 = vunpack.c.h.s8.bf16 %v188
    %v533 = vunpack.c.h.s8.bf16 %v189
    %v534 = vunpack.c.h.s8.bf16 %v190
    %v535 = vunpack.c.h.s8.bf16 %v191
    %v536 = vunpack.c.h.s8.bf16 %v192
    %v537 = vunpack.c.h.s8.bf16 %v193
    %v538 = vunpack.c.h.s8.bf16 %v194
    %v539 = vunpack.c.l.s8.bf16 %v195
    %v540 = vunpack.c.l.s8.bf16 %v196
    %v541 = vunpack.c.l.s8.bf16 %v197
    %v542 = vunpack.c.l.s8.bf16 %v198
    %v543 = vunpack.c.l.s8.bf16 %v199
    %v544 = vunpack.c.l.s8.bf16 %v200
    %v545 = vunpack.c.l.s8.bf16 %v201
    %v546 = vunpack.c.l.s8.bf16 %v202
    %v547 = vunpack.c.h.s8.bf16 %v195
    %v548 = vunpack.c.h.s8.bf16 %v196
    %v549 = vunpack.c.h.s8.bf16 %v197
    %v550 = vunpack.c.h.s8.bf16 %v198
    %v551 = vunpack.c.h.s8.bf16 %v199
    %v552 = vunpack.c.h.s8.bf16 %v200
    %v553 = vunpack.c.h.s8.bf16 %v201
    %v554 = vunpack.c.h.s8.bf16 %v202
    %v555 = vunpack.c.l.s8.bf16 %v203
    %v556 = vunpack.c.l.s8.bf16 %v204
    %v557 = vunpack.c.l.s8.bf16 %v205
    %v558 = vunpack.c.l.s8.bf16 %v206
    %v559 = vunpack.c.l.s8.bf16 %v207
    %v560 = vunpack.c.l.s8.bf16 %v208
    %v561 = vunpack.c.l.s8.bf16 %v209
    %v562 = vunpack.c.l.s8.bf16 %v210
    %v563 = vunpack.c.h.s8.bf16 %v203
    %v564 = vunpack.c.h.s8.bf16 %v204
    %v565 = vunpack.c.h.s8.bf16 %v205
    %v566 = vunpack.c.h.s8.bf16 %v206
    %v567 = vunpack.c.h.s8.bf16 %v207
    %v568 = vunpack.c.h.s8.bf16 %v208
    %v569 = vunpack.c.h.s8.bf16 %v209
    %v570 = vunpack.c.h.s8.bf16 %v210
    %v571 = vunpack.c.l.s8.bf16 %v211
    %v572 = vunpack.c.l.s8.bf16 %v212
    %v573 = vunpack.c.l.s8.bf16 %v213
    %v574 = vunpack.c.l.s8.bf16 %v214
    %v575 = vunpack.c.l.s8.bf16 %v215
    %v576 = vunpack.c.l.s8.bf16 %v216
    %v577 = vunpack.c.l.s8.bf16 %v217
    %v578 = vunpack.c.l.s8.bf16 %v218
    %v579 = vunpack.c.h.s8.bf16 %v211
    %v580 = vunpack.c.h.s8.bf16 %v212
    %v581 = vunpack.c.h.s8.bf16 %v213
    %v582 = vunpack.c.h.s8.bf16 %v214
    %v583 = vunpack.c.h.s8.bf16 %v215
    %v584 = vunpack.c.h.s8.bf16 %v216
    %v585 = vunpack.c.h.s8.bf16 %v217
    %v586 = vunpack.c.h.s8.bf16 %v218
    %v587 = vunpack.c.l.s8.bf16 %v219
    %v588 = vunpack.c.l.s8.bf16 %v220
    %v589 = vunpack.c.l.s8.bf16 %v221
    %v590 = vunpack.c.l.s8.bf16 %v222
    %v591 = vunpack.c.l.s8.bf16 %v223
    %v592 = vunpack.c.l.s8.bf16 %v224
    %v593 = vunpack.c.l.s8.bf16 %v225
    %v594 = vunpack.c.l.s8.bf16 %v226
    %v595 = vunpack.c.h.s8.bf16 %v219
    %v596 = vunpack.c.h.s8.bf16 %v220
    %v597 = vunpack.c.h.s8.bf16 %v221
    %v598 = vunpack.c.h.s8.bf16 %v222
    %v599 = vunpack.c.h.s8.bf16 %v223
    %v600 = vunpack.c.h.s8.bf16 %v224
    %v601 = vunpack.c.h.s8.bf16 %v225
    %v602 = vunpack.c.h.s8.bf16 %v226
    %v603 = vunpack.c.l.s8.bf16 %v227
    %v604 = vunpack.c.l.s8.bf16 %v228
    %v605 = vunpack.c.l.s8.bf16 %v229
    %v606 = vunpack.c.l.s8.bf16 %v230
    %v607 = vunpack.c.l.s8.bf16 %v231
    %v608 = vunpack.c.l.s8.bf16 %v232
    %v609 = vunpack.c.l.s8.bf16 %v233
    %v610 = vunpack.c.l.s8.bf16 %v234
    %v611 = vunpack.c.h.s8.bf16 %v227
    %v612 = vunpack.c.h.s8.bf16 %v228
    %v613 = vunpack.c.h.s8.bf16 %v229
    %v614 = vunpack.c.h.s8.bf16 %v230
    %v615 = vunpack.c.h.s8.bf16 %v231
    %v616 = vunpack.c.h.s8.bf16 %v232
    %v617 = vunpack.c.h.s8.bf16 %v233
    %v618 = vunpack.c.h.s8.bf16 %v234
    %v619 = vunpack.c.l.s8.bf16 %v235
    %v620 = vunpack.c.l.s8.bf16 %v236
    %v621 = vunpack.c.l.s8.bf16 %v237
    %v622 = vunpack.c.l.s8.bf16 %v238
    %v623 = vunpack.c.l.s8.bf16 %v239
    %v624 = vunpack.c.l.s8.bf16 %v240
    %v625 = vunpack.c.l.s8.bf16 %v241
    %v626 = vunpack.c.l.s8.bf16 %v242
    %v627 = vunpack.c.h.s8.bf16 %v235
    %v628 = vunpack.c.h.s8.bf16 %v236
    %v629 = vunpack.c.h.s8.bf16 %v237
    %v630 = vunpack.c.h.s8.bf16 %v238
    %v631 = vunpack.c.h.s8.bf16 %v239
    %v632 = vunpack.c.h.s8.bf16 %v240
    %v633 = vunpack.c.h.s8.bf16 %v241
    %v634 = vunpack.c.h.s8.bf16 %v242
    %v635 = vunpack.c.l.s8.bf16 %v243
    %v636 = vunpack.c.l.s8.bf16 %v244
    %v637 = vunpack.c.l.s8.bf16 %v245
    %v638 = vunpack.c.l.s8.bf16 %v246
    %v639 = vunpack.c.l.s8.bf16 %v247
    %v640 = vunpack.c.l.s8.bf16 %v248
    %v641 = vunpack.c.l.s8.bf16 %v249
    %v642 = vunpack.c.l.s8.bf16 %v250
    %v643 = vunpack.c.h.s8.bf16 %v243
    %v644 = vunpack.c.h.s8.bf16 %v244
    %v645 = vunpack.c.h.s8.bf16 %v245
    %v646 = vunpack.c.h.s8.bf16 %v246
    %v647 = vunpack.c.h.s8.bf16 %v247
    %v648 = vunpack.c.h.s8.bf16 %v248
    %v649 = vunpack.c.h.s8.bf16 %v249
    %v650 = vunpack.c.h.s8.bf16 %v250
    %v651 = vunpack.c.l.s8.bf16 %v251
    %v652 = vunpack.c.l.s8.bf16 %v252
    %v653 = vunpack.c.l.s8.bf16 %v253
    %v654 = vunpack.c.l.s8.bf16 %v254
    %v655 = vunpack.c.l.s8.bf16 %v255
    %v656 = vunpack.c.l.s8.bf16 %v256
    %v657 = vunpack.c.l.s8.bf16 %v257
    %v658 = vunpack.c.l.s8.bf16 %v258
    %v659 = vunpack.c.h.s8.bf16 %v251
    %v660 = vunpack.c.h.s8.bf16 %v252
    %v661 = vunpack.c.h.s8.bf16 %v253
    %v662 = vunpack.c.h.s8.bf16 %v254
    %v663 = vunpack.c.h.s8.bf16 %v255
    %v664 = vunpack.c.h.s8.bf16 %v256
    %v665 = vunpack.c.h.s8.bf16 %v257
    %v666 = vunpack.c.h.s8.bf16 %v258
    %v667 = vunpack.c.l.s8.bf16 %v259
    %v668 = vunpack.c.l.s8.bf16 %v260
    %v669 = vunpack.c.l.s8.bf16 %v261
    %v670 = vunpack.c.l.s8.bf16 %v262
    %v671 = vunpack.c.l.s8.bf16 %v263
    %v672 = vunpack.c.l.s8.bf16 %v264
    %v673 = vunpack.c.l.s8.bf16 %v265
    %v674 = vunpack.c.l.s8.bf16 %v266
    %v675 = vunpack.c.h.s8.bf16 %v259
    %v676 = vunpack.c.h.s8.bf16 %v260
    %v677 = vunpack.c.h.s8.bf16 %v261
    %v678 = vunpack.c.h.s8.bf16 %v262
    %v679 = vunpack.c.h.s8.bf16 %v263
    %v680 = vunpack.c.h.s8.bf16 %v264
    %v681 = vunpack.c.h.s8.bf16 %v265
    %v682 = vunpack.c.h.s8.bf16 %v266
    %v683 = vunpack.c.l.s8.bf16 %v267
    %v684 = vunpack.c.l.s8.bf16 %v268
    %v685 = vunpack.c.l.s8.bf16 %v269
    %v686 = vunpack.c.l.s8.bf16 %v270
    %v687 = vunpack.c.l.s8.bf16 %v271
    %v688 = vunpack.c.l.s8.bf16 %v272
    %v689 = vunpack.c.l.s8.bf16 %v273
    %v690 = vunpack.c.l.s8.bf16 %v274
    %v691 = vunpack.c.h.s8.bf16 %v267
    %v692 = vunpack.c.h.s8.bf16 %v268
    %v693 = vunpack.c.h.s8.bf16 %v269
    %v694 = vunpack.c.h.s8.bf16 %v270
    %v695 = vunpack.c.h.s8.bf16 %v271
    %v696 = vunpack.c.h.s8.bf16 %v272
    %v697 = vunpack.c.h.s8.bf16 %v273
    %v698 = vunpack.c.h.s8.bf16 %v274
    %v699 = vunpack.c.l.s8.bf16 %v275
    %v700 = vunpack.c.l.s8.bf16 %v276
    %v701 = vunpack.c.l.s8.bf16 %v277
    %v702 = vunpack.c.l.s8.bf16 %v278
    %v703 = vunpack.c.l.s8.bf16 %v279
    %v704 = vunpack.c.l.s8.bf16 %v280
    %v705 = vunpack.c.l.s8.bf16 %v281
    %v706 = vunpack.c.l.s8.bf16 %v282
    %v707 = vunpack.c.h.s8.bf16 %v275
    %v708 = vunpack.c.h.s8.bf16 %v276
    %v709 = vunpack.c.h.s8.bf16 %v277
    %v710 = vunpack.c.h.s8.bf16 %v278
    %v711 = vunpack.c.h.s8.bf16 %v279
    %v712 = vunpack.c.h.s8.bf16 %v280
    %v713 = vunpack.c.h.s8.bf16 %v281
    %v714 = vunpack.c.h.s8.bf16 %v282
    %v715 = vunpack.c.l.s8.bf16 %v283
    %v716 = vunpack.c.l.s8.bf16 %v284
    %v717 = vunpack.c.l.s8.bf16 %v285
    %v718 = vunpack.c.l.s8.bf16 %v286
    %v719 = vunpack.c.l.s8.bf16 %v287
    %v720 = vunpack.c.l.s8.bf16 %v288
    %v721 = vunpack.c.l.s8.bf16 %v289
    %v722 = vunpack.c.l.s8.bf16 %v290
    %v723 = vunpack.c.h.s8.bf16 %v283
    %v724 = vunpack.c.h.s8.bf16 %v284
    %v725 = vunpack.c.h.s8.bf16 %v285
    %v726 = vunpack.c.h.s8.bf16 %v286
    %v727 = vunpack.c.h.s8.bf16 %v287
    %v728 = vunpack.c.h.s8.bf16 %v288
    %v729 = vunpack.c.h.s8.bf16 %v289
    %v730 = vunpack.c.h.s8.bf16 %v290
    %v731 = vunpack.c.l.s8.bf16 %v291
    %v732 = vunpack.c.l.s8.bf16 %v292
    %v733 = vunpack.c.l.s8.bf16 %v293
    %v734 = vunpack.c.l.s8.bf16 %v294
    %v735 = vunpack.c.l.s8.bf16 %v295
    %v736 = vunpack.c.l.s8.bf16 %v296
    %v737 = vunpack.c.l.s8.bf16 %v297
    %v738 = vunpack.c.l.s8.bf16 %v298
    %v739 = vunpack.c.h.s8.bf16 %v291
    %v740 = vunpack.c.h.s8.bf16 %v292
    %v741 = vunpack.c.h.s8.bf16 %v293
    %v742 = vunpack.c.h.s8.bf16 %v294
    %v743 = vunpack.c.h.s8.bf16 %v295
    %v744 = vunpack.c.h.s8.bf16 %v296
    %v745 = vunpack.c.h.s8.bf16 %v297
    %v746 = vunpack.c.h.s8.bf16 %v298
    %v747 = vunpack.c.l.s8.bf16 %v299
    %v748 = vunpack.c.l.s8.bf16 %v300
    %v749 = vunpack.c.l.s8.bf16 %v301
    %v750 = vunpack.c.l.s8.bf16 %v302
    %v751 = vunpack.c.l.s8.bf16 %v303
    %v752 = vunpack.c.l.s8.bf16 %v304
    %v753 = vunpack.c.l.s8.bf16 %v305
    %v754 = vunpack.c.l.s8.bf16 %v306
    %v755 = vunpack.c.h.s8.bf16 %v299
    %v756 = vunpack.c.h.s8.bf16 %v300
    %v757 = vunpack.c.h.s8.bf16 %v301
    %v758 = vunpack.c.h.s8.bf16 %v302
    %v759 = vunpack.c.h.s8.bf16 %v303
    %v760 = vunpack.c.h.s8.bf16 %v304
    %v761 = vunpack.c.h.s8.bf16 %v305
    %v762 = vunpack.c.h.s8.bf16 %v306
    %v763 = vunpack.c.l.s8.bf16 %v307
    %v764 = vunpack.c.l.s8.bf16 %v308
    %v765 = vunpack.c.l.s8.bf16 %v309
    %v766 = vunpack.c.l.s8.bf16 %v310
    %v767 = vunpack.c.l.s8.bf16 %v311
    %v768 = vunpack.c.l.s8.bf16 %v312
    %v769 = vunpack.c.l.s8.bf16 %v313
    %v770 = vunpack.c.l.s8.bf16 %v314
    %v771 = vunpack.c.h.s8.bf16 %v307
    %v772 = vunpack.c.h.s8.bf16 %v308
    %v773 = vunpack.c.h.s8.bf16 %v309
    %v774 = vunpack.c.h.s8.bf16 %v310
    %v775 = vunpack.c.h.s8.bf16 %v311
    %v776 = vunpack.c.h.s8.bf16 %v312
    %v777 = vunpack.c.h.s8.bf16 %v313
    %v778 = vunpack.c.h.s8.bf16 %v314
    %v779 = vunpack.c.l.s8.bf16 %v315
    %v780 = vunpack.c.l.s8.bf16 %v316
    %v781 = vunpack.c.l.s8.bf16 %v317
    %v782 = vunpack.c.l.s8.bf16 %v318
    %v783 = vunpack.c.l.s8.bf16 %v319
    %v784 = vunpack.c.l.s8.bf16 %v320
    %v785 = vunpack.c.l.s8.bf16 %v321
    %v786 = vunpack.c.l.s8.bf16 %v322
    %v787 = vunpack.c.h.s8.bf16 %v315
    %v788 = vunpack.c.h.s8.bf16 %v316
    %v789 = vunpack.c.h.s8.bf16 %v317
    %v790 = vunpack.c.h.s8.bf16 %v318
    %v791 = vunpack.c.h.s8.bf16 %v319
    %v792 = vunpack.c.h.s8.bf16 %v320
    %v793 = vunpack.c.h.s8.bf16 %v321
    %v794 = vunpack.c.h.s8.bf16 %v322
    %v795 = vunpack.c.l.s8.bf16 %v323
    %v796 = vunpack.c.l.s8.bf16 %v324
    %v797 = vunpack.c.l.s8.bf16 %v325
    %v798 = vunpack.c.l.s8.bf16 %v326
    %v799 = vunpack.c.l.s8.bf16 %v327
    %v800 = vunpack.c.l.s8.bf16 %v328
    %v801 = vunpack.c.l.s8.bf16 %v329
    %v802 = vunpack.c.l.s8.bf16 %v330
    %v803 = vunpack.c.h.s8.bf16 %v323
    %v804 = vunpack.c.h.s8.bf16 %v324
    %v805 = vunpack.c.h.s8.bf16 %v325
    %v806 = vunpack.c.h.s8.bf16 %v326
    %v807 = vunpack.c.h.s8.bf16 %v327
    %v808 = vunpack.c.h.s8.bf16 %v328
    %v809 = vunpack.c.h.s8.bf16 %v329
    %v810 = vunpack.c.h.s8.bf16 %v330
    %v811 = vunpack.c.l.s8.bf16 %v331
    %v812 = vunpack.c.l.s8.bf16 %v332
    %v813 = vunpack.c.l.s8.bf16 %v333
    %v814 = vunpack.c.l.s8.bf16 %v334
    %v815 = vunpack.c.l.s8.bf16 %v335
    %v816 = vunpack.c.l.s8.bf16 %v336
    %v817 = vunpack.c.l.s8.bf16 %v337
    %v818 = vunpack.c.l.s8.bf16 %v338
    %v819 = vunpack.c.h.s8.bf16 %v331
    %v820 = vunpack.c.h.s8.bf16 %v332
    %v821 = vunpack.c.h.s8.bf16 %v333
    %v822 = vunpack.c.h.s8.bf16 %v334
    %v823 = vunpack.c.h.s8.bf16 %v335
    %v824 = vunpack.c.h.s8.bf16 %v336
    %v825 = vunpack.c.h.s8.bf16 %v337
    %v826 = vunpack.c.h.s8.bf16 %v338
    %v827 = vunpack.c.l.s8.bf16 %v339
    %v828 = vunpack.c.l.s8.bf16 %v340
    %v829 = vunpack.c.l.s8.bf16 %v341
    %v830 = vunpack.c.l.s8.bf16 %v342
    %v831 = vunpack.c.l.s8.bf16 %v343
    %v832 = vunpack.c.l.s8.bf16 %v344
    %v833 = vunpack.c.l.s8.bf16 %v345
    %v834 = vunpack.c.l.s8.bf16 %v346
    %v835 = vunpack.c.h.s8.bf16 %v339
    %v836 = vunpack.c.h.s8.bf16 %v340
    %v837 = vunpack.c.h.s8.bf16 %v341
    %v838 = vunpack.c.h.s8.bf16 %v342
    %v839 = vunpack.c.h.s8.bf16 %v343
    %v840 = vunpack.c.h.s8.bf16 %v344
    %v841 = vunpack.c.h.s8.bf16 %v345
    %v842 = vunpack.c.h.s8.bf16 %v346
    %v843 = vunpack.c.l.s8.bf16 %v347
    %v844 = vunpack.c.l.s8.bf16 %v348
    %v845 = vunpack.c.l.s8.bf16 %v349
    %v846 = vunpack.c.l.s8.bf16 %v350
    %v847 = vunpack.c.l.s8.bf16 %v351
    %v848 = vunpack.c.l.s8.bf16 %v352
    %v849 = vunpack.c.l.s8.bf16 %v353
    %v850 = vunpack.c.l.s8.bf16 %v354
    %v851 = vunpack.c.h.s8.bf16 %v347
    %v852 = vunpack.c.h.s8.bf16 %v348
    %v853 = vunpack.c.h.s8.bf16 %v349
    %v854 = vunpack.c.h.s8.bf16 %v350
    %v855 = vunpack.c.h.s8.bf16 %v351
    %v856 = vunpack.c.h.s8.bf16 %v352
    %v857 = vunpack.c.h.s8.bf16 %v353
    %v858 = vunpack.c.h.s8.bf16 %v354
    %v859 = vunpack.c.l.s8.bf16 %v355
    %v860 = vunpack.c.l.s8.bf16 %v356
    %v861 = vunpack.c.l.s8.bf16 %v357
    %v862 = vunpack.c.l.s8.bf16 %v358
    %v863 = vunpack.c.l.s8.bf16 %v359
    %v864 = vunpack.c.l.s8.bf16 %v360
    %v865 = vunpack.c.l.s8.bf16 %v361
    %v866 = vunpack.c.l.s8.bf16 %v362
    %v867 = vunpack.c.h.s8.bf16 %v355
    %v868 = vunpack.c.h.s8.bf16 %v356
    %v869 = vunpack.c.h.s8.bf16 %v357
    %v870 = vunpack.c.h.s8.bf16 %v358
    %v871 = vunpack.c.h.s8.bf16 %v359
    %v872 = vunpack.c.h.s8.bf16 %v360
    %v873 = vunpack.c.h.s8.bf16 %v361
    %v874 = vunpack.c.h.s8.bf16 %v362
    %v879 = vunpack.c.l.b16 %v92
    %v880 = vunpack.c.h.b16 %v92
    %v881 = vunpack.c.l.b16 %v93
    %v882 = vunpack.c.h.b16 %v93
    %v883 = vunpack.c.l.b16 %v94
    %v884 = vunpack.c.h.b16 %v94
    %v885 = vunpack.c.l.b16 %v95
    %v886 = vunpack.c.h.b16 %v95
    %v887 = vpack.c.b16 %v879, %v879
    %v888 = vpack.c.b16 %v880, %v880
    %v889 = vpack.c.b16 %v881, %v881
    %v890 = vpack.c.b16 %v882, %v882
    %v891 = vpack.c.b16 %v883, %v883
    %v892 = vpack.c.b16 %v884, %v884
    %v893 = vpack.c.b16 %v885, %v885
    %v894 = vpack.c.b16 %v886, %v886
    %903 = vmatprep.subr.bf16.mxu0 %v420
    %904 = vmatpush1.bf16.msra.mxu0 %v419
    %905 = vmatprep.subr.bf16.mxu0 %v412
    %906 = vmatpush1.bf16.msra.mxu0 %v411
    %907 = vmatprep.subr.bf16.mxu0 %v404
    %908 = vmatpush1.bf16.msra.mxu0 %v403
    %909 = vmatprep.subr.bf16.mxu0 %v396
    %910 = vmatpush1.bf16.msra.mxu0 %v395
    %911 = vmatprep.subr.bf16.mxu0 %v388
    %912 = vmatpush1.bf16.msra.mxu0 %v387
    %913 = vmatprep.subr.bf16.mxu0 %v380
    %914 = vmatpush1.bf16.msra.mxu0 %v379
    %915 = vmatprep.subr.bf16.mxu0 %v372
    %916 = vmatpush1.bf16.msra.mxu0 %v371
    %917 = vmatprep.subr.bf16.mxu0 %v364
    %918 = vmatpush1.bf16.msra.mxu0 %v363
    %919 = vmatprep.subr.bf16.mxu0 %v484
    %920 = vmatpush2.bf16.msra.mxu0 %v483
    %921 = vmatprep.subr.bf16.mxu0 %v476
    %922 = vmatpush2.bf16.msra.mxu0 %v475
    %923 = vmatprep.subr.bf16.mxu0 %v468
    %924 = vmatpush2.bf16.msra.mxu0 %v467
    %925 = vmatprep.subr.bf16.mxu0 %v460
    %926 = vmatpush2.bf16.msra.mxu0 %v459
    %927 = vmatprep.subr.bf16.mxu0 %v452
    %928 = vmatpush2.bf16.msra.mxu0 %v451
    %929 = vmatprep.subr.bf16.mxu0 %v444
    %930 = vmatpush2.bf16.msra.mxu0 %v443
    %931 = vmatprep.subr.bf16.mxu0 %v436
    %932 = vmatpush2.bf16.msra.mxu0 %v435
    %933 = vmatprep.subr.bf16.mxu0 %v428
    %934 = vmatpush2.bf16.msra.mxu0 %v427
    %935 = vmatprep.mubr.bf16.mxu0 %v888
    %936 = vmatmul.mubr.bf16.gmra.mxu0 %v887
    %v937 = vpop.f32.mrf.mxu0
    %v938 = vadd.f32 0.0, %v937
    %v939 = vpop.f32.mrf.mxu0
    %v940 = vadd.f32 0.0, %v939
    %v941 = vpop.f32.mrf.mxu0
    %v942 = vpop.f32.mrf.mxu0
    %943 = vdwg.mxu0
    %944 = vmatprep.subr.bf16.mxu0 %v548
    %945 = vmatpush1.bf16.msra.mxu0 %v547
    %946 = vmatprep.subr.bf16.mxu0 %v540
    %947 = vmatpush1.bf16.msra.mxu0 %v539
    %948 = vmatprep.subr.bf16.mxu0 %v532
    %949 = vmatpush1.bf16.msra.mxu0 %v531
    %950 = vmatprep.subr.bf16.mxu0 %v524
    %951 = vmatpush1.bf16.msra.mxu0 %v523
    %952 = vmatprep.subr.bf16.mxu0 %v516
    %953 = vmatpush1.bf16.msra.mxu0 %v515
    %954 = vmatprep.subr.bf16.mxu0 %v508
    %955 = vmatpush1.bf16.msra.mxu0 %v507
    %956 = vmatprep.subr.bf16.mxu0 %v500
    %957 = vmatpush1.bf16.msra.mxu0 %v499
    %958 = vmatprep.subr.bf16.mxu0 %v492
    %959 = vmatpush1.bf16.msra.mxu0 %v491
    %960 = vmatprep.subr.bf16.mxu0 %v612
    %961 = vmatpush2.bf16.msra.mxu0 %v611
    %962 = vmatprep.subr.bf16.mxu0 %v604
    %963 = vmatpush2.bf16.msra.mxu0 %v603
    %964 = vmatprep.subr.bf16.mxu0 %v596
    %965 = vmatpush2.bf16.msra.mxu0 %v595
    %966 = vmatprep.subr.bf16.mxu0 %v588
    %967 = vmatpush2.bf16.msra.mxu0 %v587
    %968 = vmatprep.subr.bf16.mxu0 %v580
    %969 = vmatpush2.bf16.msra.mxu0 %v579
    %970 = vmatprep.subr.bf16.mxu0 %v572
    %971 = vmatpush2.bf16.msra.mxu0 %v571
    %972 = vmatprep.subr.bf16.mxu0 %v564
    %973 = vmatpush2.bf16.msra.mxu0 %v563
    %974 = vmatprep.subr.bf16.mxu0 %v556
    %975 = vmatpush2.bf16.msra.mxu0 %v555
    %976 = vmatprep.mubr.bf16.mxu0 %v890
    %977 = vmatmul.mubr.bf16.gmra.mxu0 %v889
    %v978 = vpop.f32.mrf.mxu0
    %v979 = vadd.f32 %v938, %v978
    %v980 = vpop.f32.mrf.mxu0
    %v981 = vadd.f32 %v940, %v980
    %v982 = vpop.f32.mrf.mxu0
    %v983 = vpop.f32.mrf.mxu0
    %984 = vdwg.mxu0
    %985 = vmatprep.subr.bf16.mxu0 %v676
    %986 = vmatpush1.bf16.msra.mxu0 %v675
    %987 = vmatprep.subr.bf16.mxu0 %v668
    %988 = vmatpush1.bf16.msra.mxu0 %v667
    %989 = vmatprep.subr.bf16.mxu0 %v660
    %990 = vmatpush1.bf16.msra.mxu0 %v659
    %991 = vmatprep.subr.bf16.mxu0 %v652
    %992 = vmatpush1.bf16.msra.mxu0 %v651
    %993 = vmatprep.subr.bf16.mxu0 %v644
    %994 = vmatpush1.bf16.msra.mxu0 %v643
    %995 = vmatprep.subr.bf16.mxu0 %v636
    %996 = vmatpush1.bf16.msra.mxu0 %v635
    %997 = vmatprep.subr.bf16.mxu0 %v628
    %998 = vmatpush1.bf16.msra.mxu0 %v627
    %999 = vmatprep.subr.bf16.mxu0 %v620
    %1000 = vmatpush1.bf16.msra.mxu0 %v619
    %1001 = vmatprep.subr.bf16.mxu0 %v740
    %1002 = vmatpush2.bf16.msra.mxu0 %v739
    %1003 = vmatprep.subr.bf16.mxu0 %v732
    %1004 = vmatpush2.bf16.msra.mxu0 %v731
    %1005 = vmatprep.subr.bf16.mxu0 %v724
    %1006 = vmatpush2.bf16.msra.mxu0 %v723
    %1007 = vmatprep.subr.bf16.mxu0 %v716
    %1008 = vmatpush2.bf16.msra.mxu0 %v715
    %1009 = vmatprep.subr.bf16.mxu0 %v708
    %1010 = vmatpush2.bf16.msra.mxu0 %v707
    %1011 = vmatprep.subr.bf16.mxu0 %v700
    %1012 = vmatpush2.bf16.msra.mxu0 %v699
    %1013 = vmatprep.subr.bf16.mxu0 %v692
    %1014 = vmatpush2.bf16.msra.mxu0 %v691
    %1015 = vmatprep.subr.bf16.mxu0 %v684
    %1016 = vmatpush2.bf16.msra.mxu0 %v683
    %1017 = vmatprep.mubr.bf16.mxu0 %v892
    %1018 = vmatmul.mubr.bf16.gmra.mxu0 %v891
    %v1019 = vpop.f32.mrf.mxu0
    %v1020 = vadd.f32 %v979, %v1019
    %v1021 = vpop.f32.mrf.mxu0
    %v1022 = vadd.f32 %v981, %v1021
    %v1023 = vpop.f32.mrf.mxu0
    %v1024 = vpop.f32.mrf.mxu0
    %1025 = vdwg.mxu0
    %1026 = vmatprep.subr.bf16.mxu0 %v804
    %1027 = vmatpush1.bf16.msra.mxu0 %v803
    %1028 = vmatprep.subr.bf16.mxu0 %v796
    %1029 = vmatpush1.bf16.msra.mxu0 %v795
    %1030 = vmatprep.subr.bf16.mxu0 %v788
    %1031 = vmatpush1.bf16.msra.mxu0 %v787
    %1032 = vmatprep.subr.bf16.mxu0 %v780
    %1033 = vmatpush1.bf16.msra.mxu0 %v779
    %1034 = vmatprep.subr.bf16.mxu0 %v772
    %1035 = vmatpush1.bf16.msra.mxu0 %v771
    %1036 = vmatprep.subr.bf16.mxu0 %v764
    %1037 = vmatpush1.bf16.msra.mxu0 %v763
    %1038 = vmatprep.subr.bf16.mxu0 %v756
    %1039 = vmatpush1.bf16.msra.mxu0 %v755
    %1040 = vmatprep.subr.bf16.mxu0 %v748
    %1041 = vmatpush1.bf16.msra.mxu0 %v747
    %1042 = vmatprep.subr.bf16.mxu0 %v868
    %1043 = vmatpush2.bf16.msra.mxu0 %v867
    %1044 = vmatprep.subr.bf16.mxu0 %v860
    %1045 = vmatpush2.bf16.msra.mxu0 %v859
    %1046 = vmatprep.subr.bf16.mxu0 %v852
    %1047 = vmatpush2.bf16.msra.mxu0 %v851
    %1048 = vmatprep.subr.bf16.mxu0 %v844
    %1049 = vmatpush2.bf16.msra.mxu0 %v843
    %1050 = vmatprep.subr.bf16.mxu0 %v836
    %1051 = vmatpush2.bf16.msra.mxu0 %v835
    %1052 = vmatprep.subr.bf16.mxu0 %v828
    %1053 = vmatpush2.bf16.msra.mxu0 %v827
    %1054 = vmatprep.subr.bf16.mxu0 %v820
    %1055 = vmatpush2.bf16.msra.mxu0 %v819
    %1056 = vmatprep.subr.bf16.mxu0 %v812
    %1057 = vmatpush2.bf16.msra.mxu0 %v811
    %1058 = vmatprep.mubr.bf16.mxu0 %v894
    %1059 = vmatmul.mubr.bf16.gmra.mxu0 %v893
    %v1060 = vpop.f32.mrf.mxu0
    %v1061 = vadd.f32 %v1020, %v1060
    %v1062 = vpop.f32.mrf.mxu0
    %v1063 = vadd.f32 %v1022, %v1062
    %v1064 = vpop.f32.mrf.mxu0
    %v1065 = vpop.f32.mrf.mxu0
    %1066 = vdwg.mxu0
    %1067 = vmatprep.subr.bf16.mxu0 %v422
    %1068 = vmatpush1.bf16.msra.mxu0 %v421
    %1069 = vmatprep.subr.bf16.mxu0 %v414
    %1070 = vmatpush1.bf16.msra.mxu0 %v413
    %1071 = vmatprep.subr.bf16.mxu0 %v406
    %1072 = vmatpush1.bf16.msra.mxu0 %v405
    %1073 = vmatprep.subr.bf16.mxu0 %v398
    %1074 = vmatpush1.bf16.msra.mxu0 %v397
    %1075 = vmatprep.subr.bf16.mxu0 %v390
    %1076 = vmatpush1.bf16.msra.mxu0 %v389
    %1077 = vmatprep.subr.bf16.mxu0 %v382
    %1078 = vmatpush1.bf16.msra.mxu0 %v381
    %1079 = vmatprep.subr.bf16.mxu0 %v374
    %1080 = vmatpush1.bf16.msra.mxu0 %v373
    %1081 = vmatprep.subr.bf16.mxu0 %v366
    %1082 = vmatpush1.bf16.msra.mxu0 %v365
    %1083 = vmatprep.subr.bf16.mxu0 %v486
    %1084 = vmatpush2.bf16.msra.mxu0 %v485
    %1085 = vmatprep.subr.bf16.mxu0 %v478
    %1086 = vmatpush2.bf16.msra.mxu0 %v477
    %1087 = vmatprep.subr.bf16.mxu0 %v470
    %1088 = vmatpush2.bf16.msra.mxu0 %v469
    %1089 = vmatprep.subr.bf16.mxu0 %v462
    %1090 = vmatpush2.bf16.msra.mxu0 %v461
    %1091 = vmatprep.subr.bf16.mxu0 %v454
    %1092 = vmatpush2.bf16.msra.mxu0 %v453
    %1093 = vmatprep.subr.bf16.mxu0 %v446
    %1094 = vmatpush2.bf16.msra.mxu0 %v445
    %1095 = vmatprep.subr.bf16.mxu0 %v438
    %1096 = vmatpush2.bf16.msra.mxu0 %v437
    %1097 = vmatprep.subr.bf16.mxu0 %v430
    %1098 = vmatpush2.bf16.msra.mxu0 %v429
    %1099 = vmatprep.mubr.bf16.mxu0 %v888
    %1100 = vmatmul.mubr.bf16.gmra.mxu0 %v887
    %v1101 = vpop.f32.mrf.mxu0
    %v1102 = vadd.f32 0.0, %v1101
    %v1103 = vpop.f32.mrf.mxu0
    %v1104 = vadd.f32 0.0, %v1103
    %v1105 = vpop.f32.mrf.mxu0
    %v1106 = vpop.f32.mrf.mxu0
    %1107 = vdwg.mxu0
    %1108 = vmatprep.subr.bf16.mxu0 %v550
    %1109 = vmatpush1.bf16.msra.mxu0 %v549
    %1110 = vmatprep.subr.bf16.mxu0 %v542
    %1111 = vmatpush1.bf16.msra.mxu0 %v541
    %1112 = vmatprep.subr.bf16.mxu0 %v534
    %1113 = vmatpush1.bf16.msra.mxu0 %v533
    %1114 = vmatprep.subr.bf16.mxu0 %v526
    %1115 = vmatpush1.bf16.msra.mxu0 %v525
    %1116 = vmatprep.subr.bf16.mxu0 %v518
    %1117 = vmatpush1.bf16.msra.mxu0 %v517
    %1118 = vmatprep.subr.bf16.mxu0 %v510
    %1119 = vmatpush1.bf16.msra.mxu0 %v509
    %1120 = vmatprep.subr.bf16.mxu0 %v502
    %1121 = vmatpush1.bf16.msra.mxu0 %v501
    %1122 = vmatprep.subr.bf16.mxu0 %v494
    %1123 = vmatpush1.bf16.msra.mxu0 %v493
    %1124 = vmatprep.subr.bf16.mxu0 %v614
    %1125 = vmatpush2.bf16.msra.mxu0 %v613
    %1126 = vmatprep.subr.bf16.mxu0 %v606
    %1127 = vmatpush2.bf16.msra.mxu0 %v605
    %1128 = vmatprep.subr.bf16.mxu0 %v598
    %1129 = vmatpush2.bf16.msra.mxu0 %v597
    %1130 = vmatprep.subr.bf16.mxu0 %v590
    %1131 = vmatpush2.bf16.msra.mxu0 %v589
    %1132 = vmatprep.subr.bf16.mxu0 %v582
    %1133 = vmatpush2.bf16.msra.mxu0 %v581
    %1134 = vmatprep.subr.bf16.mxu0 %v574
    %1135 = vmatpush2.bf16.msra.mxu0 %v573
    %1136 = vmatprep.subr.bf16.mxu0 %v566
    %1137 = vmatpush2.bf16.msra.mxu0 %v565
    %1138 = vmatprep.subr.bf16.mxu0 %v558
    %1139 = vmatpush2.bf16.msra.mxu0 %v557
    %1140 = vmatprep.mubr.bf16.mxu0 %v890
    %1141 = vmatmul.mubr.bf16.gmra.mxu0 %v889
    %v1142 = vpop.f32.mrf.mxu0
    %v1143 = vadd.f32 %v1102, %v1142
    %v1144 = vpop.f32.mrf.mxu0
    %v1145 = vadd.f32 %v1104, %v1144
    %v1146 = vpop.f32.mrf.mxu0
    %v1147 = vpop.f32.mrf.mxu0
    %1148 = vdwg.mxu0
    %1149 = vmatprep.subr.bf16.mxu0 %v678
    %1150 = vmatpush1.bf16.msra.mxu0 %v677
    %1151 = vmatprep.subr.bf16.mxu0 %v670
    %1152 = vmatpush1.bf16.msra.mxu0 %v669
    %1153 = vmatprep.subr.bf16.mxu0 %v662
    %1154 = vmatpush1.bf16.msra.mxu0 %v661
    %1155 = vmatprep.subr.bf16.mxu0 %v654
    %1156 = vmatpush1.bf16.msra.mxu0 %v653
    %1157 = vmatprep.subr.bf16.mxu0 %v646
    %1158 = vmatpush1.bf16.msra.mxu0 %v645
    %1159 = vmatprep.subr.bf16.mxu0 %v638
    %1160 = vmatpush1.bf16.msra.mxu0 %v637
    %1161 = vmatprep.subr.bf16.mxu0 %v630
    %1162 = vmatpush1.bf16.msra.mxu0 %v629
    %1163 = vmatprep.subr.bf16.mxu0 %v622
    %1164 = vmatpush1.bf16.msra.mxu0 %v621
    %1165 = vmatprep.subr.bf16.mxu0 %v742
    %1166 = vmatpush2.bf16.msra.mxu0 %v741
    %1167 = vmatprep.subr.bf16.mxu0 %v734
    %1168 = vmatpush2.bf16.msra.mxu0 %v733
    %1169 = vmatprep.subr.bf16.mxu0 %v726
    %1170 = vmatpush2.bf16.msra.mxu0 %v725
    %1171 = vmatprep.subr.bf16.mxu0 %v718
    %1172 = vmatpush2.bf16.msra.mxu0 %v717
    %1173 = vmatprep.subr.bf16.mxu0 %v710
    %1174 = vmatpush2.bf16.msra.mxu0 %v709
    %1175 = vmatprep.subr.bf16.mxu0 %v702
    %1176 = vmatpush2.bf16.msra.mxu0 %v701
    %1177 = vmatprep.subr.bf16.mxu0 %v694
    %1178 = vmatpush2.bf16.msra.mxu0 %v693
    %1179 = vmatprep.subr.bf16.mxu0 %v686
    %1180 = vmatpush2.bf16.msra.mxu0 %v685
    %1181 = vmatprep.mubr.bf16.mxu0 %v892
    %1182 = vmatmul.mubr.bf16.gmra.mxu0 %v891
    %v1183 = vpop.f32.mrf.mxu0
    %v1184 = vadd.f32 %v1143, %v1183
    %v1185 = vpop.f32.mrf.mxu0
    %v1186 = vadd.f32 %v1145, %v1185
    %v1187 = vpop.f32.mrf.mxu0
    %v1188 = vpop.f32.mrf.mxu0
    %1189 = vdwg.mxu0
    %1190 = vmatprep.subr.bf16.mxu0 %v806
    %1191 = vmatpush1.bf16.msra.mxu0 %v805
    %1192 = vmatprep.subr.bf16.mxu0 %v798
    %1193 = vmatpush1.bf16.msra.mxu0 %v797
    %1194 = vmatprep.subr.bf16.mxu0 %v790
    %1195 = vmatpush1.bf16.msra.mxu0 %v789
    %1196 = vmatprep.subr.bf16.mxu0 %v782
    %1197 = vmatpush1.bf16.msra.mxu0 %v781
    %1198 = vmatprep.subr.bf16.mxu0 %v774
    %1199 = vmatpush1.bf16.msra.mxu0 %v773
    %1200 = vmatprep.subr.bf16.mxu0 %v766
    %1201 = vmatpush1.bf16.msra.mxu0 %v765
    %1202 = vmatprep.subr.bf16.mxu0 %v758
    %1203 = vmatpush1.bf16.msra.mxu0 %v757
    %1204 = vmatprep.subr.bf16.mxu0 %v750
    %1205 = vmatpush1.bf16.msra.mxu0 %v749
    %1206 = vmatprep.subr.bf16.mxu0 %v870
    %1207 = vmatpush2.bf16.msra.mxu0 %v869
    %1208 = vmatprep.subr.bf16.mxu0 %v862
    %1209 = vmatpush2.bf16.msra.mxu0 %v861
    %1210 = vmatprep.subr.bf16.mxu0 %v854
    %1211 = vmatpush2.bf16.msra.mxu0 %v853
    %1212 = vmatprep.subr.bf16.mxu0 %v846
    %1213 = vmatpush2.bf16.msra.mxu0 %v845
    %1214 = vmatprep.subr.bf16.mxu0 %v838
    %1215 = vmatpush2.bf16.msra.mxu0 %v837
    %1216 = vmatprep.subr.bf16.mxu0 %v830
    %1217 = vmatpush2.bf16.msra.mxu0 %v829
    %1218 = vmatprep.subr.bf16.mxu0 %v822
    %1219 = vmatpush2.bf16.msra.mxu0 %v821
    %1220 = vmatprep.subr.bf16.mxu0 %v814
    %1221 = vmatpush2.bf16.msra.mxu0 %v813
    %1222 = vmatprep.mubr.bf16.mxu0 %v894
    %1223 = vmatmul.mubr.bf16.gmra.mxu0 %v893
    %v1224 = vpop.f32.mrf.mxu0
    %v1225 = vadd.f32 %v1184, %v1224
    %v1226 = vpop.f32.mrf.mxu0
    %v1227 = vadd.f32 %v1186, %v1226
    %v1228 = vpop.f32.mrf.mxu0
    %v1229 = vpop.f32.mrf.mxu0
    %1230 = vdwg.mxu0
    %1231 = vmatprep.subr.bf16.mxu0 %v424
    %1232 = vmatpush1.bf16.msra.mxu0 %v423
    %1233 = vmatprep.subr.bf16.mxu0 %v416
    %1234 = vmatpush1.bf16.msra.mxu0 %v415
    %1235 = vmatprep.subr.bf16.mxu0 %v408
    %1236 = vmatpush1.bf16.msra.mxu0 %v407
    %1237 = vmatprep.subr.bf16.mxu0 %v400
    %1238 = vmatpush1.bf16.msra.mxu0 %v399
    %1239 = vmatprep.subr.bf16.mxu0 %v392
    %1240 = vmatpush1.bf16.msra.mxu0 %v391
    %1241 = vmatprep.subr.bf16.mxu0 %v384
    %1242 = vmatpush1.bf16.msra.mxu0 %v383
    %1243 = vmatprep.subr.bf16.mxu0 %v376
    %1244 = vmatpush1.bf16.msra.mxu0 %v375
    %1245 = vmatprep.subr.bf16.mxu0 %v368
    %1246 = vmatpush1.bf16.msra.mxu0 %v367
    %1247 = vmatprep.subr.bf16.mxu0 %v488
    %1248 = vmatpush2.bf16.msra.mxu0 %v487
    %1249 = vmatprep.subr.bf16.mxu0 %v480
    %1250 = vmatpush2.bf16.msra.mxu0 %v479
    %1251 = vmatprep.subr.bf16.mxu0 %v472
    %1252 = vmatpush2.bf16.msra.mxu0 %v471
    %1253 = vmatprep.subr.bf16.mxu0 %v464
    %1254 = vmatpush2.bf16.msra.mxu0 %v463
    %1255 = vmatprep.subr.bf16.mxu0 %v456
    %1256 = vmatpush2.bf16.msra.mxu0 %v455
    %1257 = vmatprep.subr.bf16.mxu0 %v448
    %1258 = vmatpush2.bf16.msra.mxu0 %v447
    %1259 = vmatprep.subr.bf16.mxu0 %v440
    %1260 = vmatpush2.bf16.msra.mxu0 %v439
    %1261 = vmatprep.subr.bf16.mxu0 %v432
    %1262 = vmatpush2.bf16.msra.mxu0 %v431
    %1263 = vmatprep.mubr.bf16.mxu0 %v888
    %1264 = vmatmul.mubr.bf16.gmra.mxu0 %v887
    %v1265 = vpop.f32.mrf.mxu0
    %v1266 = vadd.f32 0.0, %v1265
    %v1267 = vpop.f32.mrf.mxu0
    %v1268 = vadd.f32 0.0, %v1267
    %v1269 = vpop.f32.mrf.mxu0
    %v1270 = vpop.f32.mrf.mxu0
    %1271 = vdwg.mxu0
    %1272 = vmatprep.subr.bf16.mxu0 %v552
    %1273 = vmatpush1.bf16.msra.mxu0 %v551
    %1274 = vmatprep.subr.bf16.mxu0 %v544
    %1275 = vmatpush1.bf16.msra.mxu0 %v543
    %1276 = vmatprep.subr.bf16.mxu0 %v536
    %1277 = vmatpush1.bf16.msra.mxu0 %v535
    %1278 = vmatprep.subr.bf16.mxu0 %v528
    %1279 = vmatpush1.bf16.msra.mxu0 %v527
    %1280 = vmatprep.subr.bf16.mxu0 %v520
    %1281 = vmatpush1.bf16.msra.mxu0 %v519
    %1282 = vmatprep.subr.bf16.mxu0 %v512
    %1283 = vmatpush1.bf16.msra.mxu0 %v511
    %1284 = vmatprep.subr.bf16.mxu0 %v504
    %1285 = vmatpush1.bf16.msra.mxu0 %v503
    %1286 = vmatprep.subr.bf16.mxu0 %v496
    %1287 = vmatpush1.bf16.msra.mxu0 %v495
    %1288 = vmatprep.subr.bf16.mxu0 %v616
    %1289 = vmatpush2.bf16.msra.mxu0 %v615
    %1290 = vmatprep.subr.bf16.mxu0 %v608
    %1291 = vmatpush2.bf16.msra.mxu0 %v607
    %1292 = vmatprep.subr.bf16.mxu0 %v600
    %1293 = vmatpush2.bf16.msra.mxu0 %v599
    %1294 = vmatprep.subr.bf16.mxu0 %v592
    %1295 = vmatpush2.bf16.msra.mxu0 %v591
    %1296 = vmatprep.subr.bf16.mxu0 %v584
    %1297 = vmatpush2.bf16.msra.mxu0 %v583
    %1298 = vmatprep.subr.bf16.mxu0 %v576
    %1299 = vmatpush2.bf16.msra.mxu0 %v575
    %1300 = vmatprep.subr.bf16.mxu0 %v568
    %1301 = vmatpush2.bf16.msra.mxu0 %v567
    %1302 = vmatprep.subr.bf16.mxu0 %v560
    %1303 = vmatpush2.bf16.msra.mxu0 %v559
    %1304 = vmatprep.mubr.bf16.mxu0 %v890
    %1305 = vmatmul.mubr.bf16.gmra.mxu0 %v889
    %v1306 = vpop.f32.mrf.mxu0
    %v1307 = vadd.f32 %v1266, %v1306
    %v1308 = vpop.f32.mrf.mxu0
    %v1309 = vadd.f32 %v1268, %v1308
    %v1310 = vpop.f32.mrf.mxu0
    %v1311 = vpop.f32.mrf.mxu0
    %1312 = vdwg.mxu0
    %1313 = vmatprep.subr.bf16.mxu0 %v680
    %1314 = vmatpush1.bf16.msra.mxu0 %v679
    %1315 = vmatprep.subr.bf16.mxu0 %v672
    %1316 = vmatpush1.bf16.msra.mxu0 %v671
    %1317 = vmatprep.subr.bf16.mxu0 %v664
    %1318 = vmatpush1.bf16.msra.mxu0 %v663
    %1319 = vmatprep.subr.bf16.mxu0 %v656
    %1320 = vmatpush1.bf16.msra.mxu0 %v655
    %1321 = vmatprep.subr.bf16.mxu0 %v648
    %1322 = vmatpush1.bf16.msra.mxu0 %v647
    %1323 = vmatprep.subr.bf16.mxu0 %v640
    %1324 = vmatpush1.bf16.msra.mxu0 %v639
    %1325 = vmatprep.subr.bf16.mxu0 %v632
    %1326 = vmatpush1.bf16.msra.mxu0 %v631
    %1327 = vmatprep.subr.bf16.mxu0 %v624
    %1328 = vmatpush1.bf16.msra.mxu0 %v623
    %1329 = vmatprep.subr.bf16.mxu0 %v744
    %1330 = vmatpush2.bf16.msra.mxu0 %v743
    %1331 = vmatprep.subr.bf16.mxu0 %v736
    %1332 = vmatpush2.bf16.msra.mxu0 %v735
    %1333 = vmatprep.subr.bf16.mxu0 %v728
    %1334 = vmatpush2.bf16.msra.mxu0 %v727
    %1335 = vmatprep.subr.bf16.mxu0 %v720
    %1336 = vmatpush2.bf16.msra.mxu0 %v719
    %1337 = vmatprep.subr.bf16.mxu0 %v712
    %1338 = vmatpush2.bf16.msra.mxu0 %v711
    %1339 = vmatprep.subr.bf16.mxu0 %v704
    %1340 = vmatpush2.bf16.msra.mxu0 %v703
    %1341 = vmatprep.subr.bf16.mxu0 %v696
    %1342 = vmatpush2.bf16.msra.mxu0 %v695
    %1343 = vmatprep.subr.bf16.mxu0 %v688
    %1344 = vmatpush2.bf16.msra.mxu0 %v687
    %1345 = vmatprep.mubr.bf16.mxu0 %v892
    %1346 = vmatmul.mubr.bf16.gmra.mxu0 %v891
    %v1347 = vpop.f32.mrf.mxu0
    %v1348 = vadd.f32 %v1307, %v1347
    %v1349 = vpop.f32.mrf.mxu0
    %v1350 = vadd.f32 %v1309, %v1349
    %v1351 = vpop.f32.mrf.mxu0
    %v1352 = vpop.f32.mrf.mxu0
    %1353 = vdwg.mxu0
    %1354 = vmatprep.subr.bf16.mxu0 %v808
    %1355 = vmatpush1.bf16.msra.mxu0 %v807
    %1356 = vmatprep.subr.bf16.mxu0 %v800
    %1357 = vmatpush1.bf16.msra.mxu0 %v799
    %1358 = vmatprep.subr.bf16.mxu0 %v792
    %1359 = vmatpush1.bf16.msra.mxu0 %v791
    %1360 = vmatprep.subr.bf16.mxu0 %v784
    %1361 = vmatpush1.bf16.msra.mxu0 %v783
    %1362 = vmatprep.subr.bf16.mxu0 %v776
    %1363 = vmatpush1.bf16.msra.mxu0 %v775
    %1364 = vmatprep.subr.bf16.mxu0 %v768
    %1365 = vmatpush1.bf16.msra.mxu0 %v767
    %1366 = vmatprep.subr.bf16.mxu0 %v760
    %1367 = vmatpush1.bf16.msra.mxu0 %v759
    %1368 = vmatprep.subr.bf16.mxu0 %v752
    %1369 = vmatpush1.bf16.msra.mxu0 %v751
    %1370 = vmatprep.subr.bf16.mxu0 %v872
    %1371 = vmatpush2.bf16.msra.mxu0 %v871
    %1372 = vmatprep.subr.bf16.mxu0 %v864
    %1373 = vmatpush2.bf16.msra.mxu0 %v863
    %1374 = vmatprep.subr.bf16.mxu0 %v856
    %1375 = vmatpush2.bf16.msra.mxu0 %v855
    %1376 = vmatprep.subr.bf16.mxu0 %v848
    %1377 = vmatpush2.bf16.msra.mxu0 %v847
    %1378 = vmatprep.subr.bf16.mxu0 %v840
    %1379 = vmatpush2.bf16.msra.mxu0 %v839
    %1380 = vmatprep.subr.bf16.mxu0 %v832
    %1381 = vmatpush2.bf16.msra.mxu0 %v831
    %1382 = vmatprep.subr.bf16.mxu0 %v824
    %1383 = vmatpush2.bf16.msra.mxu0 %v823
    %1384 = vmatprep.subr.bf16.mxu0 %v816
    %1385 = vmatpush2.bf16.msra.mxu0 %v815
    %1386 = vmatprep.mubr.bf16.mxu0 %v894
    %1387 = vmatmul.mubr.bf16.gmra.mxu0 %v893
    %v1388 = vpop.f32.mrf.mxu0
    %v1389 = vadd.f32 %v1348, %v1388
    %v1390 = vpop.f32.mrf.mxu0
    %v1391 = vadd.f32 %v1350, %v1390
    %v1392 = vpop.f32.mrf.mxu0
    %v1393 = vpop.f32.mrf.mxu0
    %1394 = vdwg.mxu0
    %1395 = vmatprep.subr.bf16.mxu0 %v426
    %1396 = vmatpush1.bf16.msra.mxu0 %v425
    %1397 = vmatprep.subr.bf16.mxu0 %v418
    %1398 = vmatpush1.bf16.msra.mxu0 %v417
    %1399 = vmatprep.subr.bf16.mxu0 %v410
    %1400 = vmatpush1.bf16.msra.mxu0 %v409
    %1401 = vmatprep.subr.bf16.mxu0 %v402
    %1402 = vmatpush1.bf16.msra.mxu0 %v401
    %1403 = vmatprep.subr.bf16.mxu0 %v394
    %1404 = vmatpush1.bf16.msra.mxu0 %v393
    %1405 = vmatprep.subr.bf16.mxu0 %v386
    %1406 = vmatpush1.bf16.msra.mxu0 %v385
    %1407 = vmatprep.subr.bf16.mxu0 %v378
    %1408 = vmatpush1.bf16.msra.mxu0 %v377
    %1409 = vmatprep.subr.bf16.mxu0 %v370
    %1410 = vmatpush1.bf16.msra.mxu0 %v369
    %1411 = vmatprep.subr.bf16.mxu0 %v490
    %1412 = vmatpush2.bf16.msra.mxu0 %v489
    %1413 = vmatprep.subr.bf16.mxu0 %v482
    %1414 = vmatpush2.bf16.msra.mxu0 %v481
    %1415 = vmatprep.subr.bf16.mxu0 %v474
    %1416 = vmatpush2.bf16.msra.mxu0 %v473
    %1417 = vmatprep.subr.bf16.mxu0 %v466
    %1418 = vmatpush2.bf16.msra.mxu0 %v465
    %1419 = vmatprep.subr.bf16.mxu0 %v458
    %1420 = vmatpush2.bf16.msra.mxu0 %v457
    %1421 = vmatprep.subr.bf16.mxu0 %v450
    %1422 = vmatpush2.bf16.msra.mxu0 %v449
    %1423 = vmatprep.subr.bf16.mxu0 %v442
    %1424 = vmatpush2.bf16.msra.mxu0 %v441
    %1425 = vmatprep.subr.bf16.mxu0 %v434
    %1426 = vmatpush2.bf16.msra.mxu0 %v433
    %1427 = vmatprep.mubr.bf16.mxu0 %v888
    %1428 = vmatmul.mubr.bf16.gmra.mxu0 %v887
    %v1429 = vpop.f32.mrf.mxu0
    %v1430 = vadd.f32 0.0, %v1429
    %v1431 = vpop.f32.mrf.mxu0
    %v1432 = vadd.f32 0.0, %v1431
    %v1433 = vpop.f32.mrf.mxu0
    %v1434 = vpop.f32.mrf.mxu0
    %1435 = vdwg.mxu0
    %1436 = vmatprep.subr.bf16.mxu0 %v554
    %1437 = vmatpush1.bf16.msra.mxu0 %v553
    %1438 = vmatprep.subr.bf16.mxu0 %v546
    %1439 = vmatpush1.bf16.msra.mxu0 %v545
    %1440 = vmatprep.subr.bf16.mxu0 %v538
    %1441 = vmatpush1.bf16.msra.mxu0 %v537
    %1442 = vmatprep.subr.bf16.mxu0 %v530
    %1443 = vmatpush1.bf16.msra.mxu0 %v529
    %1444 = vmatprep.subr.bf16.mxu0 %v522
    %1445 = vmatpush1.bf16.msra.mxu0 %v521
    %1446 = vmatprep.subr.bf16.mxu0 %v514
    %1447 = vmatpush1.bf16.msra.mxu0 %v513
    %1448 = vmatprep.subr.bf16.mxu0 %v506
    %1449 = vmatpush1.bf16.msra.mxu0 %v505
    %1450 = vmatprep.subr.bf16.mxu0 %v498
    %1451 = vmatpush1.bf16.msra.mxu0 %v497
    %1452 = vmatprep.subr.bf16.mxu0 %v618
    %1453 = vmatpush2.bf16.msra.mxu0 %v617
    %1454 = vmatprep.subr.bf16.mxu0 %v610
    %1455 = vmatpush2.bf16.msra.mxu0 %v609
    %1456 = vmatprep.subr.bf16.mxu0 %v602
    %1457 = vmatpush2.bf16.msra.mxu0 %v601
    %1458 = vmatprep.subr.bf16.mxu0 %v594
    %1459 = vmatpush2.bf16.msra.mxu0 %v593
    %1460 = vmatprep.subr.bf16.mxu0 %v586
    %1461 = vmatpush2.bf16.msra.mxu0 %v585
    %1462 = vmatprep.subr.bf16.mxu0 %v578
    %1463 = vmatpush2.bf16.msra.mxu0 %v577
    %1464 = vmatprep.subr.bf16.mxu0 %v570
    %1465 = vmatpush2.bf16.msra.mxu0 %v569
    %1466 = vmatprep.subr.bf16.mxu0 %v562
    %1467 = vmatpush2.bf16.msra.mxu0 %v561
    %1468 = vmatprep.mubr.bf16.mxu0 %v890
    %1469 = vmatmul.mubr.bf16.gmra.mxu0 %v889
    %v1470 = vpop.f32.mrf.mxu0
    %v1471 = vadd.f32 %v1430, %v1470
    %v1472 = vpop.f32.mrf.mxu0
    %v1473 = vadd.f32 %v1432, %v1472
    %v1474 = vpop.f32.mrf.mxu0
    %v1475 = vpop.f32.mrf.mxu0
    %1476 = vdwg.mxu0
    %1477 = vmatprep.subr.bf16.mxu0 %v682
    %1478 = vmatpush1.bf16.msra.mxu0 %v681
    %1479 = vmatprep.subr.bf16.mxu0 %v674
    %1480 = vmatpush1.bf16.msra.mxu0 %v673
    %1481 = vmatprep.subr.bf16.mxu0 %v666
    %1482 = vmatpush1.bf16.msra.mxu0 %v665
    %1483 = vmatprep.subr.bf16.mxu0 %v658
    %1484 = vmatpush1.bf16.msra.mxu0 %v657
    %1485 = vmatprep.subr.bf16.mxu0 %v650
    %1486 = vmatpush1.bf16.msra.mxu0 %v649
    %1487 = vmatprep.subr.bf16.mxu0 %v642
    %1488 = vmatpush1.bf16.msra.mxu0 %v641
    %1489 = vmatprep.subr.bf16.mxu0 %v634
    %1490 = vmatpush1.bf16.msra.mxu0 %v633
    %1491 = vmatprep.subr.bf16.mxu0 %v626
    %1492 = vmatpush1.bf16.msra.mxu0 %v625
    %1493 = vmatprep.subr.bf16.mxu0 %v746
    %1494 = vmatpush2.bf16.msra.mxu0 %v745
    %1495 = vmatprep.subr.bf16.mxu0 %v738
    %1496 = vmatpush2.bf16.msra.mxu0 %v737
    %1497 = vmatprep.subr.bf16.mxu0 %v730
    %1498 = vmatpush2.bf16.msra.mxu0 %v729
    %1499 = vmatprep.subr.bf16.mxu0 %v722
    %1500 = vmatpush2.bf16.msra.mxu0 %v721
    %1501 = vmatprep.subr.bf16.mxu0 %v714
    %1502 = vmatpush2.bf16.msra.mxu0 %v713
    %1503 = vmatprep.subr.bf16.mxu0 %v706
    %1504 = vmatpush2.bf16.msra.mxu0 %v705
    %1505 = vmatprep.subr.bf16.mxu0 %v698
    %1506 = vmatpush2.bf16.msra.mxu0 %v697
    %1507 = vmatprep.subr.bf16.mxu0 %v690
    %1508 = vmatpush2.bf16.msra.mxu0 %v689
    %1509 = vmatprep.mubr.bf16.mxu0 %v892
    %1510 = vmatmul.mubr.bf16.gmra.mxu0 %v891
    %v1511 = vpop.f32.mrf.mxu0
    %v1512 = vadd.f32 %v1471, %v1511
    %v1513 = vpop.f32.mrf.mxu0
    %v1514 = vadd.f32 %v1473, %v1513
    %v1515 = vpop.f32.mrf.mxu0
    %v1516 = vpop.f32.mrf.mxu0
    %1517 = vdwg.mxu0
    %1518 = vmatprep.subr.bf16.mxu0 %v810
    %1519 = vmatpush1.bf16.msra.mxu0 %v809
    %1520 = vmatprep.subr.bf16.mxu0 %v802
    %1521 = vmatpush1.bf16.msra.mxu0 %v801
    %1522 = vmatprep.subr.bf16.mxu0 %v794
    %1523 = vmatpush1.bf16.msra.mxu0 %v793
    %1524 = vmatprep.subr.bf16.mxu0 %v786
    %1525 = vmatpush1.bf16.msra.mxu0 %v785
    %1526 = vmatprep.subr.bf16.mxu0 %v778
    %1527 = vmatpush1.bf16.msra.mxu0 %v777
    %1528 = vmatprep.subr.bf16.mxu0 %v770
    %1529 = vmatpush1.bf16.msra.mxu0 %v769
    %1530 = vmatprep.subr.bf16.mxu0 %v762
    %1531 = vmatpush1.bf16.msra.mxu0 %v761
    %1532 = vmatprep.subr.bf16.mxu0 %v754
    %1533 = vmatpush1.bf16.msra.mxu0 %v753
    %1534 = vmatprep.subr.bf16.mxu0 %v874
    %1535 = vmatpush2.bf16.msra.mxu0 %v873
    %1536 = vmatprep.subr.bf16.mxu0 %v866
    %1537 = vmatpush2.bf16.msra.mxu0 %v865
    %1538 = vmatprep.subr.bf16.mxu0 %v858
    %1539 = vmatpush2.bf16.msra.mxu0 %v857
    %1540 = vmatprep.subr.bf16.mxu0 %v850
    %1541 = vmatpush2.bf16.msra.mxu0 %v849
    %1542 = vmatprep.subr.bf16.mxu0 %v842
    %1543 = vmatpush2.bf16.msra.mxu0 %v841
    %1544 = vmatprep.subr.bf16.mxu0 %v834
    %1545 = vmatpush2.bf16.msra.mxu0 %v833
    %1546 = vmatprep.subr.bf16.mxu0 %v826
    %1547 = vmatpush2.bf16.msra.mxu0 %v825
    %1548 = vmatprep.subr.bf16.mxu0 %v818
    %1549 = vmatpush2.bf16.msra.mxu0 %v817
    %1550 = vmatprep.mubr.bf16.mxu0 %v894
    %1551 = vmatmul.mubr.bf16.gmra.mxu0 %v893
    %v1552 = vpop.f32.mrf.mxu0
    %v1553 = vadd.f32 %v1512, %v1552
    %v1554 = vpop.f32.mrf.mxu0
    %v1555 = vadd.f32 %v1514, %v1554
    %v1556 = vpop.f32.mrf.mxu0
    %v1557 = vpop.f32.mrf.mxu0
    %1558 = vdwg.mxu0
    %v1559 = vrot.slane %v1061, 4
    %v1560 = vadd.f32 %v1061, %v1559
    %v1561 = vrot.slane %v1560, 2
    %v1562 = vadd.f32 %v1560, %v1561
    %v1563 = vrot.slane %v1562, 1
    %v1564 = vadd.f32 %v1562, %v1563
    %v1565 = vrot.slane %v1063, 4
    %v1566 = vadd.f32 %v1063, %v1565
    %v1567 = vrot.slane %v1566, 2
    %v1568 = vadd.f32 %v1566, %v1567
    %v1569 = vrot.slane %v1568, 1
    %v1570 = vadd.f32 %v1568, %v1569
    %v1571 = vrot.slane %v1225, 4
    %v1572 = vadd.f32 %v1225, %v1571
    %v1573 = vrot.slane %v1572, 2
    %v1574 = vadd.f32 %v1572, %v1573
    %v1575 = vrot.slane %v1574, 1
    %v1576 = vadd.f32 %v1574, %v1575
    %v1577 = vrot.slane %v1227, 4
    %v1578 = vadd.f32 %v1227, %v1577
    %v1579 = vrot.slane %v1578, 2
    %v1580 = vadd.f32 %v1578, %v1579
    %v1581 = vrot.slane %v1580, 1
    %v1582 = vadd.f32 %v1580, %v1581
    %v1583 = vrot.slane %v1389, 4
    %v1584 = vadd.f32 %v1389, %v1583
    %v1585 = vrot.slane %v1584, 2
    %v1586 = vadd.f32 %v1584, %v1585
    %v1587 = vrot.slane %v1586, 1
    %v1588 = vadd.f32 %v1586, %v1587
    %v1589 = vrot.slane %v1391, 4
    %v1590 = vadd.f32 %v1391, %v1589
    %v1591 = vrot.slane %v1590, 2
    %v1592 = vadd.f32 %v1590, %v1591
    %v1593 = vrot.slane %v1592, 1
    %v1594 = vadd.f32 %v1592, %v1593
    %v1595 = vrot.slane %v1553, 4
    %v1596 = vadd.f32 %v1553, %v1595
    %v1597 = vrot.slane %v1596, 2
    %v1598 = vadd.f32 %v1596, %v1597
    %v1599 = vrot.slane %v1598, 1
    %v1600 = vadd.f32 %v1598, %v1599
    %v1601 = vrot.slane %v1555, 4
    %v1602 = vadd.f32 %v1555, %v1601
    %v1603 = vrot.slane %v1602, 2
    %v1604 = vadd.f32 %v1602, %v1603
    %v1605 = vrot.slane %v1604, 1
    %v1606 = vadd.f32 %v1604, %v1605
    %v1607 = vrcp.pop 8.0
    %v1608 = vmul.f32 %v1564, %v1607
    %v1609 = vmul.f32 %v1570, %v1607
    %v1610 = vmul.f32 %v1576, %v1607
    %v1611 = vmul.f32 %v1582, %v1607
    %v1612 = vmul.f32 %v1588, %v1607
    %v1613 = vmul.f32 %v1594, %v1607
    %v1614 = vmul.f32 %v1600, %v1607
    %v1615 = vmul.f32 %v1606, %v1607
    %v1616 = vsub.f32 %v1061, %v1608
    %v1617 = vsub.f32 %v1063, %v1609
    %v1618 = vsub.f32 %v1225, %v1610
    %v1619 = vsub.f32 %v1227, %v1611
    %v1620 = vsub.f32 %v1389, %v1612
    %v1621 = vsub.f32 %v1391, %v1613
    %v1622 = vsub.f32 %v1553, %v1614
    %v1623 = vsub.f32 %v1555, %v1615
    %v1624 = vmul.f32 %v1616, %v1616
    %v1625 = vmul.f32 %v1617, %v1617
    %v1626 = vmul.f32 %v1618, %v1618
    %v1627 = vmul.f32 %v1619, %v1619
    %v1628 = vmul.f32 %v1620, %v1620
    %v1629 = vmul.f32 %v1621, %v1621
    %v1630 = vmul.f32 %v1622, %v1622
    %v1631 = vmul.f32 %v1623, %v1623
    %v1632 = vrot.slane %v1624, 4
    %v1633 = vadd.f32 %v1624, %v1632
    %v1634 = vrot.slane %v1633, 2
    %v1635 = vadd.f32 %v1633, %v1634
    %v1636 = vrot.slane %v1635, 1
    %v1637 = vadd.f32 %v1635, %v1636
    %v1638 = vrot.slane %v1625, 4
    %v1639 = vadd.f32 %v1625, %v1638
    %v1640 = vrot.slane %v1639, 2
    %v1641 = vadd.f32 %v1639, %v1640
    %v1642 = vrot.slane %v1641, 1
    %v1643 = vadd.f32 %v1641, %v1642
    %v1644 = vrot.slane %v1626, 4
    %v1645 = vadd.f32 %v1626, %v1644
    %v1646 = vrot.slane %v1645, 2
    %v1647 = vadd.f32 %v1645, %v1646
    %v1648 = vrot.slane %v1647, 1
    %v1649 = vadd.f32 %v1647, %v1648
    %v1650 = vrot.slane %v1627, 4
    %v1651 = vadd.f32 %v1627, %v1650
    %v1652 = vrot.slane %v1651, 2
    %v1653 = vadd.f32 %v1651, %v1652
    %v1654 = vrot.slane %v1653, 1
    %v1655 = vadd.f32 %v1653, %v1654
    %v1656 = vrot.slane %v1628, 4
    %v1657 = vadd.f32 %v1628, %v1656
    %v1658 = vrot.slane %v1657, 2
    %v1659 = vadd.f32 %v1657, %v1658
    %v1660 = vrot.slane %v1659, 1
    %v1661 = vadd.f32 %v1659, %v1660
    %v1662 = vrot.slane %v1629, 4
    %v1663 = vadd.f32 %v1629, %v1662
    %v1664 = vrot.slane %v1663, 2
    %v1665 = vadd.f32 %v1663, %v1664
    %v1666 = vrot.slane %v1665, 1
    %v1667 = vadd.f32 %v1665, %v1666
    %v1668 = vrot.slane %v1630, 4
    %v1669 = vadd.f32 %v1630, %v1668
    %v1670 = vrot.slane %v1669, 2
    %v1671 = vadd.f32 %v1669, %v1670
    %v1672 = vrot.slane %v1671, 1
    %v1673 = vadd.f32 %v1671, %v1672
    %v1674 = vrot.slane %v1631, 4
    %v1675 = vadd.f32 %v1631, %v1674
    %v1676 = vrot.slane %v1675, 2
    %v1677 = vadd.f32 %v1675, %v1676
    %v1678 = vrot.slane %v1677, 1
    %v1679 = vadd.f32 %v1677, %v1678
    %v1680 = vmul.f32 %v1637, %v1607
    %v1681 = vmul.f32 %v1643, %v1607
    %v1682 = vmul.f32 %v1649, %v1607
    %v1683 = vmul.f32 %v1655, %v1607
    %v1684 = vmul.f32 %v1661, %v1607
    %v1685 = vmul.f32 %v1667, %v1607
    %v1686 = vmul.f32 %v1673, %v1607
    %v1687 = vmul.f32 %v1679, %v1607
    %v1688 = vmul.f32 %v96, %v96
    %v1689 = vmul.f32 %v97, %v97
    %v1690 = vmul.f32 %v98, %v98
    %v1691 = vmul.f32 %v99, %v99
    %v1692 = vmul.f32 %v100, %v100
    %v1693 = vmul.f32 %v101, %v101
    %v1694 = vmul.f32 %v102, %v102
    %v1695 = vmul.f32 %v103, %v103
    %v1696 = vmul.f32 %v1680, %v1688
    %v1697 = vmul.f32 %v1681, %v1689
    %v1698 = vmul.f32 %v1682, %v1690
    %v1699 = vmul.f32 %v1683, %v1691
    %v1700 = vmul.f32 %v1684, %v1692
    %v1701 = vmul.f32 %v1685, %v1693
    %v1702 = vmul.f32 %v1686, %v1694
    %v1703 = vmul.f32 %v1687, %v1695
    %v1704 = vadd.f32 %v1696, 1e-05
    %v1705 = vadd.f32 %v1697, 1e-05
    %v1706 = vadd.f32 %v1698, 1e-05
    %v1707 = vadd.f32 %v1699, 1e-05
    %v1708 = vadd.f32 %v1700, 1e-05
    %v1709 = vadd.f32 %v1701, 1e-05
    %v1710 = vadd.f32 %v1702, 1e-05
    %v1711 = vadd.f32 %v1703, 1e-05
    %v1712 = vrsqrt.pop %v1704
    %v1713 = vrsqrt.pop %v1705
    %v1714 = vrsqrt.pop %v1706
    %v1715 = vrsqrt.pop %v1707
    %v1716 = vrsqrt.pop %v1708
    %v1717 = vrsqrt.pop %v1709
    %v1718 = vrsqrt.pop %v1710
    %v1719 = vrsqrt.pop %v1711
    %v1728 = vrot.slane %v1712, 4
    %v1729 = vrot.slane %v1713, 4
    %v1730 = vrot.slane %v1714, 4
    %v1731 = vrot.slane %v1715, 4
    %v1732 = vrot.slane %v1716, 4
    %v1733 = vrot.slane %v1717, 4
    %v1734 = vrot.slane %v1718, 4
    %v1735 = vrot.slane %v1719, 4
    %v1744 = vmul.f32 %v96, %v1728
    %v1745 = vmul.f32 %v97, %v1729
    %v1746 = vmul.f32 %v98, %v1730
    %v1747 = vmul.f32 %v99, %v1731
    %v1748 = vmul.f32 %v100, %v1732
    %v1749 = vmul.f32 %v101, %v1733
    %v1750 = vmul.f32 %v102, %v1734
    %v1751 = vmul.f32 %v103, %v1735
    %v1760 = vrot.slane %v1744, 4
    %v1761 = vrot.slane %v1745, 4
    %v1762 = vrot.slane %v1746, 4
    %v1763 = vrot.slane %v1747, 4
    %v1764 = vrot.slane %v1748, 4
    %v1765 = vrot.slane %v1749, 4
    %v1766 = vrot.slane %v1750, 4
    %v1767 = vrot.slane %v1751, 4
    %v1776 = vmul.f32 %v96, %v1760
    %v1777 = vmul.f32 %v97, %v1761
    %v1778 = vmul.f32 %v98, %v1762
    %v1779 = vmul.f32 %v99, %v1763
    %v1780 = vmul.f32 %v100, %v1764
    %v1781 = vmul.f32 %v101, %v1765
    %v1782 = vmul.f32 %v102, %v1766
    %v1783 = vmul.f32 %v103, %v1767
    %v1784 = vlaneseq
    %v1785 = vshrl.u32 %v1784, 7
    %v1786 = vsub.s32 4, %v1785
    %v1787 = vrot.slane %v1776, %v1786
    %v1788 = vlaneseq
    %v1789 = vshrl.u32 %v1788, 7
    %v1790 = vsub.s32 4, %v1789
    %v1791 = vrot.slane %v1777, %v1790
    %v1792 = vlaneseq
    %v1793 = vshrl.u32 %v1792, 7
    %v1794 = vsub.s32 4, %v1793
    %v1795 = vrot.slane %v1778, %v1794
    %v1796 = vlaneseq
    %v1797 = vshrl.u32 %v1796, 7
    %v1798 = vsub.s32 4, %v1797
    %v1799 = vrot.slane %v1779, %v1798
    %v1800 = vlaneseq
    %v1801 = vshrl.u32 %v1800, 7
    %v1802 = vsub.s32 4, %v1801
    %v1803 = vrot.slane %v1780, %v1802
    %v1804 = vlaneseq
    %v1805 = vshrl.u32 %v1804, 7
    %v1806 = vsub.s32 4, %v1805
    %v1807 = vrot.slane %v1781, %v1806
    %v1808 = vlaneseq
    %v1809 = vshrl.u32 %v1808, 7
    %v1810 = vsub.s32 4, %v1809
    %v1811 = vrot.slane %v1782, %v1810
    %v1812 = vlaneseq
    %v1813 = vshrl.u32 %v1812, 7
    %v1814 = vsub.s32 4, %v1813
    %v1815 = vrot.slane %v1783, %v1814
    %v1816 = vmul.f32 %v1061, %v1787
    %v1817 = vmul.f32 %v1063, %v1791
    %v1818 = vmul.f32 %v1225, %v1795
    %v1819 = vmul.f32 %v1227, %v1799
    %v1820 = vmul.f32 %v1389, %v1803
    %v1821 = vmul.f32 %v1391, %v1807
    %v1822 = vmul.f32 %v1553, %v1811
    %v1823 = vmul.f32 %v1555, %v1815
    %v1824 = vmul.f32 %v1608, %v1776
    %v1825 = vmul.f32 %v1609, %v1777
    %v1826 = vmul.f32 %v1610, %v1778
    %v1827 = vmul.f32 %v1611, %v1779
    %v1828 = vmul.f32 %v1612, %v1780
    %v1829 = vmul.f32 %v1613, %v1781
    %v1830 = vmul.f32 %v1614, %v1782
    %v1831 = vmul.f32 %v1615, %v1783
    %v1840 = vrot.slane %v1824, 3
    %v1841 = vrot.slane %v1825, 3
    %v1842 = vrot.slane %v1826, 3
    %v1843 = vrot.slane %v1827, 3
    %v1844 = vrot.slane %v1828, 3
    %v1845 = vrot.slane %v1829, 3
    %v1846 = vrot.slane %v1830, 3
    %v1847 = vrot.slane %v1831, 3
    %v1856 = vsub.f32 %v96, %v1840
    %v1857 = vsub.f32 %v97, %v1841
    %v1858 = vsub.f32 %v98, %v1842
    %v1859 = vsub.f32 %v99, %v1843
    %v1860 = vsub.f32 %v100, %v1844
    %v1861 = vsub.f32 %v101, %v1845
    %v1862 = vsub.f32 %v102, %v1846
    %v1863 = vsub.f32 %v103, %v1847
    %v1864 = vlaneseq
    %v1865 = vshrl.u32 %v1864, 7
    %v1866 = vsub.s32 1, %v1865
    %v1867 = vrot.slane %v1856, %v1866
    %v1868 = vlaneseq
    %v1869 = vshrl.u32 %v1868, 7
    %v1870 = vsub.s32 1, %v1869
    %v1871 = vrot.slane %v1857, %v1870
    %v1872 = vlaneseq
    %v1873 = vshrl.u32 %v1872, 7
    %v1874 = vsub.s32 1, %v1873
    %v1875 = vrot.slane %v1858, %v1874
    %v1876 = vlaneseq
    %v1877 = vshrl.u32 %v1876, 7
    %v1878 = vsub.s32 1, %v1877
    %v1879 = vrot.slane %v1859, %v1878
    %v1880 = vlaneseq
    %v1881 = vshrl.u32 %v1880, 7
    %v1882 = vsub.s32 1, %v1881
    %v1883 = vrot.slane %v1860, %v1882
    %v1884 = vlaneseq
    %v1885 = vshrl.u32 %v1884, 7
    %v1886 = vsub.s32 1, %v1885
    %v1887 = vrot.slane %v1861, %v1886
    %v1888 = vlaneseq
    %v1889 = vshrl.u32 %v1888, 7
    %v1890 = vsub.s32 1, %v1889
    %v1891 = vrot.slane %v1862, %v1890
    %v1892 = vlaneseq
    %v1893 = vshrl.u32 %v1892, 7
    %v1894 = vsub.s32 1, %v1893
    %v1895 = vrot.slane %v1863, %v1894
    %v1896 = vadd.f32 %v1816, %v1867
    %v1897 = vadd.f32 %v1817, %v1871
    %v1898 = vadd.f32 %v1818, %v1875
    %v1899 = vadd.f32 %v1819, %v1879
    %v1900 = vadd.f32 %v1820, %v1883
    %v1901 = vadd.f32 %v1821, %v1887
    %v1902 = vadd.f32 %v1822, %v1891
    %v1903 = vadd.f32 %v1823, %v1895
    %v1904 = vmax.f32 %v1896, 0.0
    %v1905 = vmax.f32 %v1897, 0.0
    %v1906 = vmax.f32 %v1898, 0.0
    %v1907 = vmax.f32 %v1899, 0.0
    %v1908 = vmax.f32 %v1900, 0.0
    %v1909 = vmax.f32 %v1901, 0.0
    %v1910 = vmax.f32 %v1902, 0.0
    %v1911 = vmax.f32 %v1903, 0.0
    %s1912 = smul.u32 2, 128
    %s1913 = smul.u32 %s1912, 8
    %s1914 = sshll.u32 %s1913, 4
    %1915 = dma.done [#allocation4], %s1914
    %v1916 = vpack.c.bf16 %v1904, %v1904
    %v1917 = vpack.c.bf16 %v1905, %v1905
    %v1918 = vpack.c.bf16 %v1906, %v1906
    %v1919 = vpack.c.bf16 %v1907, %v1907
    %v1920 = vpack.c.bf16 %v1908, %v1908
    %v1921 = vpack.c.bf16 %v1909, %v1909
    %v1922 = vpack.c.bf16 %v1910, %v1910
    %v1923 = vpack.c.bf16 %v1911, %v1911
    %v1924 = vld [vmem:[#allocation2] sm:$0xff]
    %v1925 = vld [vmem:[#allocation2 + $0x8] sm:$0xff]
    %v1926 = vld [vmem:[#allocation2 + $0x10] sm:$0xff]
    %v1927 = vld [vmem:[#allocation2 + $0x18] sm:$0xff]
    %v1928 = vld [vmem:[#allocation2 + $0x20] sm:$0xff]
    %v1929 = vld [vmem:[#allocation2 + $0x28] sm:$0xff]
    %v1930 = vld [vmem:[#allocation2 + $0x30] sm:$0xff]
    %v1931 = vld [vmem:[#allocation2 + $0x38] sm:$0xff]
    %v1932 = vld [vmem:[#allocation2 + $0x40] sm:$0xff]
    %v1933 = vld [vmem:[#allocation2 + $0x48] sm:$0xff]
    %v1934 = vld [vmem:[#allocation2 + $0x50] sm:$0xff]
    %v1935 = vld [vmem:[#allocation2 + $0x58] sm:$0xff]
    %v1936 = vld [vmem:[#allocation2 + $0x60] sm:$0xff]
    %v1937 = vld [vmem:[#allocation2 + $0x68] sm:$0xff]
    %v1938 = vld [vmem:[#allocation2 + $0x70] sm:$0xff]
    %v1939 = vld [vmem:[#allocation2 + $0x78] sm:$0xff]
    %v1940 = vld [vmem:[#allocation2 + $0x80] sm:$0xff]
    %v1941 = vld [vmem:[#allocation2 + $0x88] sm:$0xff]
    %v1942 = vld [vmem:[#allocation2 + $0x90] sm:$0xff]
    %v1943 = vld [vmem:[#allocation2 + $0x98] sm:$0xff]
    %v1944 = vld [vmem:[#allocation2 + $0xa0] sm:$0xff]
    %v1945 = vld [vmem:[#allocation2 + $0xa8] sm:$0xff]
    %v1946 = vld [vmem:[#allocation2 + $0xb0] sm:$0xff]
    %v1947 = vld [vmem:[#allocation2 + $0xb8] sm:$0xff]
    %v1948 = vld [vmem:[#allocation2 + $0xc0] sm:$0xff]
    %v1949 = vld [vmem:[#allocation2 + $0xc8] sm:$0xff]
    %v1950 = vld [vmem:[#allocation2 + $0xd0] sm:$0xff]
    %v1951 = vld [vmem:[#allocation2 + $0xd8] sm:$0xff]
    %v1952 = vld [vmem:[#allocation2 + $0xe0] sm:$0xff]
    %v1953 = vld [vmem:[#allocation2 + $0xe8] sm:$0xff]
    %v1954 = vld [vmem:[#allocation2 + $0xf0] sm:$0xff]
    %v1955 = vld [vmem:[#allocation2 + $0xf8] sm:$0xff]
    %v1956 = vld [vmem:[#allocation2 + $0x100] sm:$0xff]
    %v1957 = vld [vmem:[#allocation2 + $0x108] sm:$0xff]
    %v1958 = vld [vmem:[#allocation2 + $0x110] sm:$0xff]
    %v1959 = vld [vmem:[#allocation2 + $0x118] sm:$0xff]
    %v1960 = vld [vmem:[#allocation2 + $0x120] sm:$0xff]
    %v1961 = vld [vmem:[#allocation2 + $0x128] sm:$0xff]
    %v1962 = vld [vmem:[#allocation2 + $0x130] sm:$0xff]
    %v1963 = vld [vmem:[#allocation2 + $0x138] sm:$0xff]
    %v1964 = vld [vmem:[#allocation2 + $0x140] sm:$0xff]
    %v1965 = vld [vmem:[#allocation2 + $0x148] sm:$0xff]
    %v1966 = vld [vmem:[#allocation2 + $0x150] sm:$0xff]
    %v1967 = vld [vmem:[#allocation2 + $0x158] sm:$0xff]
    %v1968 = vld [vmem:[#allocation2 + $0x160] sm:$0xff]
    %v1969 = vld [vmem:[#allocation2 + $0x168] sm:$0xff]
    %v1970 = vld [vmem:[#allocation2 + $0x170] sm:$0xff]
    %v1971 = vld [vmem:[#allocation2 + $0x178] sm:$0xff]
    %v1972 = vld [vmem:[#allocation2 + $0x180] sm:$0xff]
    %v1973 = vld [vmem:[#allocation2 + $0x188] sm:$0xff]
    %v1974 = vld [vmem:[#allocation2 + $0x190] sm:$0xff]
    %v1975 = vld [vmem:[#allocation2 + $0x198] sm:$0xff]
    %v1976 = vld [vmem:[#allocation2 + $0x1a0] sm:$0xff]
    %v1977 = vld [vmem:[#allocation2 + $0x1a8] sm:$0xff]
    %v1978 = vld [vmem:[#allocation2 + $0x1b0] sm:$0xff]
    %v1979 = vld [vmem:[#allocation2 + $0x1b8] sm:$0xff]
    %v1980 = vld [vmem:[#allocation2 + $0x1c0] sm:$0xff]
    %v1981 = vld [vmem:[#allocation2 + $0x1c8] sm:$0xff]
    %v1982 = vld [vmem:[#allocation2 + $0x1d0] sm:$0xff]
    %v1983 = vld [vmem:[#allocation2 + $0x1d8] sm:$0xff]
    %v1984 = vld [vmem:[#allocation2 + $0x1e0] sm:$0xff]
    %v1985 = vld [vmem:[#allocation2 + $0x1e8] sm:$0xff]
    %v1986 = vld [vmem:[#allocation2 + $0x1f0] sm:$0xff]
    %v1987 = vld [vmem:[#allocation2 + $0x1f8] sm:$0xff]
    %v1988 = vld [vmem:[#allocation2 + $0x200] sm:$0xff]
    %v1989 = vld [vmem:[#allocation2 + $0x208] sm:$0xff]
    %v1990 = vld [vmem:[#allocation2 + $0x210] sm:$0xff]
    %v1991 = vld [vmem:[#allocation2 + $0x218] sm:$0xff]
    %v1992 = vld [vmem:[#allocation2 + $0x220] sm:$0xff]
    %v1993 = vld [vmem:[#allocation2 + $0x228] sm:$0xff]
    %v1994 = vld [vmem:[#allocation2 + $0x230] sm:$0xff]
    %v1995 = vld [vmem:[#allocation2 + $0x238] sm:$0xff]
    %v1996 = vld [vmem:[#allocation2 + $0x240] sm:$0xff]
    %v1997 = vld [vmem:[#allocation2 + $0x248] sm:$0xff]
    %v1998 = vld [vmem:[#allocation2 + $0x250] sm:$0xff]
    %v1999 = vld [vmem:[#allocation2 + $0x258] sm:$0xff]
    %v2000 = vld [vmem:[#allocation2 + $0x260] sm:$0xff]
    %v2001 = vld [vmem:[#allocation2 + $0x268] sm:$0xff]
    %v2002 = vld [vmem:[#allocation2 + $0x270] sm:$0xff]
    %v2003 = vld [vmem:[#allocation2 + $0x278] sm:$0xff]
    %v2004 = vld [vmem:[#allocation2 + $0x280] sm:$0xff]
    %v2005 = vld [vmem:[#allocation2 + $0x288] sm:$0xff]
    %v2006 = vld [vmem:[#allocation2 + $0x290] sm:$0xff]
    %v2007 = vld [vmem:[#allocation2 + $0x298] sm:$0xff]
    %v2008 = vld [vmem:[#allocation2 + $0x2a0] sm:$0xff]
    %v2009 = vld [vmem:[#allocation2 + $0x2a8] sm:$0xff]
    %v2010 = vld [vmem:[#allocation2 + $0x2b0] sm:$0xff]
    %v2011 = vld [vmem:[#allocation2 + $0x2b8] sm:$0xff]
    %v2012 = vld [vmem:[#allocation2 + $0x2c0] sm:$0xff]
    %v2013 = vld [vmem:[#allocation2 + $0x2c8] sm:$0xff]
    %v2014 = vld [vmem:[#allocation2 + $0x2d0] sm:$0xff]
    %v2015 = vld [vmem:[#allocation2 + $0x2d8] sm:$0xff]
    %v2016 = vld [vmem:[#allocation2 + $0x2e0] sm:$0xff]
    %v2017 = vld [vmem:[#allocation2 + $0x2e8] sm:$0xff]
    %v2018 = vld [vmem:[#allocation2 + $0x2f0] sm:$0xff]
    %v2019 = vld [vmem:[#allocation2 + $0x2f8] sm:$0xff]
    %v2020 = vld [vmem:[#allocation2 + $0x300] sm:$0xff]
    %v2021 = vld [vmem:[#allocation2 + $0x308] sm:$0xff]
    %v2022 = vld [vmem:[#allocation2 + $0x310] sm:$0xff]
    %v2023 = vld [vmem:[#allocation2 + $0x318] sm:$0xff]
    %v2024 = vld [vmem:[#allocation2 + $0x320] sm:$0xff]
    %v2025 = vld [vmem:[#allocation2 + $0x328] sm:$0xff]
    %v2026 = vld [vmem:[#allocation2 + $0x330] sm:$0xff]
    %v2027 = vld [vmem:[#allocation2 + $0x338] sm:$0xff]
    %v2028 = vld [vmem:[#allocation2 + $0x340] sm:$0xff]
    %v2029 = vld [vmem:[#allocation2 + $0x348] sm:$0xff]
    %v2030 = vld [vmem:[#allocation2 + $0x350] sm:$0xff]
    %v2031 = vld [vmem:[#allocation2 + $0x358] sm:$0xff]
    %v2032 = vld [vmem:[#allocation2 + $0x360] sm:$0xff]
    %v2033 = vld [vmem:[#allocation2 + $0x368] sm:$0xff]
    %v2034 = vld [vmem:[#allocation2 + $0x370] sm:$0xff]
    %v2035 = vld [vmem:[#allocation2 + $0x378] sm:$0xff]
    %v2036 = vld [vmem:[#allocation2 + $0x380] sm:$0xff]
    %v2037 = vld [vmem:[#allocation2 + $0x388] sm:$0xff]
    %v2038 = vld [vmem:[#allocation2 + $0x390] sm:$0xff]
    %v2039 = vld [vmem:[#allocation2 + $0x398] sm:$0xff]
    %v2040 = vld [vmem:[#allocation2 + $0x3a0] sm:$0xff]
    %v2041 = vld [vmem:[#allocation2 + $0x3a8] sm:$0xff]
    %v2042 = vld [vmem:[#allocation2 + $0x3b0] sm:$0xff]
    %v2043 = vld [vmem:[#allocation2 + $0x3b8] sm:$0xff]
    %v2044 = vld [vmem:[#allocation2 + $0x3c0] sm:$0xff]
    %v2045 = vld [vmem:[#allocation2 + $0x3c8] sm:$0xff]
    %v2046 = vld [vmem:[#allocation2 + $0x3d0] sm:$0xff]
    %v2047 = vld [vmem:[#allocation2 + $0x3d8] sm:$0xff]
    %v2048 = vld [vmem:[#allocation2 + $0x3e0] sm:$0xff]
    %v2049 = vld [vmem:[#allocation2 + $0x3e8] sm:$0xff]
    %v2050 = vld [vmem:[#allocation2 + $0x3f0] sm:$0xff]
    %v2051 = vld [vmem:[#allocation2 + $0x3f8] sm:$0xff]
    %v2052 = vld [vmem:[#allocation2 + $0x400] sm:$0xff]
    %v2053 = vld [vmem:[#allocation2 + $0x408] sm:$0xff]
    %v2054 = vld [vmem:[#allocation2 + $0x410] sm:$0xff]
    %v2055 = vld [vmem:[#allocation2 + $0x418] sm:$0xff]
    %v2056 = vld [vmem:[#allocation2 + $0x420] sm:$0xff]
    %v2057 = vld [vmem:[#allocation2 + $0x428] sm:$0xff]
    %v2058 = vld [vmem:[#allocation2 + $0x430] sm:$0xff]
    %v2059 = vld [vmem:[#allocation2 + $0x438] sm:$0xff]
    %v2060 = vld [vmem:[#allocation2 + $0x440] sm:$0xff]
    %v2061 = vld [vmem:[#allocation2 + $0x448] sm:$0xff]
    %v2062 = vld [vmem:[#allocation2 + $0x450] sm:$0xff]
    %v2063 = vld [vmem:[#allocation2 + $0x458] sm:$0xff]
    %v2064 = vld [vmem:[#allocation2 + $0x460] sm:$0xff]
    %v2065 = vld [vmem:[#allocation2 + $0x468] sm:$0xff]
    %v2066 = vld [vmem:[#allocation2 + $0x470] sm:$0xff]
    %v2067 = vld [vmem:[#allocation2 + $0x478] sm:$0xff]
    %v2068 = vld [vmem:[#allocation2 + $0x480] sm:$0xff]
    %v2069 = vld [vmem:[#allocation2 + $0x488] sm:$0xff]
    %v2070 = vld [vmem:[#allocation2 + $0x490] sm:$0xff]
    %v2071 = vld [vmem:[#allocation2 + $0x498] sm:$0xff]
    %v2072 = vld [vmem:[#allocation2 + $0x4a0] sm:$0xff]
    %v2073 = vld [vmem:[#allocation2 + $0x4a8] sm:$0xff]
    %v2074 = vld [vmem:[#allocation2 + $0x4b0] sm:$0xff]
    %v2075 = vld [vmem:[#allocation2 + $0x4b8] sm:$0xff]
    %v2076 = vld [vmem:[#allocation2 + $0x4c0] sm:$0xff]
    %v2077 = vld [vmem:[#allocation2 + $0x4c8] sm:$0xff]
    %v2078 = vld [vmem:[#allocation2 + $0x4d0] sm:$0xff]
    %v2079 = vld [vmem:[#allocation2 + $0x4d8] sm:$0xff]
    %v2080 = vld [vmem:[#allocation2 + $0x4e0] sm:$0xff]
    %v2081 = vld [vmem:[#allocation2 + $0x4e8] sm:$0xff]
    %v2082 = vld [vmem:[#allocation2 + $0x4f0] sm:$0xff]
    %v2083 = vld [vmem:[#allocation2 + $0x4f8] sm:$0xff]
    %v2084 = vld [vmem:[#allocation2 + $0x500] sm:$0xff]
    %v2085 = vld [vmem:[#allocation2 + $0x508] sm:$0xff]
    %v2086 = vld [vmem:[#allocation2 + $0x510] sm:$0xff]
    %v2087 = vld [vmem:[#allocation2 + $0x518] sm:$0xff]
    %v2088 = vld [vmem:[#allocation2 + $0x520] sm:$0xff]
    %v2089 = vld [vmem:[#allocation2 + $0x528] sm:$0xff]
    %v2090 = vld [vmem:[#allocation2 + $0x530] sm:$0xff]
    %v2091 = vld [vmem:[#allocation2 + $0x538] sm:$0xff]
    %v2092 = vld [vmem:[#allocation2 + $0x540] sm:$0xff]
    %v2093 = vld [vmem:[#allocation2 + $0x548] sm:$0xff]
    %v2094 = vld [vmem:[#allocation2 + $0x550] sm:$0xff]
    %v2095 = vld [vmem:[#allocation2 + $0x558] sm:$0xff]
    %v2096 = vld [vmem:[#allocation2 + $0x560] sm:$0xff]
    %v2097 = vld [vmem:[#allocation2 + $0x568] sm:$0xff]
    %v2098 = vld [vmem:[#allocation2 + $0x570] sm:$0xff]
    %v2099 = vld [vmem:[#allocation2 + $0x578] sm:$0xff]
    %v2100 = vld [vmem:[#allocation2 + $0x580] sm:$0xff]
    %v2101 = vld [vmem:[#allocation2 + $0x588] sm:$0xff]
    %v2102 = vld [vmem:[#allocation2 + $0x590] sm:$0xff]
    %v2103 = vld [vmem:[#allocation2 + $0x598] sm:$0xff]
    %v2104 = vld [vmem:[#allocation2 + $0x5a0] sm:$0xff]
    %v2105 = vld [vmem:[#allocation2 + $0x5a8] sm:$0xff]
    %v2106 = vld [vmem:[#allocation2 + $0x5b0] sm:$0xff]
    %v2107 = vld [vmem:[#allocation2 + $0x5b8] sm:$0xff]
    %v2108 = vld [vmem:[#allocation2 + $0x5c0] sm:$0xff]
    %v2109 = vld [vmem:[#allocation2 + $0x5c8] sm:$0xff]
    %v2110 = vld [vmem:[#allocation2 + $0x5d0] sm:$0xff]
    %v2111 = vld [vmem:[#allocation2 + $0x5d8] sm:$0xff]
    %v2112 = vld [vmem:[#allocation2 + $0x5e0] sm:$0xff]
    %v2113 = vld [vmem:[#allocation2 + $0x5e8] sm:$0xff]
    %v2114 = vld [vmem:[#allocation2 + $0x5f0] sm:$0xff]
    %v2115 = vld [vmem:[#allocation2 + $0x5f8] sm:$0xff]
    %v2116 = vld [vmem:[#allocation2 + $0x600] sm:$0xff]
    %v2117 = vld [vmem:[#allocation2 + $0x608] sm:$0xff]
    %v2118 = vld [vmem:[#allocation2 + $0x610] sm:$0xff]
    %v2119 = vld [vmem:[#allocation2 + $0x618] sm:$0xff]
    %v2120 = vld [vmem:[#allocation2 + $0x620] sm:$0xff]
    %v2121 = vld [vmem:[#allocation2 + $0x628] sm:$0xff]
    %v2122 = vld [vmem:[#allocation2 + $0x630] sm:$0xff]
    %v2123 = vld [vmem:[#allocation2 + $0x638] sm:$0xff]
    %v2124 = vld [vmem:[#allocation2 + $0x640] sm:$0xff]
    %v2125 = vld [vmem:[#allocation2 + $0x648] sm:$0xff]
    %v2126 = vld [vmem:[#allocation2 + $0x650] sm:$0xff]
    %v2127 = vld [vmem:[#allocation2 + $0x658] sm:$0xff]
    %v2128 = vld [vmem:[#allocation2 + $0x660] sm:$0xff]
    %v2129 = vld [vmem:[#allocation2 + $0x668] sm:$0xff]
    %v2130 = vld [vmem:[#allocation2 + $0x670] sm:$0xff]
    %v2131 = vld [vmem:[#allocation2 + $0x678] sm:$0xff]
    %v2132 = vld [vmem:[#allocation2 + $0x680] sm:$0xff]
    %v2133 = vld [vmem:[#allocation2 + $0x688] sm:$0xff]
    %v2134 = vld [vmem:[#allocation2 + $0x690] sm:$0xff]
    %v2135 = vld [vmem:[#allocation2 + $0x698] sm:$0xff]
    %v2136 = vld [vmem:[#allocation2 + $0x6a0] sm:$0xff]
    %v2137 = vld [vmem:[#allocation2 + $0x6a8] sm:$0xff]
    %v2138 = vld [vmem:[#allocation2 + $0x6b0] sm:$0xff]
    %v2139 = vld [vmem:[#allocation2 + $0x6b8] sm:$0xff]
    %v2140 = vld [vmem:[#allocation2 + $0x6c0] sm:$0xff]
    %v2141 = vld [vmem:[#allocation2 + $0x6c8] sm:$0xff]
    %v2142 = vld [vmem:[#allocation2 + $0x6d0] sm:$0xff]
    %v2143 = vld [vmem:[#allocation2 + $0x6d8] sm:$0xff]
    %v2144 = vld [vmem:[#allocation2 + $0x6e0] sm:$0xff]
    %v2145 = vld [vmem:[#allocation2 + $0x6e8] sm:$0xff]
    %v2146 = vld [vmem:[#allocation2 + $0x6f0] sm:$0xff]
    %v2147 = vld [vmem:[#allocation2 + $0x6f8] sm:$0xff]
    %v2148 = vld [vmem:[#allocation2 + $0x700] sm:$0xff]
    %v2149 = vld [vmem:[#allocation2 + $0x708] sm:$0xff]
    %v2150 = vld [vmem:[#allocation2 + $0x710] sm:$0xff]
    %v2151 = vld [vmem:[#allocation2 + $0x718] sm:$0xff]
    %v2152 = vld [vmem:[#allocation2 + $0x720] sm:$0xff]
    %v2153 = vld [vmem:[#allocation2 + $0x728] sm:$0xff]
    %v2154 = vld [vmem:[#allocation2 + $0x730] sm:$0xff]
    %v2155 = vld [vmem:[#allocation2 + $0x738] sm:$0xff]
    %v2156 = vld [vmem:[#allocation2 + $0x740] sm:$0xff]
    %v2157 = vld [vmem:[#allocation2 + $0x748] sm:$0xff]
    %v2158 = vld [vmem:[#allocation2 + $0x750] sm:$0xff]
    %v2159 = vld [vmem:[#allocation2 + $0x758] sm:$0xff]
    %v2160 = vld [vmem:[#allocation2 + $0x760] sm:$0xff]
    %v2161 = vld [vmem:[#allocation2 + $0x768] sm:$0xff]
    %v2162 = vld [vmem:[#allocation2 + $0x770] sm:$0xff]
    %v2163 = vld [vmem:[#allocation2 + $0x778] sm:$0xff]
    %v2164 = vld [vmem:[#allocation2 + $0x780] sm:$0xff]
    %v2165 = vld [vmem:[#allocation2 + $0x788] sm:$0xff]
    %v2166 = vld [vmem:[#allocation2 + $0x790] sm:$0xff]
    %v2167 = vld [vmem:[#allocation2 + $0x798] sm:$0xff]
    %v2168 = vld [vmem:[#allocation2 + $0x7a0] sm:$0xff]
    %v2169 = vld [vmem:[#allocation2 + $0x7a8] sm:$0xff]
    %v2170 = vld [vmem:[#allocation2 + $0x7b0] sm:$0xff]
    %v2171 = vld [vmem:[#allocation2 + $0x7b8] sm:$0xff]
    %v2172 = vld [vmem:[#allocation2 + $0x7c0] sm:$0xff]
    %v2173 = vld [vmem:[#allocation2 + $0x7c8] sm:$0xff]
    %v2174 = vld [vmem:[#allocation2 + $0x7d0] sm:$0xff]
    %v2175 = vld [vmem:[#allocation2 + $0x7d8] sm:$0xff]
    %v2176 = vld [vmem:[#allocation2 + $0x7e0] sm:$0xff]
    %v2177 = vld [vmem:[#allocation2 + $0x7e8] sm:$0xff]
    %v2178 = vld [vmem:[#allocation2 + $0x7f0] sm:$0xff]
    %v2179 = vld [vmem:[#allocation2 + $0x7f8] sm:$0xff]
    %v2180 = vunpack.c.l.s8.bf16 %v1924
    %v2181 = vunpack.c.l.s8.bf16 %v1925
    %v2182 = vunpack.c.l.s8.bf16 %v1926
    %v2183 = vunpack.c.l.s8.bf16 %v1927
    %v2184 = vunpack.c.l.s8.bf16 %v1928
    %v2185 = vunpack.c.l.s8.bf16 %v1929
    %v2186 = vunpack.c.l.s8.bf16 %v1930
    %v2187 = vunpack.c.l.s8.bf16 %v1931
    %v2188 = vunpack.c.h.s8.bf16 %v1924
    %v2189 = vunpack.c.h.s8.bf16 %v1925
    %v2190 = vunpack.c.h.s8.bf16 %v1926
    %v2191 = vunpack.c.h.s8.bf16 %v1927
    %v2192 = vunpack.c.h.s8.bf16 %v1928
    %v2193 = vunpack.c.h.s8.bf16 %v1929
    %v2194 = vunpack.c.h.s8.bf16 %v1930
    %v2195 = vunpack.c.h.s8.bf16 %v1931
    %v2196 = vunpack.c.l.s8.bf16 %v1932
    %v2197 = vunpack.c.l.s8.bf16 %v1933
    %v2198 = vunpack.c.l.s8.bf16 %v1934
    %v2199 = vunpack.c.l.s8.bf16 %v1935
    %v2200 = vunpack.c.l.s8.bf16 %v1936
    %v2201 = vunpack.c.l.s8.bf16 %v1937
    %v2202 = vunpack.c.l.s8.bf16 %v1938
    %v2203 = vunpack.c.l.s8.bf16 %v1939
    %v2204 = vunpack.c.h.s8.bf16 %v1932
    %v2205 = vunpack.c.h.s8.bf16 %v1933
    %v2206 = vunpack.c.h.s8.bf16 %v1934
    %v2207 = vunpack.c.h.s8.bf16 %v1935
    %v2208 = vunpack.c.h.s8.bf16 %v1936
    %v2209 = vunpack.c.h.s8.bf16 %v1937
    %v2210 = vunpack.c.h.s8.bf16 %v1938
    %v2211 = vunpack.c.h.s8.bf16 %v1939
    %v2212 = vunpack.c.l.s8.bf16 %v1940
    %v2213 = vunpack.c.l.s8.bf16 %v1941
    %v2214 = vunpack.c.l.s8.bf16 %v1942
    %v2215 = vunpack.c.l.s8.bf16 %v1943
    %v2216 = vunpack.c.l.s8.bf16 %v1944
    %v2217 = vunpack.c.l.s8.bf16 %v1945
    %v2218 = vunpack.c.l.s8.bf16 %v1946
    %v2219 = vunpack.c.l.s8.bf16 %v1947
    %v2220 = vunpack.c.h.s8.bf16 %v1940
    %v2221 = vunpack.c.h.s8.bf16 %v1941
    %v2222 = vunpack.c.h.s8.bf16 %v1942
    %v2223 = vunpack.c.h.s8.bf16 %v1943
    %v2224 = vunpack.c.h.s8.bf16 %v1944
    %v2225 = vunpack.c.h.s8.bf16 %v1945
    %v2226 = vunpack.c.h.s8.bf16 %v1946
    %v2227 = vunpack.c.h.s8.bf16 %v1947
    %v2228 = vunpack.c.l.s8.bf16 %v1948
    %v2229 = vunpack.c.l.s8.bf16 %v1949
    %v2230 = vunpack.c.l.s8.bf16 %v1950
    %v2231 = vunpack.c.l.s8.bf16 %v1951
    %v2232 = vunpack.c.l.s8.bf16 %v1952
    %v2233 = vunpack.c.l.s8.bf16 %v1953
    %v2234 = vunpack.c.l.s8.bf16 %v1954
    %v2235 = vunpack.c.l.s8.bf16 %v1955
    %v2236 = vunpack.c.h.s8.bf16 %v1948
    %v2237 = vunpack.c.h.s8.bf16 %v1949
    %v2238 = vunpack.c.h.s8.bf16 %v1950
    %v2239 = vunpack.c.h.s8.bf16 %v1951
    %v2240 = vunpack.c.h.s8.bf16 %v1952
    %v2241 = vunpack.c.h.s8.bf16 %v1953
    %v2242 = vunpack.c.h.s8.bf16 %v1954
    %v2243 = vunpack.c.h.s8.bf16 %v1955
    %v2244 = vunpack.c.l.s8.bf16 %v1956
    %v2245 = vunpack.c.l.s8.bf16 %v1957
    %v2246 = vunpack.c.l.s8.bf16 %v1958
    %v2247 = vunpack.c.l.s8.bf16 %v1959
    %v2248 = vunpack.c.l.s8.bf16 %v1960
    %v2249 = vunpack.c.l.s8.bf16 %v1961
    %v2250 = vunpack.c.l.s8.bf16 %v1962
    %v2251 = vunpack.c.l.s8.bf16 %v1963
    %v2252 = vunpack.c.h.s8.bf16 %v1956
    %v2253 = vunpack.c.h.s8.bf16 %v1957
    %v2254 = vunpack.c.h.s8.bf16 %v1958
    %v2255 = vunpack.c.h.s8.bf16 %v1959
    %v2256 = vunpack.c.h.s8.bf16 %v1960
    %v2257 = vunpack.c.h.s8.bf16 %v1961
    %v2258 = vunpack.c.h.s8.bf16 %v1962
    %v2259 = vunpack.c.h.s8.bf16 %v1963
    %v2260 = vunpack.c.l.s8.bf16 %v1964
    %v2261 = vunpack.c.l.s8.bf16 %v1965
    %v2262 = vunpack.c.l.s8.bf16 %v1966
    %v2263 = vunpack.c.l.s8.bf16 %v1967
    %v2264 = vunpack.c.l.s8.bf16 %v1968
    %v2265 = vunpack.c.l.s8.bf16 %v1969
    %v2266 = vunpack.c.l.s8.bf16 %v1970
    %v2267 = vunpack.c.l.s8.bf16 %v1971
    %v2268 = vunpack.c.h.s8.bf16 %v1964
    %v2269 = vunpack.c.h.s8.bf16 %v1965
    %v2270 = vunpack.c.h.s8.bf16 %v1966
    %v2271 = vunpack.c.h.s8.bf16 %v1967
    %v2272 = vunpack.c.h.s8.bf16 %v1968
    %v2273 = vunpack.c.h.s8.bf16 %v1969
    %v2274 = vunpack.c.h.s8.bf16 %v1970
    %v2275 = vunpack.c.h.s8.bf16 %v1971
    %v2276 = vunpack.c.l.s8.bf16 %v1972
    %v2277 = vunpack.c.l.s8.bf16 %v1973
    %v2278 = vunpack.c.l.s8.bf16 %v1974
    %v2279 = vunpack.c.l.s8.bf16 %v1975
    %v2280 = vunpack.c.l.s8.bf16 %v1976
    %v2281 = vunpack.c.l.s8.bf16 %v1977
    %v2282 = vunpack.c.l.s8.bf16 %v1978
    %v2283 = vunpack.c.l.s8.bf16 %v1979
    %v2284 = vunpack.c.h.s8.bf16 %v1972
    %v2285 = vunpack.c.h.s8.bf16 %v1973
    %v2286 = vunpack.c.h.s8.bf16 %v1974
    %v2287 = vunpack.c.h.s8.bf16 %v1975
    %v2288 = vunpack.c.h.s8.bf16 %v1976
    %v2289 = vunpack.c.h.s8.bf16 %v1977
    %v2290 = vunpack.c.h.s8.bf16 %v1978
    %v2291 = vunpack.c.h.s8.bf16 %v1979
    %v2292 = vunpack.c.l.s8.bf16 %v1980
    %v2293 = vunpack.c.l.s8.bf16 %v1981
    %v2294 = vunpack.c.l.s8.bf16 %v1982
    %v2295 = vunpack.c.l.s8.bf16 %v1983
    %v2296 = vunpack.c.l.s8.bf16 %v1984
    %v2297 = vunpack.c.l.s8.bf16 %v1985
    %v2298 = vunpack.c.l.s8.bf16 %v1986
    %v2299 = vunpack.c.l.s8.bf16 %v1987
    %v2300 = vunpack.c.h.s8.bf16 %v1980
    %v2301 = vunpack.c.h.s8.bf16 %v1981
    %v2302 = vunpack.c.h.s8.bf16 %v1982
    %v2303 = vunpack.c.h.s8.bf16 %v1983
    %v2304 = vunpack.c.h.s8.bf16 %v1984
    %v2305 = vunpack.c.h.s8.bf16 %v1985
    %v2306 = vunpack.c.h.s8.bf16 %v1986
    %v2307 = vunpack.c.h.s8.bf16 %v1987
    %v2308 = vunpack.c.l.s8.bf16 %v1988
    %v2309 = vunpack.c.l.s8.bf16 %v1989
    %v2310 = vunpack.c.l.s8.bf16 %v1990
    %v2311 = vunpack.c.l.s8.bf16 %v1991
    %v2312 = vunpack.c.l.s8.bf16 %v1992
    %v2313 = vunpack.c.l.s8.bf16 %v1993
    %v2314 = vunpack.c.l.s8.bf16 %v1994
    %v2315 = vunpack.c.l.s8.bf16 %v1995
    %v2316 = vunpack.c.h.s8.bf16 %v1988
    %v2317 = vunpack.c.h.s8.bf16 %v1989
    %v2318 = vunpack.c.h.s8.bf16 %v1990
    %v2319 = vunpack.c.h.s8.bf16 %v1991
    %v2320 = vunpack.c.h.s8.bf16 %v1992
    %v2321 = vunpack.c.h.s8.bf16 %v1993
    %v2322 = vunpack.c.h.s8.bf16 %v1994
    %v2323 = vunpack.c.h.s8.bf16 %v1995
    %v2324 = vunpack.c.l.s8.bf16 %v1996
    %v2325 = vunpack.c.l.s8.bf16 %v1997
    %v2326 = vunpack.c.l.s8.bf16 %v1998
    %v2327 = vunpack.c.l.s8.bf16 %v1999
    %v2328 = vunpack.c.l.s8.bf16 %v2000
    %v2329 = vunpack.c.l.s8.bf16 %v2001
    %v2330 = vunpack.c.l.s8.bf16 %v2002
    %v2331 = vunpack.c.l.s8.bf16 %v2003
    %v2332 = vunpack.c.h.s8.bf16 %v1996
    %v2333 = vunpack.c.h.s8.bf16 %v1997
    %v2334 = vunpack.c.h.s8.bf16 %v1998
    %v2335 = vunpack.c.h.s8.bf16 %v1999
    %v2336 = vunpack.c.h.s8.bf16 %v2000
    %v2337 = vunpack.c.h.s8.bf16 %v2001
    %v2338 = vunpack.c.h.s8.bf16 %v2002
    %v2339 = vunpack.c.h.s8.bf16 %v2003
    %v2340 = vunpack.c.l.s8.bf16 %v2004
    %v2341 = vunpack.c.l.s8.bf16 %v2005
    %v2342 = vunpack.c.l.s8.bf16 %v2006
    %v2343 = vunpack.c.l.s8.bf16 %v2007
    %v2344 = vunpack.c.l.s8.bf16 %v2008
    %v2345 = vunpack.c.l.s8.bf16 %v2009
    %v2346 = vunpack.c.l.s8.bf16 %v2010
    %v2347 = vunpack.c.l.s8.bf16 %v2011
    %v2348 = vunpack.c.h.s8.bf16 %v2004
    %v2349 = vunpack.c.h.s8.bf16 %v2005
    %v2350 = vunpack.c.h.s8.bf16 %v2006
    %v2351 = vunpack.c.h.s8.bf16 %v2007
    %v2352 = vunpack.c.h.s8.bf16 %v2008
    %v2353 = vunpack.c.h.s8.bf16 %v2009
    %v2354 = vunpack.c.h.s8.bf16 %v2010
    %v2355 = vunpack.c.h.s8.bf16 %v2011
    %v2356 = vunpack.c.l.s8.bf16 %v2012
    %v2357 = vunpack.c.l.s8.bf16 %v2013
    %v2358 = vunpack.c.l.s8.bf16 %v2014
    %v2359 = vunpack.c.l.s8.bf16 %v2015
    %v2360 = vunpack.c.l.s8.bf16 %v2016
    %v2361 = vunpack.c.l.s8.bf16 %v2017
    %v2362 = vunpack.c.l.s8.bf16 %v2018
    %v2363 = vunpack.c.l.s8.bf16 %v2019
    %v2364 = vunpack.c.h.s8.bf16 %v2012
    %v2365 = vunpack.c.h.s8.bf16 %v2013
    %v2366 = vunpack.c.h.s8.bf16 %v2014
    %v2367 = vunpack.c.h.s8.bf16 %v2015
    %v2368 = vunpack.c.h.s8.bf16 %v2016
    %v2369 = vunpack.c.h.s8.bf16 %v2017
    %v2370 = vunpack.c.h.s8.bf16 %v2018
    %v2371 = vunpack.c.h.s8.bf16 %v2019
    %v2372 = vunpack.c.l.s8.bf16 %v2020
    %v2373 = vunpack.c.l.s8.bf16 %v2021
    %v2374 = vunpack.c.l.s8.bf16 %v2022
    %v2375 = vunpack.c.l.s8.bf16 %v2023
    %v2376 = vunpack.c.l.s8.bf16 %v2024
    %v2377 = vunpack.c.l.s8.bf16 %v2025
    %v2378 = vunpack.c.l.s8.bf16 %v2026
    %v2379 = vunpack.c.l.s8.bf16 %v2027
    %v2380 = vunpack.c.h.s8.bf16 %v2020
    %v2381 = vunpack.c.h.s8.bf16 %v2021
    %v2382 = vunpack.c.h.s8.bf16 %v2022
    %v2383 = vunpack.c.h.s8.bf16 %v2023
    %v2384 = vunpack.c.h.s8.bf16 %v2024
    %v2385 = vunpack.c.h.s8.bf16 %v2025
    %v2386 = vunpack.c.h.s8.bf16 %v2026
    %v2387 = vunpack.c.h.s8.bf16 %v2027
    %v2388 = vunpack.c.l.s8.bf16 %v2028
    %v2389 = vunpack.c.l.s8.bf16 %v2029
    %v2390 = vunpack.c.l.s8.bf16 %v2030
    %v2391 = vunpack.c.l.s8.bf16 %v2031
    %v2392 = vunpack.c.l.s8.bf16 %v2032
    %v2393 = vunpack.c.l.s8.bf16 %v2033
    %v2394 = vunpack.c.l.s8.bf16 %v2034
    %v2395 = vunpack.c.l.s8.bf16 %v2035
    %v2396 = vunpack.c.h.s8.bf16 %v2028
    %v2397 = vunpack.c.h.s8.bf16 %v2029
    %v2398 = vunpack.c.h.s8.bf16 %v2030
    %v2399 = vunpack.c.h.s8.bf16 %v2031
    %v2400 = vunpack.c.h.s8.bf16 %v2032
    %v2401 = vunpack.c.h.s8.bf16 %v2033
    %v2402 = vunpack.c.h.s8.bf16 %v2034
    %v2403 = vunpack.c.h.s8.bf16 %v2035
    %v2404 = vunpack.c.l.s8.bf16 %v2036
    %v2405 = vunpack.c.l.s8.bf16 %v2037
    %v2406 = vunpack.c.l.s8.bf16 %v2038
    %v2407 = vunpack.c.l.s8.bf16 %v2039
    %v2408 = vunpack.c.l.s8.bf16 %v2040
    %v2409 = vunpack.c.l.s8.bf16 %v2041
    %v2410 = vunpack.c.l.s8.bf16 %v2042
    %v2411 = vunpack.c.l.s8.bf16 %v2043
    %v2412 = vunpack.c.h.s8.bf16 %v2036
    %v2413 = vunpack.c.h.s8.bf16 %v2037
    %v2414 = vunpack.c.h.s8.bf16 %v2038
    %v2415 = vunpack.c.h.s8.bf16 %v2039
    %v2416 = vunpack.c.h.s8.bf16 %v2040
    %v2417 = vunpack.c.h.s8.bf16 %v2041
    %v2418 = vunpack.c.h.s8.bf16 %v2042
    %v2419 = vunpack.c.h.s8.bf16 %v2043
    %v2420 = vunpack.c.l.s8.bf16 %v2044
    %v2421 = vunpack.c.l.s8.bf16 %v2045
    %v2422 = vunpack.c.l.s8.bf16 %v2046
    %v2423 = vunpack.c.l.s8.bf16 %v2047
    %v2424 = vunpack.c.l.s8.bf16 %v2048
    %v2425 = vunpack.c.l.s8.bf16 %v2049
    %v2426 = vunpack.c.l.s8.bf16 %v2050
    %v2427 = vunpack.c.l.s8.bf16 %v2051
    %v2428 = vunpack.c.h.s8.bf16 %v2044
    %v2429 = vunpack.c.h.s8.bf16 %v2045
    %v2430 = vunpack.c.h.s8.bf16 %v2046
    %v2431 = vunpack.c.h.s8.bf16 %v2047
    %v2432 = vunpack.c.h.s8.bf16 %v2048
    %v2433 = vunpack.c.h.s8.bf16 %v2049
    %v2434 = vunpack.c.h.s8.bf16 %v2050
    %v2435 = vunpack.c.h.s8.bf16 %v2051
    %v2436 = vunpack.c.l.s8.bf16 %v2052
    %v2437 = vunpack.c.l.s8.bf16 %v2053
    %v2438 = vunpack.c.l.s8.bf16 %v2054
    %v2439 = vunpack.c.l.s8.bf16 %v2055
    %v2440 = vunpack.c.l.s8.bf16 %v2056
    %v2441 = vunpack.c.l.s8.bf16 %v2057
    %v2442 = vunpack.c.l.s8.bf16 %v2058
    %v2443 = vunpack.c.l.s8.bf16 %v2059
    %v2444 = vunpack.c.h.s8.bf16 %v2052
    %v2445 = vunpack.c.h.s8.bf16 %v2053
    %v2446 = vunpack.c.h.s8.bf16 %v2054
    %v2447 = vunpack.c.h.s8.bf16 %v2055
    %v2448 = vunpack.c.h.s8.bf16 %v2056
    %v2449 = vunpack.c.h.s8.bf16 %v2057
    %v2450 = vunpack.c.h.s8.bf16 %v2058
    %v2451 = vunpack.c.h.s8.bf16 %v2059
    %v2452 = vunpack.c.l.s8.bf16 %v2060
    %v2453 = vunpack.c.l.s8.bf16 %v2061
    %v2454 = vunpack.c.l.s8.bf16 %v2062
    %v2455 = vunpack.c.l.s8.bf16 %v2063
    %v2456 = vunpack.c.l.s8.bf16 %v2064
    %v2457 = vunpack.c.l.s8.bf16 %v2065
    %v2458 = vunpack.c.l.s8.bf16 %v2066
    %v2459 = vunpack.c.l.s8.bf16 %v2067
    %v2460 = vunpack.c.h.s8.bf16 %v2060
    %v2461 = vunpack.c.h.s8.bf16 %v2061
    %v2462 = vunpack.c.h.s8.bf16 %v2062
    %v2463 = vunpack.c.h.s8.bf16 %v2063
    %v2464 = vunpack.c.h.s8.bf16 %v2064
    %v2465 = vunpack.c.h.s8.bf16 %v2065
    %v2466 = vunpack.c.h.s8.bf16 %v2066
    %v2467 = vunpack.c.h.s8.bf16 %v2067
    %v2468 = vunpack.c.l.s8.bf16 %v2068
    %v2469 = vunpack.c.l.s8.bf16 %v2069
    %v2470 = vunpack.c.l.s8.bf16 %v2070
    %v2471 = vunpack.c.l.s8.bf16 %v2071
    %v2472 = vunpack.c.l.s8.bf16 %v2072
    %v2473 = vunpack.c.l.s8.bf16 %v2073
    %v2474 = vunpack.c.l.s8.bf16 %v2074
    %v2475 = vunpack.c.l.s8.bf16 %v2075
    %v2476 = vunpack.c.h.s8.bf16 %v2068
    %v2477 = vunpack.c.h.s8.bf16 %v2069
    %v2478 = vunpack.c.h.s8.bf16 %v2070
    %v2479 = vunpack.c.h.s8.bf16 %v2071
    %v2480 = vunpack.c.h.s8.bf16 %v2072
    %v2481 = vunpack.c.h.s8.bf16 %v2073
    %v2482 = vunpack.c.h.s8.bf16 %v2074
    %v2483 = vunpack.c.h.s8.bf16 %v2075
    %v2484 = vunpack.c.l.s8.bf16 %v2076
    %v2485 = vunpack.c.l.s8.bf16 %v2077
    %v2486 = vunpack.c.l.s8.bf16 %v2078
    %v2487 = vunpack.c.l.s8.bf16 %v2079
    %v2488 = vunpack.c.l.s8.bf16 %v2080
    %v2489 = vunpack.c.l.s8.bf16 %v2081
    %v2490 = vunpack.c.l.s8.bf16 %v2082
    %v2491 = vunpack.c.l.s8.bf16 %v2083
    %v2492 = vunpack.c.h.s8.bf16 %v2076
    %v2493 = vunpack.c.h.s8.bf16 %v2077
    %v2494 = vunpack.c.h.s8.bf16 %v2078
    %v2495 = vunpack.c.h.s8.bf16 %v2079
    %v2496 = vunpack.c.h.s8.bf16 %v2080
    %v2497 = vunpack.c.h.s8.bf16 %v2081
    %v2498 = vunpack.c.h.s8.bf16 %v2082
    %v2499 = vunpack.c.h.s8.bf16 %v2083
    %v2500 = vunpack.c.l.s8.bf16 %v2084
    %v2501 = vunpack.c.l.s8.bf16 %v2085
    %v2502 = vunpack.c.l.s8.bf16 %v2086
    %v2503 = vunpack.c.l.s8.bf16 %v2087
    %v2504 = vunpack.c.l.s8.bf16 %v2088
    %v2505 = vunpack.c.l.s8.bf16 %v2089
    %v2506 = vunpack.c.l.s8.bf16 %v2090
    %v2507 = vunpack.c.l.s8.bf16 %v2091
    %v2508 = vunpack.c.h.s8.bf16 %v2084
    %v2509 = vunpack.c.h.s8.bf16 %v2085
    %v2510 = vunpack.c.h.s8.bf16 %v2086
    %v2511 = vunpack.c.h.s8.bf16 %v2087
    %v2512 = vunpack.c.h.s8.bf16 %v2088
    %v2513 = vunpack.c.h.s8.bf16 %v2089
    %v2514 = vunpack.c.h.s8.bf16 %v2090
    %v2515 = vunpack.c.h.s8.bf16 %v2091
    %v2516 = vunpack.c.l.s8.bf16 %v2092
    %v2517 = vunpack.c.l.s8.bf16 %v2093
    %v2518 = vunpack.c.l.s8.bf16 %v2094
    %v2519 = vunpack.c.l.s8.bf16 %v2095
    %v2520 = vunpack.c.l.s8.bf16 %v2096
    %v2521 = vunpack.c.l.s8.bf16 %v2097
    %v2522 = vunpack.c.l.s8.bf16 %v2098
    %v2523 = vunpack.c.l.s8.bf16 %v2099
    %v2524 = vunpack.c.h.s8.bf16 %v2092
    %v2525 = vunpack.c.h.s8.bf16 %v2093
    %v2526 = vunpack.c.h.s8.bf16 %v2094
    %v2527 = vunpack.c.h.s8.bf16 %v2095
    %v2528 = vunpack.c.h.s8.bf16 %v2096
    %v2529 = vunpack.c.h.s8.bf16 %v2097
    %v2530 = vunpack.c.h.s8.bf16 %v2098
    %v2531 = vunpack.c.h.s8.bf16 %v2099
    %v2532 = vunpack.c.l.s8.bf16 %v2100
    %v2533 = vunpack.c.l.s8.bf16 %v2101
    %v2534 = vunpack.c.l.s8.bf16 %v2102
    %v2535 = vunpack.c.l.s8.bf16 %v2103
    %v2536 = vunpack.c.l.s8.bf16 %v2104
    %v2537 = vunpack.c.l.s8.bf16 %v2105
    %v2538 = vunpack.c.l.s8.bf16 %v2106
    %v2539 = vunpack.c.l.s8.bf16 %v2107
    %v2540 = vunpack.c.h.s8.bf16 %v2100
    %v2541 = vunpack.c.h.s8.bf16 %v2101
    %v2542 = vunpack.c.h.s8.bf16 %v2102
    %v2543 = vunpack.c.h.s8.bf16 %v2103
    %v2544 = vunpack.c.h.s8.bf16 %v2104
    %v2545 = vunpack.c.h.s8.bf16 %v2105
    %v2546 = vunpack.c.h.s8.bf16 %v2106
    %v2547 = vunpack.c.h.s8.bf16 %v2107
    %v2548 = vunpack.c.l.s8.bf16 %v2108
    %v2549 = vunpack.c.l.s8.bf16 %v2109
    %v2550 = vunpack.c.l.s8.bf16 %v2110
    %v2551 = vunpack.c.l.s8.bf16 %v2111
    %v2552 = vunpack.c.l.s8.bf16 %v2112
    %v2553 = vunpack.c.l.s8.bf16 %v2113
    %v2554 = vunpack.c.l.s8.bf16 %v2114
    %v2555 = vunpack.c.l.s8.bf16 %v2115
    %v2556 = vunpack.c.h.s8.bf16 %v2108
    %v2557 = vunpack.c.h.s8.bf16 %v2109
    %v2558 = vunpack.c.h.s8.bf16 %v2110
    %v2559 = vunpack.c.h.s8.bf16 %v2111
    %v2560 = vunpack.c.h.s8.bf16 %v2112
    %v2561 = vunpack.c.h.s8.bf16 %v2113
    %v2562 = vunpack.c.h.s8.bf16 %v2114
    %v2563 = vunpack.c.h.s8.bf16 %v2115
    %v2564 = vunpack.c.l.s8.bf16 %v2116
    %v2565 = vunpack.c.l.s8.bf16 %v2117
    %v2566 = vunpack.c.l.s8.bf16 %v2118
    %v2567 = vunpack.c.l.s8.bf16 %v2119
    %v2568 = vunpack.c.l.s8.bf16 %v2120
    %v2569 = vunpack.c.l.s8.bf16 %v2121
    %v2570 = vunpack.c.l.s8.bf16 %v2122
    %v2571 = vunpack.c.l.s8.bf16 %v2123
    %v2572 = vunpack.c.h.s8.bf16 %v2116
    %v2573 = vunpack.c.h.s8.bf16 %v2117
    %v2574 = vunpack.c.h.s8.bf16 %v2118
    %v2575 = vunpack.c.h.s8.bf16 %v2119
    %v2576 = vunpack.c.h.s8.bf16 %v2120
    %v2577 = vunpack.c.h.s8.bf16 %v2121
    %v2578 = vunpack.c.h.s8.bf16 %v2122
    %v2579 = vunpack.c.h.s8.bf16 %v2123
    %v2580 = vunpack.c.l.s8.bf16 %v2124
    %v2581 = vunpack.c.l.s8.bf16 %v2125
    %v2582 = vunpack.c.l.s8.bf16 %v2126
    %v2583 = vunpack.c.l.s8.bf16 %v2127
    %v2584 = vunpack.c.l.s8.bf16 %v2128
    %v2585 = vunpack.c.l.s8.bf16 %v2129
    %v2586 = vunpack.c.l.s8.bf16 %v2130
    %v2587 = vunpack.c.l.s8.bf16 %v2131
    %v2588 = vunpack.c.h.s8.bf16 %v2124
    %v2589 = vunpack.c.h.s8.bf16 %v2125
    %v2590 = vunpack.c.h.s8.bf16 %v2126
    %v2591 = vunpack.c.h.s8.bf16 %v2127
    %v2592 = vunpack.c.h.s8.bf16 %v2128
    %v2593 = vunpack.c.h.s8.bf16 %v2129
    %v2594 = vunpack.c.h.s8.bf16 %v2130
    %v2595 = vunpack.c.h.s8.bf16 %v2131
    %v2596 = vunpack.c.l.s8.bf16 %v2132
    %v2597 = vunpack.c.l.s8.bf16 %v2133
    %v2598 = vunpack.c.l.s8.bf16 %v2134
    %v2599 = vunpack.c.l.s8.bf16 %v2135
    %v2600 = vunpack.c.l.s8.bf16 %v2136
    %v2601 = vunpack.c.l.s8.bf16 %v2137
    %v2602 = vunpack.c.l.s8.bf16 %v2138
    %v2603 = vunpack.c.l.s8.bf16 %v2139
    %v2604 = vunpack.c.h.s8.bf16 %v2132
    %v2605 = vunpack.c.h.s8.bf16 %v2133
    %v2606 = vunpack.c.h.s8.bf16 %v2134
    %v2607 = vunpack.c.h.s8.bf16 %v2135
    %v2608 = vunpack.c.h.s8.bf16 %v2136
    %v2609 = vunpack.c.h.s8.bf16 %v2137
    %v2610 = vunpack.c.h.s8.bf16 %v2138
    %v2611 = vunpack.c.h.s8.bf16 %v2139
    %v2612 = vunpack.c.l.s8.bf16 %v2140
    %v2613 = vunpack.c.l.s8.bf16 %v2141
    %v2614 = vunpack.c.l.s8.bf16 %v2142
    %v2615 = vunpack.c.l.s8.bf16 %v2143
    %v2616 = vunpack.c.l.s8.bf16 %v2144
    %v2617 = vunpack.c.l.s8.bf16 %v2145
    %v2618 = vunpack.c.l.s8.bf16 %v2146
    %v2619 = vunpack.c.l.s8.bf16 %v2147
    %v2620 = vunpack.c.h.s8.bf16 %v2140
    %v2621 = vunpack.c.h.s8.bf16 %v2141
    %v2622 = vunpack.c.h.s8.bf16 %v2142
    %v2623 = vunpack.c.h.s8.bf16 %v2143
    %v2624 = vunpack.c.h.s8.bf16 %v2144
    %v2625 = vunpack.c.h.s8.bf16 %v2145
    %v2626 = vunpack.c.h.s8.bf16 %v2146
    %v2627 = vunpack.c.h.s8.bf16 %v2147
    %v2628 = vunpack.c.l.s8.bf16 %v2148
    %v2629 = vunpack.c.l.s8.bf16 %v2149
    %v2630 = vunpack.c.l.s8.bf16 %v2150
    %v2631 = vunpack.c.l.s8.bf16 %v2151
    %v2632 = vunpack.c.l.s8.bf16 %v2152
    %v2633 = vunpack.c.l.s8.bf16 %v2153
    %v2634 = vunpack.c.l.s8.bf16 %v2154
    %v2635 = vunpack.c.l.s8.bf16 %v2155
    %v2636 = vunpack.c.h.s8.bf16 %v2148
    %v2637 = vunpack.c.h.s8.bf16 %v2149
    %v2638 = vunpack.c.h.s8.bf16 %v2150
    %v2639 = vunpack.c.h.s8.bf16 %v2151
    %v2640 = vunpack.c.h.s8.bf16 %v2152
    %v2641 = vunpack.c.h.s8.bf16 %v2153
    %v2642 = vunpack.c.h.s8.bf16 %v2154
    %v2643 = vunpack.c.h.s8.bf16 %v2155
    %v2644 = vunpack.c.l.s8.bf16 %v2156
    %v2645 = vunpack.c.l.s8.bf16 %v2157
    %v2646 = vunpack.c.l.s8.bf16 %v2158
    %v2647 = vunpack.c.l.s8.bf16 %v2159
    %v2648 = vunpack.c.l.s8.bf16 %v2160
    %v2649 = vunpack.c.l.s8.bf16 %v2161
    %v2650 = vunpack.c.l.s8.bf16 %v2162
    %v2651 = vunpack.c.l.s8.bf16 %v2163
    %v2652 = vunpack.c.h.s8.bf16 %v2156
    %v2653 = vunpack.c.h.s8.bf16 %v2157
    %v2654 = vunpack.c.h.s8.bf16 %v2158
    %v2655 = vunpack.c.h.s8.bf16 %v2159
    %v2656 = vunpack.c.h.s8.bf16 %v2160
    %v2657 = vunpack.c.h.s8.bf16 %v2161
    %v2658 = vunpack.c.h.s8.bf16 %v2162
    %v2659 = vunpack.c.h.s8.bf16 %v2163
    %v2660 = vunpack.c.l.s8.bf16 %v2164
    %v2661 = vunpack.c.l.s8.bf16 %v2165
    %v2662 = vunpack.c.l.s8.bf16 %v2166
    %v2663 = vunpack.c.l.s8.bf16 %v2167
    %v2664 = vunpack.c.l.s8.bf16 %v2168
    %v2665 = vunpack.c.l.s8.bf16 %v2169
    %v2666 = vunpack.c.l.s8.bf16 %v2170
    %v2667 = vunpack.c.l.s8.bf16 %v2171
    %v2668 = vunpack.c.h.s8.bf16 %v2164
    %v2669 = vunpack.c.h.s8.bf16 %v2165
    %v2670 = vunpack.c.h.s8.bf16 %v2166
    %v2671 = vunpack.c.h.s8.bf16 %v2167
    %v2672 = vunpack.c.h.s8.bf16 %v2168
    %v2673 = vunpack.c.h.s8.bf16 %v2169
    %v2674 = vunpack.c.h.s8.bf16 %v2170
    %v2675 = vunpack.c.h.s8.bf16 %v2171
    %v2676 = vunpack.c.l.s8.bf16 %v2172
    %v2677 = vunpack.c.l.s8.bf16 %v2173
    %v2678 = vunpack.c.l.s8.bf16 %v2174
    %v2679 = vunpack.c.l.s8.bf16 %v2175
    %v2680 = vunpack.c.l.s8.bf16 %v2176
    %v2681 = vunpack.c.l.s8.bf16 %v2177
    %v2682 = vunpack.c.l.s8.bf16 %v2178
    %v2683 = vunpack.c.l.s8.bf16 %v2179
    %v2684 = vunpack.c.h.s8.bf16 %v2172
    %v2685 = vunpack.c.h.s8.bf16 %v2173
    %v2686 = vunpack.c.h.s8.bf16 %v2174
    %v2687 = vunpack.c.h.s8.bf16 %v2175
    %v2688 = vunpack.c.h.s8.bf16 %v2176
    %v2689 = vunpack.c.h.s8.bf16 %v2177
    %v2690 = vunpack.c.h.s8.bf16 %v2178
    %v2691 = vunpack.c.h.s8.bf16 %v2179
    %2692 = vmatprep.subr.bf16.mxu0 %v2237
    %2693 = vmatpush1.bf16.msra.mxu0 %v2236
    %2694 = vmatprep.subr.bf16.mxu0 %v2229
    %2695 = vmatpush1.bf16.msra.mxu0 %v2228
    %2696 = vmatprep.subr.bf16.mxu0 %v2221
    %2697 = vmatpush1.bf16.msra.mxu0 %v2220
    %2698 = vmatprep.subr.bf16.mxu0 %v2213
    %2699 = vmatpush1.bf16.msra.mxu0 %v2212
    %2700 = vmatprep.subr.bf16.mxu0 %v2205
    %2701 = vmatpush1.bf16.msra.mxu0 %v2204
    %2702 = vmatprep.subr.bf16.mxu0 %v2197
    %2703 = vmatpush1.bf16.msra.mxu0 %v2196
    %2704 = vmatprep.subr.bf16.mxu0 %v2189
    %2705 = vmatpush1.bf16.msra.mxu0 %v2188
    %2706 = vmatprep.subr.bf16.mxu0 %v2181
    %2707 = vmatpush1.bf16.msra.mxu0 %v2180
    %2708 = vmatprep.subr.bf16.mxu0 %v2301
    %2709 = vmatpush2.bf16.msra.mxu0 %v2300
    %2710 = vmatprep.subr.bf16.mxu0 %v2293
    %2711 = vmatpush2.bf16.msra.mxu0 %v2292
    %2712 = vmatprep.subr.bf16.mxu0 %v2285
    %2713 = vmatpush2.bf16.msra.mxu0 %v2284
    %2714 = vmatprep.subr.bf16.mxu0 %v2277
    %2715 = vmatpush2.bf16.msra.mxu0 %v2276
    %2716 = vmatprep.subr.bf16.mxu0 %v2269
    %2717 = vmatpush2.bf16.msra.mxu0 %v2268
    %2718 = vmatprep.subr.bf16.mxu0 %v2261
    %2719 = vmatpush2.bf16.msra.mxu0 %v2260
    %2720 = vmatprep.subr.bf16.mxu0 %v2253
    %2721 = vmatpush2.bf16.msra.mxu0 %v2252
    %2722 = vmatprep.subr.bf16.mxu0 %v2245
    %2723 = vmatpush2.bf16.msra.mxu0 %v2244
    %2724 = vmatprep.mubr.bf16.mxu0 %v1917
    %2725 = vmatmul.mubr.bf16.gmra.mxu0 %v1916
    %v2726 = vpop.f32.mrf.mxu0
    %v2727 = vadd.f32 0.0, %v2726
    %v2728 = vpop.f32.mrf.mxu0
    %v2729 = vadd.f32 0.0, %v2728
    %v2730 = vpop.f32.mrf.mxu0
    %v2731 = vpop.f32.mrf.mxu0
    %2732 = vdwg.mxu0
    %2733 = vmatprep.subr.bf16.mxu0 %v2365
    %2734 = vmatpush1.bf16.msra.mxu0 %v2364
    %2735 = vmatprep.subr.bf16.mxu0 %v2357
    %2736 = vmatpush1.bf16.msra.mxu0 %v2356
    %2737 = vmatprep.subr.bf16.mxu0 %v2349
    %2738 = vmatpush1.bf16.msra.mxu0 %v2348
    %2739 = vmatprep.subr.bf16.mxu0 %v2341
    %2740 = vmatpush1.bf16.msra.mxu0 %v2340
    %2741 = vmatprep.subr.bf16.mxu0 %v2333
    %2742 = vmatpush1.bf16.msra.mxu0 %v2332
    %2743 = vmatprep.subr.bf16.mxu0 %v2325
    %2744 = vmatpush1.bf16.msra.mxu0 %v2324
    %2745 = vmatprep.subr.bf16.mxu0 %v2317
    %2746 = vmatpush1.bf16.msra.mxu0 %v2316
    %2747 = vmatprep.subr.bf16.mxu0 %v2309
    %2748 = vmatpush1.bf16.msra.mxu0 %v2308
    %2749 = vmatprep.subr.bf16.mxu0 %v2429
    %2750 = vmatpush2.bf16.msra.mxu0 %v2428
    %2751 = vmatprep.subr.bf16.mxu0 %v2421
    %2752 = vmatpush2.bf16.msra.mxu0 %v2420
    %2753 = vmatprep.subr.bf16.mxu0 %v2413
    %2754 = vmatpush2.bf16.msra.mxu0 %v2412
    %2755 = vmatprep.subr.bf16.mxu0 %v2405
    %2756 = vmatpush2.bf16.msra.mxu0 %v2404
    %2757 = vmatprep.subr.bf16.mxu0 %v2397
    %2758 = vmatpush2.bf16.msra.mxu0 %v2396
    %2759 = vmatprep.subr.bf16.mxu0 %v2389
    %2760 = vmatpush2.bf16.msra.mxu0 %v2388
    %2761 = vmatprep.subr.bf16.mxu0 %v2381
    %2762 = vmatpush2.bf16.msra.mxu0 %v2380
    %2763 = vmatprep.subr.bf16.mxu0 %v2373
    %2764 = vmatpush2.bf16.msra.mxu0 %v2372
    %2765 = vmatprep.mubr.bf16.mxu0 %v1919
    %2766 = vmatmul.mubr.bf16.gmra.mxu0 %v1918
    %v2767 = vpop.f32.mrf.mxu0
    %v2768 = vadd.f32 %v2727, %v2767
    %v2769 = vpop.f32.mrf.mxu0
    %v2770 = vadd.f32 %v2729, %v2769
    %v2771 = vpop.f32.mrf.mxu0
    %v2772 = vpop.f32.mrf.mxu0
    %2773 = vdwg.mxu0
    %2774 = vmatprep.subr.bf16.mxu0 %v2493
    %2775 = vmatpush1.bf16.msra.mxu0 %v2492
    %2776 = vmatprep.subr.bf16.mxu0 %v2485
    %2777 = vmatpush1.bf16.msra.mxu0 %v2484
    %2778 = vmatprep.subr.bf16.mxu0 %v2477
    %2779 = vmatpush1.bf16.msra.mxu0 %v2476
    %2780 = vmatprep.subr.bf16.mxu0 %v2469
    %2781 = vmatpush1.bf16.msra.mxu0 %v2468
    %2782 = vmatprep.subr.bf16.mxu0 %v2461
    %2783 = vmatpush1.bf16.msra.mxu0 %v2460
    %2784 = vmatprep.subr.bf16.mxu0 %v2453
    %2785 = vmatpush1.bf16.msra.mxu0 %v2452
    %2786 = vmatprep.subr.bf16.mxu0 %v2445
    %2787 = vmatpush1.bf16.msra.mxu0 %v2444
    %2788 = vmatprep.subr.bf16.mxu0 %v2437
    %2789 = vmatpush1.bf16.msra.mxu0 %v2436
    %2790 = vmatprep.subr.bf16.mxu0 %v2557
    %2791 = vmatpush2.bf16.msra.mxu0 %v2556
    %2792 = vmatprep.subr.bf16.mxu0 %v2549
    %2793 = vmatpush2.bf16.msra.mxu0 %v2548
    %2794 = vmatprep.subr.bf16.mxu0 %v2541
    %2795 = vmatpush2.bf16.msra.mxu0 %v2540
    %2796 = vmatprep.subr.bf16.mxu0 %v2533
    %2797 = vmatpush2.bf16.msra.mxu0 %v2532
    %2798 = vmatprep.subr.bf16.mxu0 %v2525
    %2799 = vmatpush2.bf16.msra.mxu0 %v2524
    %2800 = vmatprep.subr.bf16.mxu0 %v2517
    %2801 = vmatpush2.bf16.msra.mxu0 %v2516
    %2802 = vmatprep.subr.bf16.mxu0 %v2509
    %2803 = vmatpush2.bf16.msra.mxu0 %v2508
    %2804 = vmatprep.subr.bf16.mxu0 %v2501
    %2805 = vmatpush2.bf16.msra.mxu0 %v2500
    %2806 = vmatprep.mubr.bf16.mxu0 %v1921
    %2807 = vmatmul.mubr.bf16.gmra.mxu0 %v1920
    %v2808 = vpop.f32.mrf.mxu0
    %v2809 = vadd.f32 %v2768, %v2808
    %v2810 = vpop.f32.mrf.mxu0
    %v2811 = vadd.f32 %v2770, %v2810
    %v2812 = vpop.f32.mrf.mxu0
    %v2813 = vpop.f32.mrf.mxu0
    %2814 = vdwg.mxu0
    %2815 = vmatprep.subr.bf16.mxu0 %v2621
    %2816 = vmatpush1.bf16.msra.mxu0 %v2620
    %2817 = vmatprep.subr.bf16.mxu0 %v2613
    %2818 = vmatpush1.bf16.msra.mxu0 %v2612
    %2819 = vmatprep.subr.bf16.mxu0 %v2605
    %2820 = vmatpush1.bf16.msra.mxu0 %v2604
    %2821 = vmatprep.subr.bf16.mxu0 %v2597
    %2822 = vmatpush1.bf16.msra.mxu0 %v2596
    %2823 = vmatprep.subr.bf16.mxu0 %v2589
    %2824 = vmatpush1.bf16.msra.mxu0 %v2588
    %2825 = vmatprep.subr.bf16.mxu0 %v2581
    %2826 = vmatpush1.bf16.msra.mxu0 %v2580
    %2827 = vmatprep.subr.bf16.mxu0 %v2573
    %2828 = vmatpush1.bf16.msra.mxu0 %v2572
    %2829 = vmatprep.subr.bf16.mxu0 %v2565
    %2830 = vmatpush1.bf16.msra.mxu0 %v2564
    %2831 = vmatprep.subr.bf16.mxu0 %v2685
    %2832 = vmatpush2.bf16.msra.mxu0 %v2684
    %2833 = vmatprep.subr.bf16.mxu0 %v2677
    %2834 = vmatpush2.bf16.msra.mxu0 %v2676
    %2835 = vmatprep.subr.bf16.mxu0 %v2669
    %2836 = vmatpush2.bf16.msra.mxu0 %v2668
    %2837 = vmatprep.subr.bf16.mxu0 %v2661
    %2838 = vmatpush2.bf16.msra.mxu0 %v2660
    %2839 = vmatprep.subr.bf16.mxu0 %v2653
    %2840 = vmatpush2.bf16.msra.mxu0 %v2652
    %2841 = vmatprep.subr.bf16.mxu0 %v2645
    %2842 = vmatpush2.bf16.msra.mxu0 %v2644
    %2843 = vmatprep.subr.bf16.mxu0 %v2637
    %2844 = vmatpush2.bf16.msra.mxu0 %v2636
    %2845 = vmatprep.subr.bf16.mxu0 %v2629
    %2846 = vmatpush2.bf16.msra.mxu0 %v2628
    %2847 = vmatprep.mubr.bf16.mxu0 %v1923
    %2848 = vmatmul.mubr.bf16.gmra.mxu0 %v1922
    %v2849 = vpop.f32.mrf.mxu0
    %v2850 = vadd.f32 %v2809, %v2849
    %v2851 = vpop.f32.mrf.mxu0
    %v2852 = vadd.f32 %v2811, %v2851
    %v2853 = vpop.f32.mrf.mxu0
    %v2854 = vpop.f32.mrf.mxu0
    %2855 = vdwg.mxu0
    %2856 = vmatprep.subr.bf16.mxu0 %v2239
    %2857 = vmatpush1.bf16.msra.mxu0 %v2238
    %2858 = vmatprep.subr.bf16.mxu0 %v2231
    %2859 = vmatpush1.bf16.msra.mxu0 %v2230
    %2860 = vmatprep.subr.bf16.mxu0 %v2223
    %2861 = vmatpush1.bf16.msra.mxu0 %v2222
    %2862 = vmatprep.subr.bf16.mxu0 %v2215
    %2863 = vmatpush1.bf16.msra.mxu0 %v2214
    %2864 = vmatprep.subr.bf16.mxu0 %v2207
    %2865 = vmatpush1.bf16.msra.mxu0 %v2206
    %2866 = vmatprep.subr.bf16.mxu0 %v2199
    %2867 = vmatpush1.bf16.msra.mxu0 %v2198
    %2868 = vmatprep.subr.bf16.mxu0 %v2191
    %2869 = vmatpush1.bf16.msra.mxu0 %v2190
    %2870 = vmatprep.subr.bf16.mxu0 %v2183
    %2871 = vmatpush1.bf16.msra.mxu0 %v2182
    %2872 = vmatprep.subr.bf16.mxu0 %v2303
    %2873 = vmatpush2.bf16.msra.mxu0 %v2302
    %2874 = vmatprep.subr.bf16.mxu0 %v2295
    %2875 = vmatpush2.bf16.msra.mxu0 %v2294
    %2876 = vmatprep.subr.bf16.mxu0 %v2287
    %2877 = vmatpush2.bf16.msra.mxu0 %v2286
    %2878 = vmatprep.subr.bf16.mxu0 %v2279
    %2879 = vmatpush2.bf16.msra.mxu0 %v2278
    %2880 = vmatprep.subr.bf16.mxu0 %v2271
    %2881 = vmatpush2.bf16.msra.mxu0 %v2270
    %2882 = vmatprep.subr.bf16.mxu0 %v2263
    %2883 = vmatpush2.bf16.msra.mxu0 %v2262
    %2884 = vmatprep.subr.bf16.mxu0 %v2255
    %2885 = vmatpush2.bf16.msra.mxu0 %v2254
    %2886 = vmatprep.subr.bf16.mxu0 %v2247
    %2887 = vmatpush2.bf16.msra.mxu0 %v2246
    %2888 = vmatprep.mubr.bf16.mxu0 %v1917
    %2889 = vmatmul.mubr.bf16.gmra.mxu0 %v1916
    %v2890 = vpop.f32.mrf.mxu0
    %v2891 = vadd.f32 0.0, %v2890
    %v2892 = vpop.f32.mrf.mxu0
    %v2893 = vadd.f32 0.0, %v2892
    %v2894 = vpop.f32.mrf.mxu0
    %v2895 = vpop.f32.mrf.mxu0
    %2896 = vdwg.mxu0
    %2897 = vmatprep.subr.bf16.mxu0 %v2367
    %2898 = vmatpush1.bf16.msra.mxu0 %v2366
    %2899 = vmatprep.subr.bf16.mxu0 %v2359
    %2900 = vmatpush1.bf16.msra.mxu0 %v2358
    %2901 = vmatprep.subr.bf16.mxu0 %v2351
    %2902 = vmatpush1.bf16.msra.mxu0 %v2350
    %2903 = vmatprep.subr.bf16.mxu0 %v2343
    %2904 = vmatpush1.bf16.msra.mxu0 %v2342
    %2905 = vmatprep.subr.bf16.mxu0 %v2335
    %2906 = vmatpush1.bf16.msra.mxu0 %v2334
    %2907 = vmatprep.subr.bf16.mxu0 %v2327
    %2908 = vmatpush1.bf16.msra.mxu0 %v2326
    %2909 = vmatprep.subr.bf16.mxu0 %v2319
    %2910 = vmatpush1.bf16.msra.mxu0 %v2318
    %2911 = vmatprep.subr.bf16.mxu0 %v2311
    %2912 = vmatpush1.bf16.msra.mxu0 %v2310
    %2913 = vmatprep.subr.bf16.mxu0 %v2431
    %2914 = vmatpush2.bf16.msra.mxu0 %v2430
    %2915 = vmatprep.subr.bf16.mxu0 %v2423
    %2916 = vmatpush2.bf16.msra.mxu0 %v2422
    %2917 = vmatprep.subr.bf16.mxu0 %v2415
    %2918 = vmatpush2.bf16.msra.mxu0 %v2414
    %2919 = vmatprep.subr.bf16.mxu0 %v2407
    %2920 = vmatpush2.bf16.msra.mxu0 %v2406
    %2921 = vmatprep.subr.bf16.mxu0 %v2399
    %2922 = vmatpush2.bf16.msra.mxu0 %v2398
    %2923 = vmatprep.subr.bf16.mxu0 %v2391
    %2924 = vmatpush2.bf16.msra.mxu0 %v2390
    %2925 = vmatprep.subr.bf16.mxu0 %v2383
    %2926 = vmatpush2.bf16.msra.mxu0 %v2382
    %2927 = vmatprep.subr.bf16.mxu0 %v2375
    %2928 = vmatpush2.bf16.msra.mxu0 %v2374
    %2929 = vmatprep.mubr.bf16.mxu0 %v1919
    %2930 = vmatmul.mubr.bf16.gmra.mxu0 %v1918
    %v2931 = vpop.f32.mrf.mxu0
    %v2932 = vadd.f32 %v2891, %v2931
    %v2933 = vpop.f32.mrf.mxu0
    %v2934 = vadd.f32 %v2893, %v2933
    %v2935 = vpop.f32.mrf.mxu0
    %v2936 = vpop.f32.mrf.mxu0
    %2937 = vdwg.mxu0
    %2938 = vmatprep.subr.bf16.mxu0 %v2495
    %2939 = vmatpush1.bf16.msra.mxu0 %v2494
    %2940 = vmatprep.subr.bf16.mxu0 %v2487
    %2941 = vmatpush1.bf16.msra.mxu0 %v2486
    %2942 = vmatprep.subr.bf16.mxu0 %v2479
    %2943 = vmatpush1.bf16.msra.mxu0 %v2478
    %2944 = vmatprep.subr.bf16.mxu0 %v2471
    %2945 = vmatpush1.bf16.msra.mxu0 %v2470
    %2946 = vmatprep.subr.bf16.mxu0 %v2463
    %2947 = vmatpush1.bf16.msra.mxu0 %v2462
    %2948 = vmatprep.subr.bf16.mxu0 %v2455
    %2949 = vmatpush1.bf16.msra.mxu0 %v2454
    %2950 = vmatprep.subr.bf16.mxu0 %v2447
    %2951 = vmatpush1.bf16.msra.mxu0 %v2446
    %2952 = vmatprep.subr.bf16.mxu0 %v2439
    %2953 = vmatpush1.bf16.msra.mxu0 %v2438
    %2954 = vmatprep.subr.bf16.mxu0 %v2559
    %2955 = vmatpush2.bf16.msra.mxu0 %v2558
    %2956 = vmatprep.subr.bf16.mxu0 %v2551
    %2957 = vmatpush2.bf16.msra.mxu0 %v2550
    %2958 = vmatprep.subr.bf16.mxu0 %v2543
    %2959 = vmatpush2.bf16.msra.mxu0 %v2542
    %2960 = vmatprep.subr.bf16.mxu0 %v2535
    %2961 = vmatpush2.bf16.msra.mxu0 %v2534
    %2962 = vmatprep.subr.bf16.mxu0 %v2527
    %2963 = vmatpush2.bf16.msra.mxu0 %v2526
    %2964 = vmatprep.subr.bf16.mxu0 %v2519
    %2965 = vmatpush2.bf16.msra.mxu0 %v2518
    %2966 = vmatprep.subr.bf16.mxu0 %v2511
    %2967 = vmatpush2.bf16.msra.mxu0 %v2510
    %2968 = vmatprep.subr.bf16.mxu0 %v2503
    %2969 = vmatpush2.bf16.msra.mxu0 %v2502
    %2970 = vmatprep.mubr.bf16.mxu0 %v1921
    %2971 = vmatmul.mubr.bf16.gmra.mxu0 %v1920
    %v2972 = vpop.f32.mrf.mxu0
    %v2973 = vadd.f32 %v2932, %v2972
    %v2974 = vpop.f32.mrf.mxu0
    %v2975 = vadd.f32 %v2934, %v2974
    %v2976 = vpop.f32.mrf.mxu0
    %v2977 = vpop.f32.mrf.mxu0
    %2978 = vdwg.mxu0
    %2979 = vmatprep.subr.bf16.mxu0 %v2623
    %2980 = vmatpush1.bf16.msra.mxu0 %v2622
    %2981 = vmatprep.subr.bf16.mxu0 %v2615
    %2982 = vmatpush1.bf16.msra.mxu0 %v2614
    %2983 = vmatprep.subr.bf16.mxu0 %v2607
    %2984 = vmatpush1.bf16.msra.mxu0 %v2606
    %2985 = vmatprep.subr.bf16.mxu0 %v2599
    %2986 = vmatpush1.bf16.msra.mxu0 %v2598
    %2987 = vmatprep.subr.bf16.mxu0 %v2591
    %2988 = vmatpush1.bf16.msra.mxu0 %v2590
    %2989 = vmatprep.subr.bf16.mxu0 %v2583
    %2990 = vmatpush1.bf16.msra.mxu0 %v2582
    %2991 = vmatprep.subr.bf16.mxu0 %v2575
    %2992 = vmatpush1.bf16.msra.mxu0 %v2574
    %2993 = vmatprep.subr.bf16.mxu0 %v2567
    %2994 = vmatpush1.bf16.msra.mxu0 %v2566
    %2995 = vmatprep.subr.bf16.mxu0 %v2687
    %2996 = vmatpush2.bf16.msra.mxu0 %v2686
    %2997 = vmatprep.subr.bf16.mxu0 %v2679
    %2998 = vmatpush2.bf16.msra.mxu0 %v2678
    %2999 = vmatprep.subr.bf16.mxu0 %v2671
    %3000 = vmatpush2.bf16.msra.mxu0 %v2670
    %3001 = vmatprep.subr.bf16.mxu0 %v2663
    %3002 = vmatpush2.bf16.msra.mxu0 %v2662
    %3003 = vmatprep.subr.bf16.mxu0 %v2655
    %3004 = vmatpush2.bf16.msra.mxu0 %v2654
    %3005 = vmatprep.subr.bf16.mxu0 %v2647
    %3006 = vmatpush2.bf16.msra.mxu0 %v2646
    %3007 = vmatprep.subr.bf16.mxu0 %v2639
    %3008 = vmatpush2.bf16.msra.mxu0 %v2638
    %3009 = vmatprep.subr.bf16.mxu0 %v2631
    %3010 = vmatpush2.bf16.msra.mxu0 %v2630
    %3011 = vmatprep.mubr.bf16.mxu0 %v1923
    %3012 = vmatmul.mubr.bf16.gmra.mxu0 %v1922
    %v3013 = vpop.f32.mrf.mxu0
    %v3014 = vadd.f32 %v2973, %v3013
    %v3015 = vpop.f32.mrf.mxu0
    %v3016 = vadd.f32 %v2975, %v3015
    %v3017 = vpop.f32.mrf.mxu0
    %v3018 = vpop.f32.mrf.mxu0
    %3019 = vdwg.mxu0
    %3020 = vmatprep.subr.bf16.mxu0 %v2241
    %3021 = vmatpush1.bf16.msra.mxu0 %v2240
    %3022 = vmatprep.subr.bf16.mxu0 %v2233
    %3023 = vmatpush1.bf16.msra.mxu0 %v2232
    %3024 = vmatprep.subr.bf16.mxu0 %v2225
    %3025 = vmatpush1.bf16.msra.mxu0 %v2224
    %3026 = vmatprep.subr.bf16.mxu0 %v2217
    %3027 = vmatpush1.bf16.msra.mxu0 %v2216
    %3028 = vmatprep.subr.bf16.mxu0 %v2209
    %3029 = vmatpush1.bf16.msra.mxu0 %v2208
    %3030 = vmatprep.subr.bf16.mxu0 %v2201
    %3031 = vmatpush1.bf16.msra.mxu0 %v2200
    %3032 = vmatprep.subr.bf16.mxu0 %v2193
    %3033 = vmatpush1.bf16.msra.mxu0 %v2192
    %3034 = vmatprep.subr.bf16.mxu0 %v2185
    %3035 = vmatpush1.bf16.msra.mxu0 %v2184
    %3036 = vmatprep.subr.bf16.mxu0 %v2305
    %3037 = vmatpush2.bf16.msra.mxu0 %v2304
    %3038 = vmatprep.subr.bf16.mxu0 %v2297
    %3039 = vmatpush2.bf16.msra.mxu0 %v2296
    %3040 = vmatprep.subr.bf16.mxu0 %v2289
    %3041 = vmatpush2.bf16.msra.mxu0 %v2288
    %3042 = vmatprep.subr.bf16.mxu0 %v2281
    %3043 = vmatpush2.bf16.msra.mxu0 %v2280
    %3044 = vmatprep.subr.bf16.mxu0 %v2273
    %3045 = vmatpush2.bf16.msra.mxu0 %v2272
    %3046 = vmatprep.subr.bf16.mxu0 %v2265
    %3047 = vmatpush2.bf16.msra.mxu0 %v2264
    %3048 = vmatprep.subr.bf16.mxu0 %v2257
    %3049 = vmatpush2.bf16.msra.mxu0 %v2256
    %3050 = vmatprep.subr.bf16.mxu0 %v2249
    %3051 = vmatpush2.bf16.msra.mxu0 %v2248
    %3052 = vmatprep.mubr.bf16.mxu0 %v1917
    %3053 = vmatmul.mubr.bf16.gmra.mxu0 %v1916
    %v3054 = vpop.f32.mrf.mxu0
    %v3055 = vadd.f32 0.0, %v3054
    %v3056 = vpop.f32.mrf.mxu0
    %v3057 = vadd.f32 0.0, %v3056
    %v3058 = vpop.f32.mrf.mxu0
    %v3059 = vpop.f32.mrf.mxu0
    %3060 = vdwg.mxu0
    %3061 = vmatprep.subr.bf16.mxu0 %v2369
    %3062 = vmatpush1.bf16.msra.mxu0 %v2368
    %3063 = vmatprep.subr.bf16.mxu0 %v2361
    %3064 = vmatpush1.bf16.msra.mxu0 %v2360
    %3065 = vmatprep.subr.bf16.mxu0 %v2353
    %3066 = vmatpush1.bf16.msra.mxu0 %v2352
    %3067 = vmatprep.subr.bf16.mxu0 %v2345
    %3068 = vmatpush1.bf16.msra.mxu0 %v2344
    %3069 = vmatprep.subr.bf16.mxu0 %v2337
    %3070 = vmatpush1.bf16.msra.mxu0 %v2336
    %3071 = vmatprep.subr.bf16.mxu0 %v2329
    %3072 = vmatpush1.bf16.msra.mxu0 %v2328
    %3073 = vmatprep.subr.bf16.mxu0 %v2321
    %3074 = vmatpush1.bf16.msra.mxu0 %v2320
    %3075 = vmatprep.subr.bf16.mxu0 %v2313
    %3076 = vmatpush1.bf16.msra.mxu0 %v2312
    %3077 = vmatprep.subr.bf16.mxu0 %v2433
    %3078 = vmatpush2.bf16.msra.mxu0 %v2432
    %3079 = vmatprep.subr.bf16.mxu0 %v2425
    %3080 = vmatpush2.bf16.msra.mxu0 %v2424
    %3081 = vmatprep.subr.bf16.mxu0 %v2417
    %3082 = vmatpush2.bf16.msra.mxu0 %v2416
    %3083 = vmatprep.subr.bf16.mxu0 %v2409
    %3084 = vmatpush2.bf16.msra.mxu0 %v2408
    %3085 = vmatprep.subr.bf16.mxu0 %v2401
    %3086 = vmatpush2.bf16.msra.mxu0 %v2400
    %3087 = vmatprep.subr.bf16.mxu0 %v2393
    %3088 = vmatpush2.bf16.msra.mxu0 %v2392
    %3089 = vmatprep.subr.bf16.mxu0 %v2385
    %3090 = vmatpush2.bf16.msra.mxu0 %v2384
    %3091 = vmatprep.subr.bf16.mxu0 %v2377
    %3092 = vmatpush2.bf16.msra.mxu0 %v2376
    %3093 = vmatprep.mubr.bf16.mxu0 %v1919
    %3094 = vmatmul.mubr.bf16.gmra.mxu0 %v1918
    %v3095 = vpop.f32.mrf.mxu0
    %v3096 = vadd.f32 %v3055, %v3095
    %v3097 = vpop.f32.mrf.mxu0
    %v3098 = vadd.f32 %v3057, %v3097
    %v3099 = vpop.f32.mrf.mxu0
    %v3100 = vpop.f32.mrf.mxu0
    %3101 = vdwg.mxu0
    %3102 = vmatprep.subr.bf16.mxu0 %v2497
    %3103 = vmatpush1.bf16.msra.mxu0 %v2496
    %3104 = vmatprep.subr.bf16.mxu0 %v2489
    %3105 = vmatpush1.bf16.msra.mxu0 %v2488
    %3106 = vmatprep.subr.bf16.mxu0 %v2481
    %3107 = vmatpush1.bf16.msra.mxu0 %v2480
    %3108 = vmatprep.subr.bf16.mxu0 %v2473
    %3109 = vmatpush1.bf16.msra.mxu0 %v2472
    %3110 = vmatprep.subr.bf16.mxu0 %v2465
    %3111 = vmatpush1.bf16.msra.mxu0 %v2464
    %3112 = vmatprep.subr.bf16.mxu0 %v2457
    %3113 = vmatpush1.bf16.msra.mxu0 %v2456
    %3114 = vmatprep.subr.bf16.mxu0 %v2449
    %3115 = vmatpush1.bf16.msra.mxu0 %v2448
    %3116 = vmatprep.subr.bf16.mxu0 %v2441
    %3117 = vmatpush1.bf16.msra.mxu0 %v2440
    %3118 = vmatprep.subr.bf16.mxu0 %v2561
    %3119 = vmatpush2.bf16.msra.mxu0 %v2560
    %3120 = vmatprep.subr.bf16.mxu0 %v2553
    %3121 = vmatpush2.bf16.msra.mxu0 %v2552
    %3122 = vmatprep.subr.bf16.mxu0 %v2545
    %3123 = vmatpush2.bf16.msra.mxu0 %v2544
    %3124 = vmatprep.subr.bf16.mxu0 %v2537
    %3125 = vmatpush2.bf16.msra.mxu0 %v2536
    %3126 = vmatprep.subr.bf16.mxu0 %v2529
    %3127 = vmatpush2.bf16.msra.mxu0 %v2528
    %3128 = vmatprep.subr.bf16.mxu0 %v2521
    %3129 = vmatpush2.bf16.msra.mxu0 %v2520
    %3130 = vmatprep.subr.bf16.mxu0 %v2513
    %3131 = vmatpush2.bf16.msra.mxu0 %v2512
    %3132 = vmatprep.subr.bf16.mxu0 %v2505
    %3133 = vmatpush2.bf16.msra.mxu0 %v2504
    %3134 = vmatprep.mubr.bf16.mxu0 %v1921
    %3135 = vmatmul.mubr.bf16.gmra.mxu0 %v1920
    %v3136 = vpop.f32.mrf.mxu0
    %v3137 = vadd.f32 %v3096, %v3136
    %v3138 = vpop.f32.mrf.mxu0
    %v3139 = vadd.f32 %v3098, %v3138
    %v3140 = vpop.f32.mrf.mxu0
    %v3141 = vpop.f32.mrf.mxu0
    %3142 = vdwg.mxu0
    %3143 = vmatprep.subr.bf16.mxu0 %v2625
    %3144 = vmatpush1.bf16.msra.mxu0 %v2624
    %3145 = vmatprep.subr.bf16.mxu0 %v2617
    %3146 = vmatpush1.bf16.msra.mxu0 %v2616
    %3147 = vmatprep.subr.bf16.mxu0 %v2609
    %3148 = vmatpush1.bf16.msra.mxu0 %v2608
    %3149 = vmatprep.subr.bf16.mxu0 %v2601
    %3150 = vmatpush1.bf16.msra.mxu0 %v2600
    %3151 = vmatprep.subr.bf16.mxu0 %v2593
    %3152 = vmatpush1.bf16.msra.mxu0 %v2592
    %3153 = vmatprep.subr.bf16.mxu0 %v2585
    %3154 = vmatpush1.bf16.msra.mxu0 %v2584
    %3155 = vmatprep.subr.bf16.mxu0 %v2577
    %3156 = vmatpush1.bf16.msra.mxu0 %v2576
    %3157 = vmatprep.subr.bf16.mxu0 %v2569
    %3158 = vmatpush1.bf16.msra.mxu0 %v2568
    %3159 = vmatprep.subr.bf16.mxu0 %v2689
    %3160 = vmatpush2.bf16.msra.mxu0 %v2688
    %3161 = vmatprep.subr.bf16.mxu0 %v2681
    %3162 = vmatpush2.bf16.msra.mxu0 %v2680
    %3163 = vmatprep.subr.bf16.mxu0 %v2673
    %3164 = vmatpush2.bf16.msra.mxu0 %v2672
    %3165 = vmatprep.subr.bf16.mxu0 %v2665
    %3166 = vmatpush2.bf16.msra.mxu0 %v2664
    %3167 = vmatprep.subr.bf16.mxu0 %v2657
    %3168 = vmatpush2.bf16.msra.mxu0 %v2656
    %3169 = vmatprep.subr.bf16.mxu0 %v2649
    %3170 = vmatpush2.bf16.msra.mxu0 %v2648
    %3171 = vmatprep.subr.bf16.mxu0 %v2641
    %3172 = vmatpush2.bf16.msra.mxu0 %v2640
    %3173 = vmatprep.subr.bf16.mxu0 %v2633
    %3174 = vmatpush2.bf16.msra.mxu0 %v2632
    %3175 = vmatprep.mubr.bf16.mxu0 %v1923
    %3176 = vmatmul.mubr.bf16.gmra.mxu0 %v1922
    %v3177 = vpop.f32.mrf.mxu0
    %v3178 = vadd.f32 %v3137, %v3177
    %v3179 = vpop.f32.mrf.mxu0
    %v3180 = vadd.f32 %v3139, %v3179
    %v3181 = vpop.f32.mrf.mxu0
    %v3182 = vpop.f32.mrf.mxu0
    %3183 = vdwg.mxu0
    %3184 = vmatprep.subr.bf16.mxu0 %v2243
    %3185 = vmatpush1.bf16.msra.mxu0 %v2242
    %3186 = vmatprep.subr.bf16.mxu0 %v2235
    %3187 = vmatpush1.bf16.msra.mxu0 %v2234
    %3188 = vmatprep.subr.bf16.mxu0 %v2227
    %3189 = vmatpush1.bf16.msra.mxu0 %v2226
    %3190 = vmatprep.subr.bf16.mxu0 %v2219
    %3191 = vmatpush1.bf16.msra.mxu0 %v2218
    %3192 = vmatprep.subr.bf16.mxu0 %v2211
    %3193 = vmatpush1.bf16.msra.mxu0 %v2210
    %3194 = vmatprep.subr.bf16.mxu0 %v2203
    %3195 = vmatpush1.bf16.msra.mxu0 %v2202
    %3196 = vmatprep.subr.bf16.mxu0 %v2195
    %3197 = vmatpush1.bf16.msra.mxu0 %v2194
    %3198 = vmatprep.subr.bf16.mxu0 %v2187
    %3199 = vmatpush1.bf16.msra.mxu0 %v2186
    %3200 = vmatprep.subr.bf16.mxu0 %v2307
    %3201 = vmatpush2.bf16.msra.mxu0 %v2306
    %3202 = vmatprep.subr.bf16.mxu0 %v2299
    %3203 = vmatpush2.bf16.msra.mxu0 %v2298
    %3204 = vmatprep.subr.bf16.mxu0 %v2291
    %3205 = vmatpush2.bf16.msra.mxu0 %v2290
    %3206 = vmatprep.subr.bf16.mxu0 %v2283
    %3207 = vmatpush2.bf16.msra.mxu0 %v2282
    %3208 = vmatprep.subr.bf16.mxu0 %v2275
    %3209 = vmatpush2.bf16.msra.mxu0 %v2274
    %3210 = vmatprep.subr.bf16.mxu0 %v2267
    %3211 = vmatpush2.bf16.msra.mxu0 %v2266
    %3212 = vmatprep.subr.bf16.mxu0 %v2259
    %3213 = vmatpush2.bf16.msra.mxu0 %v2258
    %3214 = vmatprep.subr.bf16.mxu0 %v2251
    %3215 = vmatpush2.bf16.msra.mxu0 %v2250
    %3216 = vmatprep.mubr.bf16.mxu0 %v1917
    %3217 = vmatmul.mubr.bf16.gmra.mxu0 %v1916
    %v3218 = vpop.f32.mrf.mxu0
    %v3219 = vadd.f32 0.0, %v3218
    %v3220 = vpop.f32.mrf.mxu0
    %v3221 = vadd.f32 0.0, %v3220
    %v3222 = vpop.f32.mrf.mxu0
    %v3223 = vpop.f32.mrf.mxu0
    %3224 = vdwg.mxu0
    %3225 = vmatprep.subr.bf16.mxu0 %v2371
    %3226 = vmatpush1.bf16.msra.mxu0 %v2370
    %3227 = vmatprep.subr.bf16.mxu0 %v2363
    %3228 = vmatpush1.bf16.msra.mxu0 %v2362
    %3229 = vmatprep.subr.bf16.mxu0 %v2355
    %3230 = vmatpush1.bf16.msra.mxu0 %v2354
    %3231 = vmatprep.subr.bf16.mxu0 %v2347
    %3232 = vmatpush1.bf16.msra.mxu0 %v2346
    %3233 = vmatprep.subr.bf16.mxu0 %v2339
    %3234 = vmatpush1.bf16.msra.mxu0 %v2338
    %3235 = vmatprep.subr.bf16.mxu0 %v2331
    %3236 = vmatpush1.bf16.msra.mxu0 %v2330
    %3237 = vmatprep.subr.bf16.mxu0 %v2323
    %3238 = vmatpush1.bf16.msra.mxu0 %v2322
    %3239 = vmatprep.subr.bf16.mxu0 %v2315
    %3240 = vmatpush1.bf16.msra.mxu0 %v2314
    %3241 = vmatprep.subr.bf16.mxu0 %v2435
    %3242 = vmatpush2.bf16.msra.mxu0 %v2434
    %3243 = vmatprep.subr.bf16.mxu0 %v2427
    %3244 = vmatpush2.bf16.msra.mxu0 %v2426
    %3245 = vmatprep.subr.bf16.mxu0 %v2419
    %3246 = vmatpush2.bf16.msra.mxu0 %v2418
    %3247 = vmatprep.subr.bf16.mxu0 %v2411
    %3248 = vmatpush2.bf16.msra.mxu0 %v2410
    %3249 = vmatprep.subr.bf16.mxu0 %v2403
    %3250 = vmatpush2.bf16.msra.mxu0 %v2402
    %3251 = vmatprep.subr.bf16.mxu0 %v2395
    %3252 = vmatpush2.bf16.msra.mxu0 %v2394
    %3253 = vmatprep.subr.bf16.mxu0 %v2387
    %3254 = vmatpush2.bf16.msra.mxu0 %v2386
    %3255 = vmatprep.subr.bf16.mxu0 %v2379
    %3256 = vmatpush2.bf16.msra.mxu0 %v2378
    %3257 = vmatprep.mubr.bf16.mxu0 %v1919
    %3258 = vmatmul.mubr.bf16.gmra.mxu0 %v1918
    %v3259 = vpop.f32.mrf.mxu0
    %v3260 = vadd.f32 %v3219, %v3259
    %v3261 = vpop.f32.mrf.mxu0
    %v3262 = vadd.f32 %v3221, %v3261
    %v3263 = vpop.f32.mrf.mxu0
    %v3264 = vpop.f32.mrf.mxu0
    %3265 = vdwg.mxu0
    %3266 = vmatprep.subr.bf16.mxu0 %v2499
    %3267 = vmatpush1.bf16.msra.mxu0 %v2498
    %3268 = vmatprep.subr.bf16.mxu0 %v2491
    %3269 = vmatpush1.bf16.msra.mxu0 %v2490
    %3270 = vmatprep.subr.bf16.mxu0 %v2483
    %3271 = vmatpush1.bf16.msra.mxu0 %v2482
    %3272 = vmatprep.subr.bf16.mxu0 %v2475
    %3273 = vmatpush1.bf16.msra.mxu0 %v2474
    %3274 = vmatprep.subr.bf16.mxu0 %v2467
    %3275 = vmatpush1.bf16.msra.mxu0 %v2466
    %3276 = vmatprep.subr.bf16.mxu0 %v2459
    %3277 = vmatpush1.bf16.msra.mxu0 %v2458
    %3278 = vmatprep.subr.bf16.mxu0 %v2451
    %3279 = vmatpush1.bf16.msra.mxu0 %v2450
    %3280 = vmatprep.subr.bf16.mxu0 %v2443
    %3281 = vmatpush1.bf16.msra.mxu0 %v2442
    %3282 = vmatprep.subr.bf16.mxu0 %v2563
    %3283 = vmatpush2.bf16.msra.mxu0 %v2562
    %3284 = vmatprep.subr.bf16.mxu0 %v2555
    %3285 = vmatpush2.bf16.msra.mxu0 %v2554
    %3286 = vmatprep.subr.bf16.mxu0 %v2547
    %3287 = vmatpush2.bf16.msra.mxu0 %v2546
    %3288 = vmatprep.subr.bf16.mxu0 %v2539
    %3289 = vmatpush2.bf16.msra.mxu0 %v2538
    %3290 = vmatprep.subr.bf16.mxu0 %v2531
    %3291 = vmatpush2.bf16.msra.mxu0 %v2530
    %3292 = vmatprep.subr.bf16.mxu0 %v2523
    %3293 = vmatpush2.bf16.msra.mxu0 %v2522
    %3294 = vmatprep.subr.bf16.mxu0 %v2515
    %3295 = vmatpush2.bf16.msra.mxu0 %v2514
    %3296 = vmatprep.subr.bf16.mxu0 %v2507
    %3297 = vmatpush2.bf16.msra.mxu0 %v2506
    %3298 = vmatprep.mubr.bf16.mxu0 %v1921
    %3299 = vmatmul.mubr.bf16.gmra.mxu0 %v1920
    %v3300 = vpop.f32.mrf.mxu0
    %v3301 = vadd.f32 %v3260, %v3300
    %v3302 = vpop.f32.mrf.mxu0
    %v3303 = vadd.f32 %v3262, %v3302
    %v3304 = vpop.f32.mrf.mxu0
    %v3305 = vpop.f32.mrf.mxu0
    %3306 = vdwg.mxu0
    %3307 = vmatprep.subr.bf16.mxu0 %v2627
    %3308 = vmatpush1.bf16.msra.mxu0 %v2626
    %3309 = vmatprep.subr.bf16.mxu0 %v2619
    %3310 = vmatpush1.bf16.msra.mxu0 %v2618
    %3311 = vmatprep.subr.bf16.mxu0 %v2611
    %3312 = vmatpush1.bf16.msra.mxu0 %v2610
    %3313 = vmatprep.subr.bf16.mxu0 %v2603
    %3314 = vmatpush1.bf16.msra.mxu0 %v2602
    %3315 = vmatprep.subr.bf16.mxu0 %v2595
    %3316 = vmatpush1.bf16.msra.mxu0 %v2594
    %3317 = vmatprep.subr.bf16.mxu0 %v2587
    %3318 = vmatpush1.bf16.msra.mxu0 %v2586
    %3319 = vmatprep.subr.bf16.mxu0 %v2579
    %3320 = vmatpush1.bf16.msra.mxu0 %v2578
    %3321 = vmatprep.subr.bf16.mxu0 %v2571
    %3322 = vmatpush1.bf16.msra.mxu0 %v2570
    %3323 = vmatprep.subr.bf16.mxu0 %v2691
    %3324 = vmatpush2.bf16.msra.mxu0 %v2690
    %3325 = vmatprep.subr.bf16.mxu0 %v2683
    %3326 = vmatpush2.bf16.msra.mxu0 %v2682
    %3327 = vmatprep.subr.bf16.mxu0 %v2675
    %3328 = vmatpush2.bf16.msra.mxu0 %v2674
    %3329 = vmatprep.subr.bf16.mxu0 %v2667
    %3330 = vmatpush2.bf16.msra.mxu0 %v2666
    %3331 = vmatprep.subr.bf16.mxu0 %v2659
    %3332 = vmatpush2.bf16.msra.mxu0 %v2658
    %3333 = vmatprep.subr.bf16.mxu0 %v2651
    %3334 = vmatpush2.bf16.msra.mxu0 %v2650
    %3335 = vmatprep.subr.bf16.mxu0 %v2643
    %3336 = vmatpush2.bf16.msra.mxu0 %v2642
    %3337 = vmatprep.subr.bf16.mxu0 %v2635
    %3338 = vmatpush2.bf16.msra.mxu0 %v2634
    %3339 = vmatprep.mubr.bf16.mxu0 %v1923
    %3340 = vmatmul.mubr.bf16.gmra.mxu0 %v1922
    %v3341 = vpop.f32.mrf.mxu0
    %v3342 = vadd.f32 %v3301, %v3341
    %v3343 = vpop.f32.mrf.mxu0
    %v3344 = vadd.f32 %v3303, %v3343
    %v3345 = vpop.f32.mrf.mxu0
    %v3346 = vpop.f32.mrf.mxu0
    %3347 = vdwg.mxu0
    %v3348 = vrot.slane %v2850, 4
    %v3349 = vadd.f32 %v2850, %v3348
    %v3350 = vrot.slane %v3349, 2
    %v3351 = vadd.f32 %v3349, %v3350
    %v3352 = vrot.slane %v3351, 1
    %v3353 = vadd.f32 %v3351, %v3352
    %v3354 = vrot.slane %v2852, 4
    %v3355 = vadd.f32 %v2852, %v3354
    %v3356 = vrot.slane %v3355, 2
    %v3357 = vadd.f32 %v3355, %v3356
    %v3358 = vrot.slane %v3357, 1
    %v3359 = vadd.f32 %v3357, %v3358
    %v3360 = vrot.slane %v3014, 4
    %v3361 = vadd.f32 %v3014, %v3360
    %v3362 = vrot.slane %v3361, 2
    %v3363 = vadd.f32 %v3361, %v3362
    %v3364 = vrot.slane %v3363, 1
    %v3365 = vadd.f32 %v3363, %v3364
    %v3366 = vrot.slane %v3016, 4
    %v3367 = vadd.f32 %v3016, %v3366
    %v3368 = vrot.slane %v3367, 2
    %v3369 = vadd.f32 %v3367, %v3368
    %v3370 = vrot.slane %v3369, 1
    %v3371 = vadd.f32 %v3369, %v3370
    %v3372 = vrot.slane %v3178, 4
    %v3373 = vadd.f32 %v3178, %v3372
    %v3374 = vrot.slane %v3373, 2
    %v3375 = vadd.f32 %v3373, %v3374
    %v3376 = vrot.slane %v3375, 1
    %v3377 = vadd.f32 %v3375, %v3376
    %v3378 = vrot.slane %v3180, 4
    %v3379 = vadd.f32 %v3180, %v3378
    %v3380 = vrot.slane %v3379, 2
    %v3381 = vadd.f32 %v3379, %v3380
    %v3382 = vrot.slane %v3381, 1
    %v3383 = vadd.f32 %v3381, %v3382
    %v3384 = vrot.slane %v3342, 4
    %v3385 = vadd.f32 %v3342, %v3384
    %v3386 = vrot.slane %v3385, 2
    %v3387 = vadd.f32 %v3385, %v3386
    %v3388 = vrot.slane %v3387, 1
    %v3389 = vadd.f32 %v3387, %v3388
    %v3390 = vrot.slane %v3344, 4
    %v3391 = vadd.f32 %v3344, %v3390
    %v3392 = vrot.slane %v3391, 2
    %v3393 = vadd.f32 %v3391, %v3392
    %v3394 = vrot.slane %v3393, 1
    %v3395 = vadd.f32 %v3393, %v3394
    %v3396 = vmul.f32 %v3353, %v1607
    %v3397 = vmul.f32 %v3359, %v1607
    %v3398 = vmul.f32 %v3365, %v1607
    %v3399 = vmul.f32 %v3371, %v1607
    %v3400 = vmul.f32 %v3377, %v1607
    %v3401 = vmul.f32 %v3383, %v1607
    %v3402 = vmul.f32 %v3389, %v1607
    %v3403 = vmul.f32 %v3395, %v1607
    %v3404 = vsub.f32 %v2850, %v3396
    %v3405 = vsub.f32 %v2852, %v3397
    %v3406 = vsub.f32 %v3014, %v3398
    %v3407 = vsub.f32 %v3016, %v3399
    %v3408 = vsub.f32 %v3178, %v3400
    %v3409 = vsub.f32 %v3180, %v3401
    %v3410 = vsub.f32 %v3342, %v3402
    %v3411 = vsub.f32 %v3344, %v3403
    %v3412 = vmul.f32 %v3404, %v3404
    %v3413 = vmul.f32 %v3405, %v3405
    %v3414 = vmul.f32 %v3406, %v3406
    %v3415 = vmul.f32 %v3407, %v3407
    %v3416 = vmul.f32 %v3408, %v3408
    %v3417 = vmul.f32 %v3409, %v3409
    %v3418 = vmul.f32 %v3410, %v3410
    %v3419 = vmul.f32 %v3411, %v3411
    %v3420 = vrot.slane %v3412, 4
    %v3421 = vadd.f32 %v3412, %v3420
    %v3422 = vrot.slane %v3421, 2
    %v3423 = vadd.f32 %v3421, %v3422
    %v3424 = vrot.slane %v3423, 1
    %v3425 = vadd.f32 %v3423, %v3424
    %v3426 = vrot.slane %v3413, 4
    %v3427 = vadd.f32 %v3413, %v3426
    %v3428 = vrot.slane %v3427, 2
    %v3429 = vadd.f32 %v3427, %v3428
    %v3430 = vrot.slane %v3429, 1
    %v3431 = vadd.f32 %v3429, %v3430
    %v3432 = vrot.slane %v3414, 4
    %v3433 = vadd.f32 %v3414, %v3432
    %v3434 = vrot.slane %v3433, 2
    %v3435 = vadd.f32 %v3433, %v3434
    %v3436 = vrot.slane %v3435, 1
    %v3437 = vadd.f32 %v3435, %v3436
    %v3438 = vrot.slane %v3415, 4
    %v3439 = vadd.f32 %v3415, %v3438
    %v3440 = vrot.slane %v3439, 2
    %v3441 = vadd.f32 %v3439, %v3440
    %v3442 = vrot.slane %v3441, 1
    %v3443 = vadd.f32 %v3441, %v3442
    %v3444 = vrot.slane %v3416, 4
    %v3445 = vadd.f32 %v3416, %v3444
    %v3446 = vrot.slane %v3445, 2
    %v3447 = vadd.f32 %v3445, %v3446
    %v3448 = vrot.slane %v3447, 1
    %v3449 = vadd.f32 %v3447, %v3448
    %v3450 = vrot.slane %v3417, 4
    %v3451 = vadd.f32 %v3417, %v3450
    %v3452 = vrot.slane %v3451, 2
    %v3453 = vadd.f32 %v3451, %v3452
    %v3454 = vrot.slane %v3453, 1
    %v3455 = vadd.f32 %v3453, %v3454
    %v3456 = vrot.slane %v3418, 4
    %v3457 = vadd.f32 %v3418, %v3456
    %v3458 = vrot.slane %v3457, 2
    %v3459 = vadd.f32 %v3457, %v3458
    %v3460 = vrot.slane %v3459, 1
    %v3461 = vadd.f32 %v3459, %v3460
    %v3462 = vrot.slane %v3419, 4
    %v3463 = vadd.f32 %v3419, %v3462
    %v3464 = vrot.slane %v3463, 2
    %v3465 = vadd.f32 %v3463, %v3464
    %v3466 = vrot.slane %v3465, 1
    %v3467 = vadd.f32 %v3465, %v3466
    %v3468 = vmul.f32 %v3425, %v1607
    %v3469 = vmul.f32 %v3431, %v1607
    %v3470 = vmul.f32 %v3437, %v1607
    %v3471 = vmul.f32 %v3443, %v1607
    %v3472 = vmul.f32 %v3449, %v1607
    %v3473 = vmul.f32 %v3455, %v1607
    %v3474 = vmul.f32 %v3461, %v1607
    %v3475 = vmul.f32 %v3467, %v1607
    %v3476 = vmul.f32 %v3468, %v1688
    %v3477 = vmul.f32 %v3469, %v1689
    %v3478 = vmul.f32 %v3470, %v1690
    %v3479 = vmul.f32 %v3471, %v1691
    %v3480 = vmul.f32 %v3472, %v1692
    %v3481 = vmul.f32 %v3473, %v1693
    %v3482 = vmul.f32 %v3474, %v1694
    %v3483 = vmul.f32 %v3475, %v1695
    %v3484 = vadd.f32 %v3476, 1e-05
    %v3485 = vadd.f32 %v3477, 1e-05
    %v3486 = vadd.f32 %v3478, 1e-05
    %v3487 = vadd.f32 %v3479, 1e-05
    %v3488 = vadd.f32 %v3480, 1e-05
    %v3489 = vadd.f32 %v3481, 1e-05
    %v3490 = vadd.f32 %v3482, 1e-05
    %v3491 = vadd.f32 %v3483, 1e-05
    %v3492 = vrsqrt.pop %v3484
    %v3493 = vrsqrt.pop %v3485
    %v3494 = vrsqrt.pop %v3486
    %v3495 = vrsqrt.pop %v3487
    %v3496 = vrsqrt.pop %v3488
    %v3497 = vrsqrt.pop %v3489
    %v3498 = vrsqrt.pop %v3490
    %v3499 = vrsqrt.pop %v3491
    %v3508 = vrot.slane %v3492, 3
    %v3509 = vrot.slane %v3493, 3
    %v3510 = vrot.slane %v3494, 3
    %v3511 = vrot.slane %v3495, 3
    %v3512 = vrot.slane %v3496, 3
    %v3513 = vrot.slane %v3497, 3
    %v3514 = vrot.slane %v3498, 3
    %v3515 = vrot.slane %v3499, 3
    %v3524 = vmul.f32 %v96, %v3508
    %v3525 = vmul.f32 %v97, %v3509
    %v3526 = vmul.f32 %v98, %v3510
    %v3527 = vmul.f32 %v99, %v3511
    %v3528 = vmul.f32 %v100, %v3512
    %v3529 = vmul.f32 %v101, %v3513
    %v3530 = vmul.f32 %v102, %v3514
    %v3531 = vmul.f32 %v103, %v3515
    %v3540 = vrot.slane %v3524, 5
    %v3541 = vrot.slane %v3525, 5
    %v3542 = vrot.slane %v3526, 5
    %v3543 = vrot.slane %v3527, 5
    %v3544 = vrot.slane %v3528, 5
    %v3545 = vrot.slane %v3529, 5
    %v3546 = vrot.slane %v3530, 5
    %v3547 = vrot.slane %v3531, 5
    %v3556 = vmul.f32 %v96, %v3540
    %v3557 = vmul.f32 %v97, %v3541
    %v3558 = vmul.f32 %v98, %v3542
    %v3559 = vmul.f32 %v99, %v3543
    %v3560 = vmul.f32 %v100, %v3544
    %v3561 = vmul.f32 %v101, %v3545
    %v3562 = vmul.f32 %v102, %v3546
    %v3563 = vmul.f32 %v103, %v3547
    %v3564 = vlaneseq
    %v3565 = vshrl.u32 %v3564, 7
    %v3566 = vsub.s32 5, %v3565
    %v3567 = vrot.slane %v3556, %v3566
    %v3568 = vlaneseq
    %v3569 = vshrl.u32 %v3568, 7
    %v3570 = vsub.s32 5, %v3569
    %v3571 = vrot.slane %v3557, %v3570
    %v3572 = vlaneseq
    %v3573 = vshrl.u32 %v3572, 7
    %v3574 = vsub.s32 5, %v3573
    %v3575 = vrot.slane %v3558, %v3574
    %v3576 = vlaneseq
    %v3577 = vshrl.u32 %v3576, 7
    %v3578 = vsub.s32 5, %v3577
    %v3579 = vrot.slane %v3559, %v3578
    %v3580 = vlaneseq
    %v3581 = vshrl.u32 %v3580, 7
    %v3582 = vsub.s32 5, %v3581
    %v3583 = vrot.slane %v3560, %v3582
    %v3584 = vlaneseq
    %v3585 = vshrl.u32 %v3584, 7
    %v3586 = vsub.s32 5, %v3585
    %v3587 = vrot.slane %v3561, %v3586
    %v3588 = vlaneseq
    %v3589 = vshrl.u32 %v3588, 7
    %v3590 = vsub.s32 5, %v3589
    %v3591 = vrot.slane %v3562, %v3590
    %v3592 = vlaneseq
    %v3593 = vshrl.u32 %v3592, 7
    %v3594 = vsub.s32 5, %v3593
    %v3595 = vrot.slane %v3563, %v3594
    %v3596 = vmul.f32 %v2850, %v3567
    %v3597 = vmul.f32 %v2852, %v3571
    %v3598 = vmul.f32 %v3014, %v3575
    %v3599 = vmul.f32 %v3016, %v3579
    %v3600 = vmul.f32 %v3178, %v3583
    %v3601 = vmul.f32 %v3180, %v3587
    %v3602 = vmul.f32 %v3342, %v3591
    %v3603 = vmul.f32 %v3344, %v3595
    %v3604 = vmul.f32 %v3396, %v3556
    %v3605 = vmul.f32 %v3397, %v3557
    %v3606 = vmul.f32 %v3398, %v3558
    %v3607 = vmul.f32 %v3399, %v3559
    %v3608 = vmul.f32 %v3400, %v3560
    %v3609 = vmul.f32 %v3401, %v3561
    %v3610 = vmul.f32 %v3402, %v3562
    %v3611 = vmul.f32 %v3403, %v3563
    %v3620 = vrot.slane %v3604, 2
    %v3621 = vrot.slane %v3605, 2
    %v3622 = vrot.slane %v3606, 2
    %v3623 = vrot.slane %v3607, 2
    %v3624 = vrot.slane %v3608, 2
    %v3625 = vrot.slane %v3609, 2
    %v3626 = vrot.slane %v3610, 2
    %v3627 = vrot.slane %v3611, 2
    %v3636 = vsub.f32 %v96, %v3620
    %v3637 = vsub.f32 %v97, %v3621
    %v3638 = vsub.f32 %v98, %v3622
    %v3639 = vsub.f32 %v99, %v3623
    %v3640 = vsub.f32 %v100, %v3624
    %v3641 = vsub.f32 %v101, %v3625
    %v3642 = vsub.f32 %v102, %v3626
    %v3643 = vsub.f32 %v103, %v3627
    %v3644 = vlaneseq
    %v3645 = vshrl.u32 %v3644, 7
    %v3646 = vsub.s32 3, %v3645
    %v3647 = vrot.slane %v3636, %v3646
    %v3648 = vlaneseq
    %v3649 = vshrl.u32 %v3648, 7
    %v3650 = vsub.s32 3, %v3649
    %v3651 = vrot.slane %v3637, %v3650
    %v3652 = vlaneseq
    %v3653 = vshrl.u32 %v3652, 7
    %v3654 = vsub.s32 3, %v3653
    %v3655 = vrot.slane %v3638, %v3654
    %v3656 = vlaneseq
    %v3657 = vshrl.u32 %v3656, 7
    %v3658 = vsub.s32 3, %v3657
    %v3659 = vrot.slane %v3639, %v3658
    %v3660 = vlaneseq
    %v3661 = vshrl.u32 %v3660, 7
    %v3662 = vsub.s32 3, %v3661
    %v3663 = vrot.slane %v3640, %v3662
    %v3664 = vlaneseq
    %v3665 = vshrl.u32 %v3664, 7
    %v3666 = vsub.s32 3, %v3665
    %v3667 = vrot.slane %v3641, %v3666
    %v3668 = vlaneseq
    %v3669 = vshrl.u32 %v3668, 7
    %v3670 = vsub.s32 3, %v3669
    %v3671 = vrot.slane %v3642, %v3670
    %v3672 = vlaneseq
    %v3673 = vshrl.u32 %v3672, 7
    %v3674 = vsub.s32 3, %v3673
    %v3675 = vrot.slane %v3643, %v3674
    %v3676 = vadd.f32 %v3596, %v3647
    %v3677 = vadd.f32 %v3597, %v3651
    %v3678 = vadd.f32 %v3598, %v3655
    %v3679 = vadd.f32 %v3599, %v3659
    %v3680 = vadd.f32 %v3600, %v3663
    %v3681 = vadd.f32 %v3601, %v3667
    %v3682 = vadd.f32 %v3602, %v3671
    %v3683 = vadd.f32 %v3603, %v3675
    %v3684 = vmax.f32 %v3676, 0.0
    %v3685 = vmax.f32 %v3677, 0.0
    %v3686 = vmax.f32 %v3678, 0.0
    %v3687 = vmax.f32 %v3679, 0.0
    %v3688 = vmax.f32 %v3680, 0.0
    %v3689 = vmax.f32 %v3681, 0.0
    %v3690 = vmax.f32 %v3682, 0.0
    %v3691 = vmax.f32 %v3683, 0.0
    %s3692 = smul.u32 %s1912, 6
    %s3693 = sshll.u32 %s3692, 4
    %3694 = dma.done %s80, %s3693
    %v3695 = vpack.c.bf16 %v3684, %v3684
    %v3696 = vpack.c.bf16 %v3685, %v3685
    %v3697 = vpack.c.bf16 %v3686, %v3686
    %v3698 = vpack.c.bf16 %v3687, %v3687
    %v3699 = vpack.c.bf16 %v3688, %v3688
    %v3700 = vpack.c.bf16 %v3689, %v3689
    %v3701 = vpack.c.bf16 %v3690, %v3690
    %v3702 = vpack.c.bf16 %v3691, %v3691
    %v3703 = vld [vmem:[#allocation3] sm:$0xff]
    %v3704 = vld [vmem:[#allocation3 + $0x8] sm:$0xff]
    %v3705 = vld [vmem:[#allocation3 + $0x10] sm:$0xff]
    %v3706 = vld [vmem:[#allocation3 + $0x18] sm:$0xff]
    %v3707 = vld [vmem:[#allocation3 + $0x20] sm:$0xff]
    %v3708 = vld [vmem:[#allocation3 + $0x28] sm:$0xff]
    %v3709 = vld [vmem:[#allocation3 + $0x30] sm:$0xff]
    %v3710 = vld [vmem:[#allocation3 + $0x38] sm:$0xff]
    %v3711 = vld [vmem:[#allocation3 + $0x40] sm:$0xff]
    %v3712 = vld [vmem:[#allocation3 + $0x48] sm:$0xff]
    %v3713 = vld [vmem:[#allocation3 + $0x50] sm:$0xff]
    %v3714 = vld [vmem:[#allocation3 + $0x58] sm:$0xff]
    %v3715 = vld [vmem:[#allocation3 + $0x60] sm:$0xff]
    %v3716 = vld [vmem:[#allocation3 + $0x68] sm:$0xff]
    %v3717 = vld [vmem:[#allocation3 + $0x70] sm:$0xff]
    %v3718 = vld [vmem:[#allocation3 + $0x78] sm:$0xff]
    %v3719 = vld [vmem:[#allocation3 + $0x80] sm:$0xff]
    %v3720 = vld [vmem:[#allocation3 + $0x88] sm:$0xff]
    %v3721 = vld [vmem:[#allocation3 + $0x90] sm:$0xff]
    %v3722 = vld [vmem:[#allocation3 + $0x98] sm:$0xff]
    %v3723 = vld [vmem:[#allocation3 + $0xa0] sm:$0xff]
    %v3724 = vld [vmem:[#allocation3 + $0xa8] sm:$0xff]
    %v3725 = vld [vmem:[#allocation3 + $0xb0] sm:$0xff]
    %v3726 = vld [vmem:[#allocation3 + $0xb8] sm:$0xff]
    %v3727 = vld [vmem:[#allocation3 + $0xc0] sm:$0xff]
    %v3728 = vld [vmem:[#allocation3 + $0xc8] sm:$0xff]
    %v3729 = vld [vmem:[#allocation3 + $0xd0] sm:$0xff]
    %v3730 = vld [vmem:[#allocation3 + $0xd8] sm:$0xff]
    %v3731 = vld [vmem:[#allocation3 + $0xe0] sm:$0xff]
    %v3732 = vld [vmem:[#allocation3 + $0xe8] sm:$0xff]
    %v3733 = vld [vmem:[#allocation3 + $0xf0] sm:$0xff]
    %v3734 = vld [vmem:[#allocation3 + $0xf8] sm:$0xff]
    %v3735 = vld [vmem:[#allocation3 + $0x100] sm:$0xff]
    %v3736 = vld [vmem:[#allocation3 + $0x108] sm:$0xff]
    %v3737 = vld [vmem:[#allocation3 + $0x110] sm:$0xff]
    %v3738 = vld [vmem:[#allocation3 + $0x118] sm:$0xff]
    %v3739 = vld [vmem:[#allocation3 + $0x120] sm:$0xff]
    %v3740 = vld [vmem:[#allocation3 + $0x128] sm:$0xff]
    %v3741 = vld [vmem:[#allocation3 + $0x130] sm:$0xff]
    %v3742 = vld [vmem:[#allocation3 + $0x138] sm:$0xff]
    %v3743 = vld [vmem:[#allocation3 + $0x140] sm:$0xff]
    %v3744 = vld [vmem:[#allocation3 + $0x148] sm:$0xff]
    %v3745 = vld [vmem:[#allocation3 + $0x150] sm:$0xff]
    %v3746 = vld [vmem:[#allocation3 + $0x158] sm:$0xff]
    %v3747 = vld [vmem:[#allocation3 + $0x160] sm:$0xff]
    %v3748 = vld [vmem:[#allocation3 + $0x168] sm:$0xff]
    %v3749 = vld [vmem:[#allocation3 + $0x170] sm:$0xff]
    %v3750 = vld [vmem:[#allocation3 + $0x178] sm:$0xff]
    %v3751 = vld [vmem:[#allocation3 + $0x180] sm:$0xff]
    %v3752 = vld [vmem:[#allocation3 + $0x188] sm:$0xff]
    %v3753 = vld [vmem:[#allocation3 + $0x190] sm:$0xff]
    %v3754 = vld [vmem:[#allocation3 + $0x198] sm:$0xff]
    %v3755 = vld [vmem:[#allocation3 + $0x1a0] sm:$0xff]
    %v3756 = vld [vmem:[#allocation3 + $0x1a8] sm:$0xff]
    %v3757 = vld [vmem:[#allocation3 + $0x1b0] sm:$0xff]
    %v3758 = vld [vmem:[#allocation3 + $0x1b8] sm:$0xff]
    %v3759 = vld [vmem:[#allocation3 + $0x1c0] sm:$0xff]
    %v3760 = vld [vmem:[#allocation3 + $0x1c8] sm:$0xff]
    %v3761 = vld [vmem:[#allocation3 + $0x1d0] sm:$0xff]
    %v3762 = vld [vmem:[#allocation3 + $0x1d8] sm:$0xff]
    %v3763 = vld [vmem:[#allocation3 + $0x1e0] sm:$0xff]
    %v3764 = vld [vmem:[#allocation3 + $0x1e8] sm:$0xff]
    %v3765 = vld [vmem:[#allocation3 + $0x1f0] sm:$0xff]
    %v3766 = vld [vmem:[#allocation3 + $0x1f8] sm:$0xff]
    %v3767 = vld [vmem:[#allocation3 + $0x200] sm:$0xff]
    %v3768 = vld [vmem:[#allocation3 + $0x208] sm:$0xff]
    %v3769 = vld [vmem:[#allocation3 + $0x210] sm:$0xff]
    %v3770 = vld [vmem:[#allocation3 + $0x218] sm:$0xff]
    %v3771 = vld [vmem:[#allocation3 + $0x220] sm:$0xff]
    %v3772 = vld [vmem:[#allocation3 + $0x228] sm:$0xff]
    %v3773 = vld [vmem:[#allocation3 + $0x230] sm:$0xff]
    %v3774 = vld [vmem:[#allocation3 + $0x238] sm:$0xff]
    %v3775 = vld [vmem:[#allocation3 + $0x240] sm:$0xff]
    %v3776 = vld [vmem:[#allocation3 + $0x248] sm:$0xff]
    %v3777 = vld [vmem:[#allocation3 + $0x250] sm:$0xff]
    %v3778 = vld [vmem:[#allocation3 + $0x258] sm:$0xff]
    %v3779 = vld [vmem:[#allocation3 + $0x260] sm:$0xff]
    %v3780 = vld [vmem:[#allocation3 + $0x268] sm:$0xff]
    %v3781 = vld [vmem:[#allocation3 + $0x270] sm:$0xff]
    %v3782 = vld [vmem:[#allocation3 + $0x278] sm:$0xff]
    %v3783 = vld [vmem:[#allocation3 + $0x280] sm:$0xff]
    %v3784 = vld [vmem:[#allocation3 + $0x288] sm:$0xff]
    %v3785 = vld [vmem:[#allocation3 + $0x290] sm:$0xff]
    %v3786 = vld [vmem:[#allocation3 + $0x298] sm:$0xff]
    %v3787 = vld [vmem:[#allocation3 + $0x2a0] sm:$0xff]
    %v3788 = vld [vmem:[#allocation3 + $0x2a8] sm:$0xff]
    %v3789 = vld [vmem:[#allocation3 + $0x2b0] sm:$0xff]
    %v3790 = vld [vmem:[#allocation3 + $0x2b8] sm:$0xff]
    %v3791 = vld [vmem:[#allocation3 + $0x2c0] sm:$0xff]
    %v3792 = vld [vmem:[#allocation3 + $0x2c8] sm:$0xff]
    %v3793 = vld [vmem:[#allocation3 + $0x2d0] sm:$0xff]
    %v3794 = vld [vmem:[#allocation3 + $0x2d8] sm:$0xff]
    %v3795 = vld [vmem:[#allocation3 + $0x2e0] sm:$0xff]
    %v3796 = vld [vmem:[#allocation3 + $0x2e8] sm:$0xff]
    %v3797 = vld [vmem:[#allocation3 + $0x2f0] sm:$0xff]
    %v3798 = vld [vmem:[#allocation3 + $0x2f8] sm:$0xff]
    %v3799 = vld [vmem:[#allocation3 + $0x300] sm:$0xff]
    %v3800 = vld [vmem:[#allocation3 + $0x308] sm:$0xff]
    %v3801 = vld [vmem:[#allocation3 + $0x310] sm:$0xff]
    %v3802 = vld [vmem:[#allocation3 + $0x318] sm:$0xff]
    %v3803 = vld [vmem:[#allocation3 + $0x320] sm:$0xff]
    %v3804 = vld [vmem:[#allocation3 + $0x328] sm:$0xff]
    %v3805 = vld [vmem:[#allocation3 + $0x330] sm:$0xff]
    %v3806 = vld [vmem:[#allocation3 + $0x338] sm:$0xff]
    %v3807 = vld [vmem:[#allocation3 + $0x340] sm:$0xff]
    %v3808 = vld [vmem:[#allocation3 + $0x348] sm:$0xff]
    %v3809 = vld [vmem:[#allocation3 + $0x350] sm:$0xff]
    %v3810 = vld [vmem:[#allocation3 + $0x358] sm:$0xff]
    %v3811 = vld [vmem:[#allocation3 + $0x360] sm:$0xff]
    %v3812 = vld [vmem:[#allocation3 + $0x368] sm:$0xff]
    %v3813 = vld [vmem:[#allocation3 + $0x370] sm:$0xff]
    %v3814 = vld [vmem:[#allocation3 + $0x378] sm:$0xff]
    %v3815 = vld [vmem:[#allocation3 + $0x380] sm:$0xff]
    %v3816 = vld [vmem:[#allocation3 + $0x388] sm:$0xff]
    %v3817 = vld [vmem:[#allocation3 + $0x390] sm:$0xff]
    %v3818 = vld [vmem:[#allocation3 + $0x398] sm:$0xff]
    %v3819 = vld [vmem:[#allocation3 + $0x3a0] sm:$0xff]
    %v3820 = vld [vmem:[#allocation3 + $0x3a8] sm:$0xff]
    %v3821 = vld [vmem:[#allocation3 + $0x3b0] sm:$0xff]
    %v3822 = vld [vmem:[#allocation3 + $0x3b8] sm:$0xff]
    %v3823 = vld [vmem:[#allocation3 + $0x3c0] sm:$0xff]
    %v3824 = vld [vmem:[#allocation3 + $0x3c8] sm:$0xff]
    %v3825 = vld [vmem:[#allocation3 + $0x3d0] sm:$0xff]
    %v3826 = vld [vmem:[#allocation3 + $0x3d8] sm:$0xff]
    %v3827 = vld [vmem:[#allocation3 + $0x3e0] sm:$0xff]
    %v3828 = vld [vmem:[#allocation3 + $0x3e8] sm:$0xff]
    %v3829 = vld [vmem:[#allocation3 + $0x3f0] sm:$0xff]
    %v3830 = vld [vmem:[#allocation3 + $0x3f8] sm:$0xff]
    %v3831 = vld [vmem:[#allocation3 + $0x400] sm:$0xff]
    %v3832 = vld [vmem:[#allocation3 + $0x408] sm:$0xff]
    %v3833 = vld [vmem:[#allocation3 + $0x410] sm:$0xff]
    %v3834 = vld [vmem:[#allocation3 + $0x418] sm:$0xff]
    %v3835 = vld [vmem:[#allocation3 + $0x420] sm:$0xff]
    %v3836 = vld [vmem:[#allocation3 + $0x428] sm:$0xff]
    %v3837 = vld [vmem:[#allocation3 + $0x430] sm:$0xff]
    %v3838 = vld [vmem:[#allocation3 + $0x438] sm:$0xff]
    %v3839 = vld [vmem:[#allocation3 + $0x440] sm:$0xff]
    %v3840 = vld [vmem:[#allocation3 + $0x448] sm:$0xff]
    %v3841 = vld [vmem:[#allocation3 + $0x450] sm:$0xff]
    %v3842 = vld [vmem:[#allocation3 + $0x458] sm:$0xff]
    %v3843 = vld [vmem:[#allocation3 + $0x460] sm:$0xff]
    %v3844 = vld [vmem:[#allocation3 + $0x468] sm:$0xff]
    %v3845 = vld [vmem:[#allocation3 + $0x470] sm:$0xff]
    %v3846 = vld [vmem:[#allocation3 + $0x478] sm:$0xff]
    %v3847 = vld [vmem:[#allocation3 + $0x480] sm:$0xff]
    %v3848 = vld [vmem:[#allocation3 + $0x488] sm:$0xff]
    %v3849 = vld [vmem:[#allocation3 + $0x490] sm:$0xff]
    %v3850 = vld [vmem:[#allocation3 + $0x498] sm:$0xff]
    %v3851 = vld [vmem:[#allocation3 + $0x4a0] sm:$0xff]
    %v3852 = vld [vmem:[#allocation3 + $0x4a8] sm:$0xff]
    %v3853 = vld [vmem:[#allocation3 + $0x4b0] sm:$0xff]
    %v3854 = vld [vmem:[#allocation3 + $0x4b8] sm:$0xff]
    %v3855 = vld [vmem:[#allocation3 + $0x4c0] sm:$0xff]
    %v3856 = vld [vmem:[#allocation3 + $0x4c8] sm:$0xff]
    %v3857 = vld [vmem:[#allocation3 + $0x4d0] sm:$0xff]
    %v3858 = vld [vmem:[#allocation3 + $0x4d8] sm:$0xff]
    %v3859 = vld [vmem:[#allocation3 + $0x4e0] sm:$0xff]
    %v3860 = vld [vmem:[#allocation3 + $0x4e8] sm:$0xff]
    %v3861 = vld [vmem:[#allocation3 + $0x4f0] sm:$0xff]
    %v3862 = vld [vmem:[#allocation3 + $0x4f8] sm:$0xff]
    %v3863 = vld [vmem:[#allocation3 + $0x500] sm:$0xff]
    %v3864 = vld [vmem:[#allocation3 + $0x508] sm:$0xff]
    %v3865 = vld [vmem:[#allocation3 + $0x510] sm:$0xff]
    %v3866 = vld [vmem:[#allocation3 + $0x518] sm:$0xff]
    %v3867 = vld [vmem:[#allocation3 + $0x520] sm:$0xff]
    %v3868 = vld [vmem:[#allocation3 + $0x528] sm:$0xff]
    %v3869 = vld [vmem:[#allocation3 + $0x530] sm:$0xff]
    %v3870 = vld [vmem:[#allocation3 + $0x538] sm:$0xff]
    %v3871 = vld [vmem:[#allocation3 + $0x540] sm:$0xff]
    %v3872 = vld [vmem:[#allocation3 + $0x548] sm:$0xff]
    %v3873 = vld [vmem:[#allocation3 + $0x550] sm:$0xff]
    %v3874 = vld [vmem:[#allocation3 + $0x558] sm:$0xff]
    %v3875 = vld [vmem:[#allocation3 + $0x560] sm:$0xff]
    %v3876 = vld [vmem:[#allocation3 + $0x568] sm:$0xff]
    %v3877 = vld [vmem:[#allocation3 + $0x570] sm:$0xff]
    %v3878 = vld [vmem:[#allocation3 + $0x578] sm:$0xff]
    %v3879 = vld [vmem:[#allocation3 + $0x580] sm:$0xff]
    %v3880 = vld [vmem:[#allocation3 + $0x588] sm:$0xff]
    %v3881 = vld [vmem:[#allocation3 + $0x590] sm:$0xff]
    %v3882 = vld [vmem:[#allocation3 + $0x598] sm:$0xff]
    %v3883 = vld [vmem:[#allocation3 + $0x5a0] sm:$0xff]
    %v3884 = vld [vmem:[#allocation3 + $0x5a8] sm:$0xff]
    %v3885 = vld [vmem:[#allocation3 + $0x5b0] sm:$0xff]
    %v3886 = vld [vmem:[#allocation3 + $0x5b8] sm:$0xff]
    %v3887 = vld [vmem:[#allocation3 + $0x5c0] sm:$0xff]
    %v3888 = vld [vmem:[#allocation3 + $0x5c8] sm:$0xff]
    %v3889 = vld [vmem:[#allocation3 + $0x5d0] sm:$0xff]
    %v3890 = vld [vmem:[#allocation3 + $0x5d8] sm:$0xff]
    %v3891 = vld [vmem:[#allocation3 + $0x5e0] sm:$0xff]
    %v3892 = vld [vmem:[#allocation3 + $0x5e8] sm:$0xff]
    %v3893 = vld [vmem:[#allocation3 + $0x5f0] sm:$0xff]
    %v3894 = vld [vmem:[#allocation3 + $0x5f8] sm:$0xff]
    %v3895 = vunpack.c.l.s8.bf16 %v3703
    %v3896 = vunpack.c.l.s8.bf16 %v3704
    %v3897 = vunpack.c.l.s8.bf16 %v3705
    %v3898 = vunpack.c.l.s8.bf16 %v3706
    %v3899 = vunpack.c.l.s8.bf16 %v3707
    %v3900 = vunpack.c.l.s8.bf16 %v3708
    %v3901 = vunpack.c.h.s8.bf16 %v3703
    %v3902 = vunpack.c.h.s8.bf16 %v3704
    %v3903 = vunpack.c.h.s8.bf16 %v3705
    %v3904 = vunpack.c.h.s8.bf16 %v3706
    %v3905 = vunpack.c.h.s8.bf16 %v3707
    %v3906 = vunpack.c.h.s8.bf16 %v3708
    %v3907 = vunpack.c.l.s8.bf16 %v3709
    %v3908 = vunpack.c.l.s8.bf16 %v3710
    %v3909 = vunpack.c.l.s8.bf16 %v3711
    %v3910 = vunpack.c.l.s8.bf16 %v3712
    %v3911 = vunpack.c.l.s8.bf16 %v3713
    %v3912 = vunpack.c.l.s8.bf16 %v3714
    %v3913 = vunpack.c.h.s8.bf16 %v3709
    %v3914 = vunpack.c.h.s8.bf16 %v3710
    %v3915 = vunpack.c.h.s8.bf16 %v3711
    %v3916 = vunpack.c.h.s8.bf16 %v3712
    %v3917 = vunpack.c.h.s8.bf16 %v3713
    %v3918 = vunpack.c.h.s8.bf16 %v3714
    %v3919 = vunpack.c.l.s8.bf16 %v3715
    %v3920 = vunpack.c.l.s8.bf16 %v3716
    %v3921 = vunpack.c.l.s8.bf16 %v3717
    %v3922 = vunpack.c.l.s8.bf16 %v3718
    %v3923 = vunpack.c.l.s8.bf16 %v3719
    %v3924 = vunpack.c.l.s8.bf16 %v3720
    %v3925 = vunpack.c.h.s8.bf16 %v3715
    %v3926 = vunpack.c.h.s8.bf16 %v3716
    %v3927 = vunpack.c.h.s8.bf16 %v3717
    %v3928 = vunpack.c.h.s8.bf16 %v3718
    %v3929 = vunpack.c.h.s8.bf16 %v3719
    %v3930 = vunpack.c.h.s8.bf16 %v3720
    %v3931 = vunpack.c.l.s8.bf16 %v3721
    %v3932 = vunpack.c.l.s8.bf16 %v3722
    %v3933 = vunpack.c.l.s8.bf16 %v3723
    %v3934 = vunpack.c.l.s8.bf16 %v3724
    %v3935 = vunpack.c.l.s8.bf16 %v3725
    %v3936 = vunpack.c.l.s8.bf16 %v3726
    %v3937 = vunpack.c.h.s8.bf16 %v3721
    %v3938 = vunpack.c.h.s8.bf16 %v3722
    %v3939 = vunpack.c.h.s8.bf16 %v3723
    %v3940 = vunpack.c.h.s8.bf16 %v3724
    %v3941 = vunpack.c.h.s8.bf16 %v3725
    %v3942 = vunpack.c.h.s8.bf16 %v3726
    %v3943 = vunpack.c.l.s8.bf16 %v3727
    %v3944 = vunpack.c.l.s8.bf16 %v3728
    %v3945 = vunpack.c.l.s8.bf16 %v3729
    %v3946 = vunpack.c.l.s8.bf16 %v3730
    %v3947 = vunpack.c.l.s8.bf16 %v3731
    %v3948 = vunpack.c.l.s8.bf16 %v3732
    %v3949 = vunpack.c.h.s8.bf16 %v3727
    %v3950 = vunpack.c.h.s8.bf16 %v3728
    %v3951 = vunpack.c.h.s8.bf16 %v3729
    %v3952 = vunpack.c.h.s8.bf16 %v3730
    %v3953 = vunpack.c.h.s8.bf16 %v3731
    %v3954 = vunpack.c.h.s8.bf16 %v3732
    %v3955 = vunpack.c.l.s8.bf16 %v3733
    %v3956 = vunpack.c.l.s8.bf16 %v3734
    %v3957 = vunpack.c.l.s8.bf16 %v3735
    %v3958 = vunpack.c.l.s8.bf16 %v3736
    %v3959 = vunpack.c.l.s8.bf16 %v3737
    %v3960 = vunpack.c.l.s8.bf16 %v3738
    %v3961 = vunpack.c.h.s8.bf16 %v3733
    %v3962 = vunpack.c.h.s8.bf16 %v3734
    %v3963 = vunpack.c.h.s8.bf16 %v3735
    %v3964 = vunpack.c.h.s8.bf16 %v3736
    %v3965 = vunpack.c.h.s8.bf16 %v3737
    %v3966 = vunpack.c.h.s8.bf16 %v3738
    %v3967 = vunpack.c.l.s8.bf16 %v3739
    %v3968 = vunpack.c.l.s8.bf16 %v3740
    %v3969 = vunpack.c.l.s8.bf16 %v3741
    %v3970 = vunpack.c.l.s8.bf16 %v3742
    %v3971 = vunpack.c.l.s8.bf16 %v3743
    %v3972 = vunpack.c.l.s8.bf16 %v3744
    %v3973 = vunpack.c.h.s8.bf16 %v3739
    %v3974 = vunpack.c.h.s8.bf16 %v3740
    %v3975 = vunpack.c.h.s8.bf16 %v3741
    %v3976 = vunpack.c.h.s8.bf16 %v3742
    %v3977 = vunpack.c.h.s8.bf16 %v3743
    %v3978 = vunpack.c.h.s8.bf16 %v3744
    %v3979 = vunpack.c.l.s8.bf16 %v3745
    %v3980 = vunpack.c.l.s8.bf16 %v3746
    %v3981 = vunpack.c.l.s8.bf16 %v3747
    %v3982 = vunpack.c.l.s8.bf16 %v3748
    %v3983 = vunpack.c.l.s8.bf16 %v3749
    %v3984 = vunpack.c.l.s8.bf16 %v3750
    %v3985 = vunpack.c.h.s8.bf16 %v3745
    %v3986 = vunpack.c.h.s8.bf16 %v3746
    %v3987 = vunpack.c.h.s8.bf16 %v3747
    %v3988 = vunpack.c.h.s8.bf16 %v3748
    %v3989 = vunpack.c.h.s8.bf16 %v3749
    %v3990 = vunpack.c.h.s8.bf16 %v3750
    %v3991 = vunpack.c.l.s8.bf16 %v3751
    %v3992 = vunpack.c.l.s8.bf16 %v3752
    %v3993 = vunpack.c.l.s8.bf16 %v3753
    %v3994 = vunpack.c.l.s8.bf16 %v3754
    %v3995 = vunpack.c.l.s8.bf16 %v3755
    %v3996 = vunpack.c.l.s8.bf16 %v3756
    %v3997 = vunpack.c.h.s8.bf16 %v3751
    %v3998 = vunpack.c.h.s8.bf16 %v3752
    %v3999 = vunpack.c.h.s8.bf16 %v3753
    %v4000 = vunpack.c.h.s8.bf16 %v3754
    %v4001 = vunpack.c.h.s8.bf16 %v3755
    %v4002 = vunpack.c.h.s8.bf16 %v3756
    %v4003 = vunpack.c.l.s8.bf16 %v3757
    %v4004 = vunpack.c.l.s8.bf16 %v3758
    %v4005 = vunpack.c.l.s8.bf16 %v3759
    %v4006 = vunpack.c.l.s8.bf16 %v3760
    %v4007 = vunpack.c.l.s8.bf16 %v3761
    %v4008 = vunpack.c.l.s8.bf16 %v3762
    %v4009 = vunpack.c.h.s8.bf16 %v3757
    %v4010 = vunpack.c.h.s8.bf16 %v3758
    %v4011 = vunpack.c.h.s8.bf16 %v3759
    %v4012 = vunpack.c.h.s8.bf16 %v3760
    %v4013 = vunpack.c.h.s8.bf16 %v3761
    %v4014 = vunpack.c.h.s8.bf16 %v3762
    %v4015 = vunpack.c.l.s8.bf16 %v3763
    %v4016 = vunpack.c.l.s8.bf16 %v3764
    %v4017 = vunpack.c.l.s8.bf16 %v3765
    %v4018 = vunpack.c.l.s8.bf16 %v3766
    %v4019 = vunpack.c.l.s8.bf16 %v3767
    %v4020 = vunpack.c.l.s8.bf16 %v3768
    %v4021 = vunpack.c.h.s8.bf16 %v3763
    %v4022 = vunpack.c.h.s8.bf16 %v3764
    %v4023 = vunpack.c.h.s8.bf16 %v3765
    %v4024 = vunpack.c.h.s8.bf16 %v3766
    %v4025 = vunpack.c.h.s8.bf16 %v3767
    %v4026 = vunpack.c.h.s8.bf16 %v3768
    %v4027 = vunpack.c.l.s8.bf16 %v3769
    %v4028 = vunpack.c.l.s8.bf16 %v3770
    %v4029 = vunpack.c.l.s8.bf16 %v3771
    %v4030 = vunpack.c.l.s8.bf16 %v3772
    %v4031 = vunpack.c.l.s8.bf16 %v3773
    %v4032 = vunpack.c.l.s8.bf16 %v3774
    %v4033 = vunpack.c.h.s8.bf16 %v3769
    %v4034 = vunpack.c.h.s8.bf16 %v3770
    %v4035 = vunpack.c.h.s8.bf16 %v3771
    %v4036 = vunpack.c.h.s8.bf16 %v3772
    %v4037 = vunpack.c.h.s8.bf16 %v3773
    %v4038 = vunpack.c.h.s8.bf16 %v3774
    %v4039 = vunpack.c.l.s8.bf16 %v3775
    %v4040 = vunpack.c.l.s8.bf16 %v3776
    %v4041 = vunpack.c.l.s8.bf16 %v3777
    %v4042 = vunpack.c.l.s8.bf16 %v3778
    %v4043 = vunpack.c.l.s8.bf16 %v3779
    %v4044 = vunpack.c.l.s8.bf16 %v3780
    %v4045 = vunpack.c.h.s8.bf16 %v3775
    %v4046 = vunpack.c.h.s8.bf16 %v3776
    %v4047 = vunpack.c.h.s8.bf16 %v3777
    %v4048 = vunpack.c.h.s8.bf16 %v3778
    %v4049 = vunpack.c.h.s8.bf16 %v3779
    %v4050 = vunpack.c.h.s8.bf16 %v3780
    %v4051 = vunpack.c.l.s8.bf16 %v3781
    %v4052 = vunpack.c.l.s8.bf16 %v3782
    %v4053 = vunpack.c.l.s8.bf16 %v3783
    %v4054 = vunpack.c.l.s8.bf16 %v3784
    %v4055 = vunpack.c.l.s8.bf16 %v3785
    %v4056 = vunpack.c.l.s8.bf16 %v3786
    %v4057 = vunpack.c.h.s8.bf16 %v3781
    %v4058 = vunpack.c.h.s8.bf16 %v3782
    %v4059 = vunpack.c.h.s8.bf16 %v3783
    %v4060 = vunpack.c.h.s8.bf16 %v3784
    %v4061 = vunpack.c.h.s8.bf16 %v3785
    %v4062 = vunpack.c.h.s8.bf16 %v3786
    %v4063 = vunpack.c.l.s8.bf16 %v3787
    %v4064 = vunpack.c.l.s8.bf16 %v3788
    %v4065 = vunpack.c.l.s8.bf16 %v3789
    %v4066 = vunpack.c.l.s8.bf16 %v3790
    %v4067 = vunpack.c.l.s8.bf16 %v3791
    %v4068 = vunpack.c.l.s8.bf16 %v3792
    %v4069 = vunpack.c.h.s8.bf16 %v3787
    %v4070 = vunpack.c.h.s8.bf16 %v3788
    %v4071 = vunpack.c.h.s8.bf16 %v3789
    %v4072 = vunpack.c.h.s8.bf16 %v3790
    %v4073 = vunpack.c.h.s8.bf16 %v3791
    %v4074 = vunpack.c.h.s8.bf16 %v3792
    %v4075 = vunpack.c.l.s8.bf16 %v3793
    %v4076 = vunpack.c.l.s8.bf16 %v3794
    %v4077 = vunpack.c.l.s8.bf16 %v3795
    %v4078 = vunpack.c.l.s8.bf16 %v3796
    %v4079 = vunpack.c.l.s8.bf16 %v3797
    %v4080 = vunpack.c.l.s8.bf16 %v3798
    %v4081 = vunpack.c.h.s8.bf16 %v3793
    %v4082 = vunpack.c.h.s8.bf16 %v3794
    %v4083 = vunpack.c.h.s8.bf16 %v3795
    %v4084 = vunpack.c.h.s8.bf16 %v3796
    %v4085 = vunpack.c.h.s8.bf16 %v3797
    %v4086 = vunpack.c.h.s8.bf16 %v3798
    %v4087 = vunpack.c.l.s8.bf16 %v3799
    %v4088 = vunpack.c.l.s8.bf16 %v3800
    %v4089 = vunpack.c.l.s8.bf16 %v3801
    %v4090 = vunpack.c.l.s8.bf16 %v3802
    %v4091 = vunpack.c.l.s8.bf16 %v3803
    %v4092 = vunpack.c.l.s8.bf16 %v3804
    %v4093 = vunpack.c.h.s8.bf16 %v3799
    %v4094 = vunpack.c.h.s8.bf16 %v3800
    %v4095 = vunpack.c.h.s8.bf16 %v3801
    %v4096 = vunpack.c.h.s8.bf16 %v3802
    %v4097 = vunpack.c.h.s8.bf16 %v3803
    %v4098 = vunpack.c.h.s8.bf16 %v3804
    %v4099 = vunpack.c.l.s8.bf16 %v3805
    %v4100 = vunpack.c.l.s8.bf16 %v3806
    %v4101 = vunpack.c.l.s8.bf16 %v3807
    %v4102 = vunpack.c.l.s8.bf16 %v3808
    %v4103 = vunpack.c.l.s8.bf16 %v3809
    %v4104 = vunpack.c.l.s8.bf16 %v3810
    %v4105 = vunpack.c.h.s8.bf16 %v3805
    %v4106 = vunpack.c.h.s8.bf16 %v3806
    %v4107 = vunpack.c.h.s8.bf16 %v3807
    %v4108 = vunpack.c.h.s8.bf16 %v3808
    %v4109 = vunpack.c.h.s8.bf16 %v3809
    %v4110 = vunpack.c.h.s8.bf16 %v3810
    %v4111 = vunpack.c.l.s8.bf16 %v3811
    %v4112 = vunpack.c.l.s8.bf16 %v3812
    %v4113 = vunpack.c.l.s8.bf16 %v3813
    %v4114 = vunpack.c.l.s8.bf16 %v3814
    %v4115 = vunpack.c.l.s8.bf16 %v3815
    %v4116 = vunpack.c.l.s8.bf16 %v3816
    %v4117 = vunpack.c.h.s8.bf16 %v3811
    %v4118 = vunpack.c.h.s8.bf16 %v3812
    %v4119 = vunpack.c.h.s8.bf16 %v3813
    %v4120 = vunpack.c.h.s8.bf16 %v3814
    %v4121 = vunpack.c.h.s8.bf16 %v3815
    %v4122 = vunpack.c.h.s8.bf16 %v3816
    %v4123 = vunpack.c.l.s8.bf16 %v3817
    %v4124 = vunpack.c.l.s8.bf16 %v3818
    %v4125 = vunpack.c.l.s8.bf16 %v3819
    %v4126 = vunpack.c.l.s8.bf16 %v3820
    %v4127 = vunpack.c.l.s8.bf16 %v3821
    %v4128 = vunpack.c.l.s8.bf16 %v3822
    %v4129 = vunpack.c.h.s8.bf16 %v3817
    %v4130 = vunpack.c.h.s8.bf16 %v3818
    %v4131 = vunpack.c.h.s8.bf16 %v3819
    %v4132 = vunpack.c.h.s8.bf16 %v3820
    %v4133 = vunpack.c.h.s8.bf16 %v3821
    %v4134 = vunpack.c.h.s8.bf16 %v3822
    %v4135 = vunpack.c.l.s8.bf16 %v3823
    %v4136 = vunpack.c.l.s8.bf16 %v3824
    %v4137 = vunpack.c.l.s8.bf16 %v3825
    %v4138 = vunpack.c.l.s8.bf16 %v3826
    %v4139 = vunpack.c.l.s8.bf16 %v3827
    %v4140 = vunpack.c.l.s8.bf16 %v3828
    %v4141 = vunpack.c.h.s8.bf16 %v3823
    %v4142 = vunpack.c.h.s8.bf16 %v3824
    %v4143 = vunpack.c.h.s8.bf16 %v3825
    %v4144 = vunpack.c.h.s8.bf16 %v3826
    %v4145 = vunpack.c.h.s8.bf16 %v3827
    %v4146 = vunpack.c.h.s8.bf16 %v3828
    %v4147 = vunpack.c.l.s8.bf16 %v3829
    %v4148 = vunpack.c.l.s8.bf16 %v3830
    %v4149 = vunpack.c.l.s8.bf16 %v3831
    %v4150 = vunpack.c.l.s8.bf16 %v3832
    %v4151 = vunpack.c.l.s8.bf16 %v3833
    %v4152 = vunpack.c.l.s8.bf16 %v3834
    %v4153 = vunpack.c.h.s8.bf16 %v3829
    %v4154 = vunpack.c.h.s8.bf16 %v3830
    %v4155 = vunpack.c.h.s8.bf16 %v3831
    %v4156 = vunpack.c.h.s8.bf16 %v3832
    %v4157 = vunpack.c.h.s8.bf16 %v3833
    %v4158 = vunpack.c.h.s8.bf16 %v3834
    %v4159 = vunpack.c.l.s8.bf16 %v3835
    %v4160 = vunpack.c.l.s8.bf16 %v3836
    %v4161 = vunpack.c.l.s8.bf16 %v3837
    %v4162 = vunpack.c.l.s8.bf16 %v3838
    %v4163 = vunpack.c.l.s8.bf16 %v3839
    %v4164 = vunpack.c.l.s8.bf16 %v3840
    %v4165 = vunpack.c.h.s8.bf16 %v3835
    %v4166 = vunpack.c.h.s8.bf16 %v3836
    %v4167 = vunpack.c.h.s8.bf16 %v3837
    %v4168 = vunpack.c.h.s8.bf16 %v3838
    %v4169 = vunpack.c.h.s8.bf16 %v3839
    %v4170 = vunpack.c.h.s8.bf16 %v3840
    %v4171 = vunpack.c.l.s8.bf16 %v3841
    %v4172 = vunpack.c.l.s8.bf16 %v3842
    %v4173 = vunpack.c.l.s8.bf16 %v3843
    %v4174 = vunpack.c.l.s8.bf16 %v3844
    %v4175 = vunpack.c.l.s8.bf16 %v3845
    %v4176 = vunpack.c.l.s8.bf16 %v3846
    %v4177 = vunpack.c.h.s8.bf16 %v3841
    %v4178 = vunpack.c.h.s8.bf16 %v3842
    %v4179 = vunpack.c.h.s8.bf16 %v3843
    %v4180 = vunpack.c.h.s8.bf16 %v3844
    %v4181 = vunpack.c.h.s8.bf16 %v3845
    %v4182 = vunpack.c.h.s8.bf16 %v3846
    %v4183 = vunpack.c.l.s8.bf16 %v3847
    %v4184 = vunpack.c.l.s8.bf16 %v3848
    %v4185 = vunpack.c.l.s8.bf16 %v3849
    %v4186 = vunpack.c.l.s8.bf16 %v3850
    %v4187 = vunpack.c.l.s8.bf16 %v3851
    %v4188 = vunpack.c.l.s8.bf16 %v3852
    %v4189 = vunpack.c.h.s8.bf16 %v3847
    %v4190 = vunpack.c.h.s8.bf16 %v3848
    %v4191 = vunpack.c.h.s8.bf16 %v3849
    %v4192 = vunpack.c.h.s8.bf16 %v3850
    %v4193 = vunpack.c.h.s8.bf16 %v3851
    %v4194 = vunpack.c.h.s8.bf16 %v3852
    %v4195 = vunpack.c.l.s8.bf16 %v3853
    %v4196 = vunpack.c.l.s8.bf16 %v3854
    %v4197 = vunpack.c.l.s8.bf16 %v3855
    %v4198 = vunpack.c.l.s8.bf16 %v3856
    %v4199 = vunpack.c.l.s8.bf16 %v3857
    %v4200 = vunpack.c.l.s8.bf16 %v3858
    %v4201 = vunpack.c.h.s8.bf16 %v3853
    %v4202 = vunpack.c.h.s8.bf16 %v3854
    %v4203 = vunpack.c.h.s8.bf16 %v3855
    %v4204 = vunpack.c.h.s8.bf16 %v3856
    %v4205 = vunpack.c.h.s8.bf16 %v3857
    %v4206 = vunpack.c.h.s8.bf16 %v3858
    %v4207 = vunpack.c.l.s8.bf16 %v3859
    %v4208 = vunpack.c.l.s8.bf16 %v3860
    %v4209 = vunpack.c.l.s8.bf16 %v3861
    %v4210 = vunpack.c.l.s8.bf16 %v3862
    %v4211 = vunpack.c.l.s8.bf16 %v3863
    %v4212 = vunpack.c.l.s8.bf16 %v3864
    %v4213 = vunpack.c.h.s8.bf16 %v3859
    %v4214 = vunpack.c.h.s8.bf16 %v3860
    %v4215 = vunpack.c.h.s8.bf16 %v3861
    %v4216 = vunpack.c.h.s8.bf16 %v3862
    %v4217 = vunpack.c.h.s8.bf16 %v3863
    %v4218 = vunpack.c.h.s8.bf16 %v3864
    %v4219 = vunpack.c.l.s8.bf16 %v3865
    %v4220 = vunpack.c.l.s8.bf16 %v3866
    %v4221 = vunpack.c.l.s8.bf16 %v3867
    %v4222 = vunpack.c.l.s8.bf16 %v3868
    %v4223 = vunpack.c.l.s8.bf16 %v3869
    %v4224 = vunpack.c.l.s8.bf16 %v3870
    %v4225 = vunpack.c.h.s8.bf16 %v3865
    %v4226 = vunpack.c.h.s8.bf16 %v3866
    %v4227 = vunpack.c.h.s8.bf16 %v3867
    %v4228 = vunpack.c.h.s8.bf16 %v3868
    %v4229 = vunpack.c.h.s8.bf16 %v3869
    %v4230 = vunpack.c.h.s8.bf16 %v3870
    %v4231 = vunpack.c.l.s8.bf16 %v3871
    %v4232 = vunpack.c.l.s8.bf16 %v3872
    %v4233 = vunpack.c.l.s8.bf16 %v3873
    %v4234 = vunpack.c.l.s8.bf16 %v3874
    %v4235 = vunpack.c.l.s8.bf16 %v3875
    %v4236 = vunpack.c.l.s8.bf16 %v3876
    %v4237 = vunpack.c.h.s8.bf16 %v3871
    %v4238 = vunpack.c.h.s8.bf16 %v3872
    %v4239 = vunpack.c.h.s8.bf16 %v3873
    %v4240 = vunpack.c.h.s8.bf16 %v3874
    %v4241 = vunpack.c.h.s8.bf16 %v3875
    %v4242 = vunpack.c.h.s8.bf16 %v3876
    %v4243 = vunpack.c.l.s8.bf16 %v3877
    %v4244 = vunpack.c.l.s8.bf16 %v3878
    %v4245 = vunpack.c.l.s8.bf16 %v3879
    %v4246 = vunpack.c.l.s8.bf16 %v3880
    %v4247 = vunpack.c.l.s8.bf16 %v3881
    %v4248 = vunpack.c.l.s8.bf16 %v3882
    %v4249 = vunpack.c.h.s8.bf16 %v3877
    %v4250 = vunpack.c.h.s8.bf16 %v3878
    %v4251 = vunpack.c.h.s8.bf16 %v3879
    %v4252 = vunpack.c.h.s8.bf16 %v3880
    %v4253 = vunpack.c.h.s8.bf16 %v3881
    %v4254 = vunpack.c.h.s8.bf16 %v3882
    %v4255 = vunpack.c.l.s8.bf16 %v3883
    %v4256 = vunpack.c.l.s8.bf16 %v3884
    %v4257 = vunpack.c.l.s8.bf16 %v3885
    %v4258 = vunpack.c.l.s8.bf16 %v3886
    %v4259 = vunpack.c.l.s8.bf16 %v3887
    %v4260 = vunpack.c.l.s8.bf16 %v3888
    %v4261 = vunpack.c.h.s8.bf16 %v3883
    %v4262 = vunpack.c.h.s8.bf16 %v3884
    %v4263 = vunpack.c.h.s8.bf16 %v3885
    %v4264 = vunpack.c.h.s8.bf16 %v3886
    %v4265 = vunpack.c.h.s8.bf16 %v3887
    %v4266 = vunpack.c.h.s8.bf16 %v3888
    %v4267 = vunpack.c.l.s8.bf16 %v3889
    %v4268 = vunpack.c.l.s8.bf16 %v3890
    %v4269 = vunpack.c.l.s8.bf16 %v3891
    %v4270 = vunpack.c.l.s8.bf16 %v3892
    %v4271 = vunpack.c.l.s8.bf16 %v3893
    %v4272 = vunpack.c.l.s8.bf16 %v3894
    %v4273 = vunpack.c.h.s8.bf16 %v3889
    %v4274 = vunpack.c.h.s8.bf16 %v3890
    %v4275 = vunpack.c.h.s8.bf16 %v3891
    %v4276 = vunpack.c.h.s8.bf16 %v3892
    %v4277 = vunpack.c.h.s8.bf16 %v3893
    %v4278 = vunpack.c.h.s8.bf16 %v3894
    %4279 = vmatprep.subr.bf16.mxu0 %v3938
    %4280 = vmatpush1.bf16.msra.mxu0 %v3937
    %4281 = vmatprep.subr.bf16.mxu0 %v3932
    %4282 = vmatpush1.bf16.msra.mxu0 %v3931
    %4283 = vmatprep.subr.bf16.mxu0 %v3926
    %4284 = vmatpush1.bf16.msra.mxu0 %v3925
    %4285 = vmatprep.subr.bf16.mxu0 %v3920
    %4286 = vmatpush1.bf16.msra.mxu0 %v3919
    %4287 = vmatprep.subr.bf16.mxu0 %v3914
    %4288 = vmatpush1.bf16.msra.mxu0 %v3913
    %4289 = vmatprep.subr.bf16.mxu0 %v3908
    %4290 = vmatpush1.bf16.msra.mxu0 %v3907
    %4291 = vmatprep.subr.bf16.mxu0 %v3902
    %4292 = vmatpush1.bf16.msra.mxu0 %v3901
    %4293 = vmatprep.subr.bf16.mxu0 %v3896
    %4294 = vmatpush1.bf16.msra.mxu0 %v3895
    %4295 = vmatprep.subr.bf16.mxu0 %v3986
    %4296 = vmatpush2.bf16.msra.mxu0 %v3985
    %4297 = vmatprep.subr.bf16.mxu0 %v3980
    %4298 = vmatpush2.bf16.msra.mxu0 %v3979
    %4299 = vmatprep.subr.bf16.mxu0 %v3974
    %4300 = vmatpush2.bf16.msra.mxu0 %v3973
    %4301 = vmatprep.subr.bf16.mxu0 %v3968
    %4302 = vmatpush2.bf16.msra.mxu0 %v3967
    %4303 = vmatprep.subr.bf16.mxu0 %v3962
    %4304 = vmatpush2.bf16.msra.mxu0 %v3961
    %4305 = vmatprep.subr.bf16.mxu0 %v3956
    %4306 = vmatpush2.bf16.msra.mxu0 %v3955
    %4307 = vmatprep.subr.bf16.mxu0 %v3950
    %4308 = vmatpush2.bf16.msra.mxu0 %v3949
    %4309 = vmatprep.subr.bf16.mxu0 %v3944
    %4310 = vmatpush2.bf16.msra.mxu0 %v3943
    %4311 = vmatprep.mubr.bf16.mxu0 %v3696
    %4312 = vmatmul.mubr.bf16.gmra.mxu0 %v3695
    %v4313 = vpop.f32.mrf.mxu0
    %v4314 = vadd.f32 0.0, %v4313
    %v4315 = vpop.f32.mrf.mxu0
    %v4316 = vadd.f32 0.0, %v4315
    %v4317 = vpop.f32.mrf.mxu0
    %v4318 = vpop.f32.mrf.mxu0
    %4319 = vdwg.mxu0
    %4320 = vmatprep.subr.bf16.mxu0 %v4034
    %4321 = vmatpush1.bf16.msra.mxu0 %v4033
    %4322 = vmatprep.subr.bf16.mxu0 %v4028
    %4323 = vmatpush1.bf16.msra.mxu0 %v4027
    %4324 = vmatprep.subr.bf16.mxu0 %v4022
    %4325 = vmatpush1.bf16.msra.mxu0 %v4021
    %4326 = vmatprep.subr.bf16.mxu0 %v4016
    %4327 = vmatpush1.bf16.msra.mxu0 %v4015
    %4328 = vmatprep.subr.bf16.mxu0 %v4010
    %4329 = vmatpush1.bf16.msra.mxu0 %v4009
    %4330 = vmatprep.subr.bf16.mxu0 %v4004
    %4331 = vmatpush1.bf16.msra.mxu0 %v4003
    %4332 = vmatprep.subr.bf16.mxu0 %v3998
    %4333 = vmatpush1.bf16.msra.mxu0 %v3997
    %4334 = vmatprep.subr.bf16.mxu0 %v3992
    %4335 = vmatpush1.bf16.msra.mxu0 %v3991
    %4336 = vmatprep.subr.bf16.mxu0 %v4082
    %4337 = vmatpush2.bf16.msra.mxu0 %v4081
    %4338 = vmatprep.subr.bf16.mxu0 %v4076
    %4339 = vmatpush2.bf16.msra.mxu0 %v4075
    %4340 = vmatprep.subr.bf16.mxu0 %v4070
    %4341 = vmatpush2.bf16.msra.mxu0 %v4069
    %4342 = vmatprep.subr.bf16.mxu0 %v4064
    %4343 = vmatpush2.bf16.msra.mxu0 %v4063
    %4344 = vmatprep.subr.bf16.mxu0 %v4058
    %4345 = vmatpush2.bf16.msra.mxu0 %v4057
    %4346 = vmatprep.subr.bf16.mxu0 %v4052
    %4347 = vmatpush2.bf16.msra.mxu0 %v4051
    %4348 = vmatprep.subr.bf16.mxu0 %v4046
    %4349 = vmatpush2.bf16.msra.mxu0 %v4045
    %4350 = vmatprep.subr.bf16.mxu0 %v4040
    %4351 = vmatpush2.bf16.msra.mxu0 %v4039
    %4352 = vmatprep.mubr.bf16.mxu0 %v3698
    %4353 = vmatmul.mubr.bf16.gmra.mxu0 %v3697
    %v4354 = vpop.f32.mrf.mxu0
    %v4355 = vadd.f32 %v4314, %v4354
    %v4356 = vpop.f32.mrf.mxu0
    %v4357 = vadd.f32 %v4316, %v4356
    %v4358 = vpop.f32.mrf.mxu0
    %v4359 = vpop.f32.mrf.mxu0
    %4360 = vdwg.mxu0
    %4361 = vmatprep.subr.bf16.mxu0 %v4130
    %4362 = vmatpush1.bf16.msra.mxu0 %v4129
    %4363 = vmatprep.subr.bf16.mxu0 %v4124
    %4364 = vmatpush1.bf16.msra.mxu0 %v4123
    %4365 = vmatprep.subr.bf16.mxu0 %v4118
    %4366 = vmatpush1.bf16.msra.mxu0 %v4117
    %4367 = vmatprep.subr.bf16.mxu0 %v4112
    %4368 = vmatpush1.bf16.msra.mxu0 %v4111
    %4369 = vmatprep.subr.bf16.mxu0 %v4106
    %4370 = vmatpush1.bf16.msra.mxu0 %v4105
    %4371 = vmatprep.subr.bf16.mxu0 %v4100
    %4372 = vmatpush1.bf16.msra.mxu0 %v4099
    %4373 = vmatprep.subr.bf16.mxu0 %v4094
    %4374 = vmatpush1.bf16.msra.mxu0 %v4093
    %4375 = vmatprep.subr.bf16.mxu0 %v4088
    %4376 = vmatpush1.bf16.msra.mxu0 %v4087
    %4377 = vmatprep.subr.bf16.mxu0 %v4178
    %4378 = vmatpush2.bf16.msra.mxu0 %v4177
    %4379 = vmatprep.subr.bf16.mxu0 %v4172
    %4380 = vmatpush2.bf16.msra.mxu0 %v4171
    %4381 = vmatprep.subr.bf16.mxu0 %v4166
    %4382 = vmatpush2.bf16.msra.mxu0 %v4165
    %4383 = vmatprep.subr.bf16.mxu0 %v4160
    %4384 = vmatpush2.bf16.msra.mxu0 %v4159
    %4385 = vmatprep.subr.bf16.mxu0 %v4154
    %4386 = vmatpush2.bf16.msra.mxu0 %v4153
    %4387 = vmatprep.subr.bf16.mxu0 %v4148
    %4388 = vmatpush2.bf16.msra.mxu0 %v4147
    %4389 = vmatprep.subr.bf16.mxu0 %v4142
    %4390 = vmatpush2.bf16.msra.mxu0 %v4141
    %4391 = vmatprep.subr.bf16.mxu0 %v4136
    %4392 = vmatpush2.bf16.msra.mxu0 %v4135
    %4393 = vmatprep.mubr.bf16.mxu0 %v3700
    %4394 = vmatmul.mubr.bf16.gmra.mxu0 %v3699
    %v4395 = vpop.f32.mrf.mxu0
    %v4396 = vadd.f32 %v4355, %v4395
    %v4397 = vpop.f32.mrf.mxu0
    %v4398 = vadd.f32 %v4357, %v4397
    %v4399 = vpop.f32.mrf.mxu0
    %v4400 = vpop.f32.mrf.mxu0
    %4401 = vdwg.mxu0
    %4402 = vmatprep.subr.bf16.mxu0 %v4226
    %4403 = vmatpush1.bf16.msra.mxu0 %v4225
    %4404 = vmatprep.subr.bf16.mxu0 %v4220
    %4405 = vmatpush1.bf16.msra.mxu0 %v4219
    %4406 = vmatprep.subr.bf16.mxu0 %v4214
    %4407 = vmatpush1.bf16.msra.mxu0 %v4213
    %4408 = vmatprep.subr.bf16.mxu0 %v4208
    %4409 = vmatpush1.bf16.msra.mxu0 %v4207
    %4410 = vmatprep.subr.bf16.mxu0 %v4202
    %4411 = vmatpush1.bf16.msra.mxu0 %v4201
    %4412 = vmatprep.subr.bf16.mxu0 %v4196
    %4413 = vmatpush1.bf16.msra.mxu0 %v4195
    %4414 = vmatprep.subr.bf16.mxu0 %v4190
    %4415 = vmatpush1.bf16.msra.mxu0 %v4189
    %4416 = vmatprep.subr.bf16.mxu0 %v4184
    %4417 = vmatpush1.bf16.msra.mxu0 %v4183
    %4418 = vmatprep.subr.bf16.mxu0 %v4274
    %4419 = vmatpush2.bf16.msra.mxu0 %v4273
    %4420 = vmatprep.subr.bf16.mxu0 %v4268
    %4421 = vmatpush2.bf16.msra.mxu0 %v4267
    %4422 = vmatprep.subr.bf16.mxu0 %v4262
    %4423 = vmatpush2.bf16.msra.mxu0 %v4261
    %4424 = vmatprep.subr.bf16.mxu0 %v4256
    %4425 = vmatpush2.bf16.msra.mxu0 %v4255
    %4426 = vmatprep.subr.bf16.mxu0 %v4250
    %4427 = vmatpush2.bf16.msra.mxu0 %v4249
    %4428 = vmatprep.subr.bf16.mxu0 %v4244
    %4429 = vmatpush2.bf16.msra.mxu0 %v4243
    %4430 = vmatprep.subr.bf16.mxu0 %v4238
    %4431 = vmatpush2.bf16.msra.mxu0 %v4237
    %4432 = vmatprep.subr.bf16.mxu0 %v4232
    %4433 = vmatpush2.bf16.msra.mxu0 %v4231
    %4434 = vmatprep.mubr.bf16.mxu0 %v3702
    %4435 = vmatmul.mubr.bf16.gmra.mxu0 %v3701
    %v4436 = vpop.f32.mrf.mxu0
    %v4437 = vadd.f32 %v4396, %v4436
    %v4438 = vpop.f32.mrf.mxu0
    %v4439 = vadd.f32 %v4398, %v4438
    %v4440 = vpop.f32.mrf.mxu0
    %v4441 = vpop.f32.mrf.mxu0
    %4442 = vdwg.mxu0
    %4443 = vmatprep.subr.bf16.mxu0 %v3940
    %4444 = vmatpush1.bf16.msra.mxu0 %v3939
    %4445 = vmatprep.subr.bf16.mxu0 %v3934
    %4446 = vmatpush1.bf16.msra.mxu0 %v3933
    %4447 = vmatprep.subr.bf16.mxu0 %v3928
    %4448 = vmatpush1.bf16.msra.mxu0 %v3927
    %4449 = vmatprep.subr.bf16.mxu0 %v3922
    %4450 = vmatpush1.bf16.msra.mxu0 %v3921
    %4451 = vmatprep.subr.bf16.mxu0 %v3916
    %4452 = vmatpush1.bf16.msra.mxu0 %v3915
    %4453 = vmatprep.subr.bf16.mxu0 %v3910
    %4454 = vmatpush1.bf16.msra.mxu0 %v3909
    %4455 = vmatprep.subr.bf16.mxu0 %v3904
    %4456 = vmatpush1.bf16.msra.mxu0 %v3903
    %4457 = vmatprep.subr.bf16.mxu0 %v3898
    %4458 = vmatpush1.bf16.msra.mxu0 %v3897
    %4459 = vmatprep.subr.bf16.mxu0 %v3988
    %4460 = vmatpush2.bf16.msra.mxu0 %v3987
    %4461 = vmatprep.subr.bf16.mxu0 %v3982
    %4462 = vmatpush2.bf16.msra.mxu0 %v3981
    %4463 = vmatprep.subr.bf16.mxu0 %v3976
    %4464 = vmatpush2.bf16.msra.mxu0 %v3975
    %4465 = vmatprep.subr.bf16.mxu0 %v3970
    %4466 = vmatpush2.bf16.msra.mxu0 %v3969
    %4467 = vmatprep.subr.bf16.mxu0 %v3964
    %4468 = vmatpush2.bf16.msra.mxu0 %v3963
    %4469 = vmatprep.subr.bf16.mxu0 %v3958
    %4470 = vmatpush2.bf16.msra.mxu0 %v3957
    %4471 = vmatprep.subr.bf16.mxu0 %v3952
    %4472 = vmatpush2.bf16.msra.mxu0 %v3951
    %4473 = vmatprep.subr.bf16.mxu0 %v3946
    %4474 = vmatpush2.bf16.msra.mxu0 %v3945
    %4475 = vmatprep.mubr.bf16.mxu0 %v3696
    %4476 = vmatmul.mubr.bf16.gmra.mxu0 %v3695
    %v4477 = vpop.f32.mrf.mxu0
    %v4478 = vadd.f32 0.0, %v4477
    %v4479 = vpop.f32.mrf.mxu0
    %v4480 = vadd.f32 0.0, %v4479
    %v4481 = vpop.f32.mrf.mxu0
    %v4482 = vpop.f32.mrf.mxu0
    %4483 = vdwg.mxu0
    %4484 = vmatprep.subr.bf16.mxu0 %v4036
    %4485 = vmatpush1.bf16.msra.mxu0 %v4035
    %4486 = vmatprep.subr.bf16.mxu0 %v4030
    %4487 = vmatpush1.bf16.msra.mxu0 %v4029
    %4488 = vmatprep.subr.bf16.mxu0 %v4024
    %4489 = vmatpush1.bf16.msra.mxu0 %v4023
    %4490 = vmatprep.subr.bf16.mxu0 %v4018
    %4491 = vmatpush1.bf16.msra.mxu0 %v4017
    %4492 = vmatprep.subr.bf16.mxu0 %v4012
    %4493 = vmatpush1.bf16.msra.mxu0 %v4011
    %4494 = vmatprep.subr.bf16.mxu0 %v4006
    %4495 = vmatpush1.bf16.msra.mxu0 %v4005
    %4496 = vmatprep.subr.bf16.mxu0 %v4000
    %4497 = vmatpush1.bf16.msra.mxu0 %v3999
    %4498 = vmatprep.subr.bf16.mxu0 %v3994
    %4499 = vmatpush1.bf16.msra.mxu0 %v3993
    %4500 = vmatprep.subr.bf16.mxu0 %v4084
    %4501 = vmatpush2.bf16.msra.mxu0 %v4083
    %4502 = vmatprep.subr.bf16.mxu0 %v4078
    %4503 = vmatpush2.bf16.msra.mxu0 %v4077
    %4504 = vmatprep.subr.bf16.mxu0 %v4072
    %4505 = vmatpush2.bf16.msra.mxu0 %v4071
    %4506 = vmatprep.subr.bf16.mxu0 %v4066
    %4507 = vmatpush2.bf16.msra.mxu0 %v4065
    %4508 = vmatprep.subr.bf16.mxu0 %v4060
    %4509 = vmatpush2.bf16.msra.mxu0 %v4059
    %4510 = vmatprep.subr.bf16.mxu0 %v4054
    %4511 = vmatpush2.bf16.msra.mxu0 %v4053
    %4512 = vmatprep.subr.bf16.mxu0 %v4048
    %4513 = vmatpush2.bf16.msra.mxu0 %v4047
    %4514 = vmatprep.subr.bf16.mxu0 %v4042
    %4515 = vmatpush2.bf16.msra.mxu0 %v4041
    %4516 = vmatprep.mubr.bf16.mxu0 %v3698
    %4517 = vmatmul.mubr.bf16.gmra.mxu0 %v3697
    %v4518 = vpop.f32.mrf.mxu0
    %v4519 = vadd.f32 %v4478, %v4518
    %v4520 = vpop.f32.mrf.mxu0
    %v4521 = vadd.f32 %v4480, %v4520
    %v4522 = vpop.f32.mrf.mxu0
    %v4523 = vpop.f32.mrf.mxu0
    %4524 = vdwg.mxu0
    %4525 = vmatprep.subr.bf16.mxu0 %v4132
    %4526 = vmatpush1.bf16.msra.mxu0 %v4131
    %4527 = vmatprep.subr.bf16.mxu0 %v4126
    %4528 = vmatpush1.bf16.msra.mxu0 %v4125
    %4529 = vmatprep.subr.bf16.mxu0 %v4120
    %4530 = vmatpush1.bf16.msra.mxu0 %v4119
    %4531 = vmatprep.subr.bf16.mxu0 %v4114
    %4532 = vmatpush1.bf16.msra.mxu0 %v4113
    %4533 = vmatprep.subr.bf16.mxu0 %v4108
    %4534 = vmatpush1.bf16.msra.mxu0 %v4107
    %4535 = vmatprep.subr.bf16.mxu0 %v4102
    %4536 = vmatpush1.bf16.msra.mxu0 %v4101
    %4537 = vmatprep.subr.bf16.mxu0 %v4096
    %4538 = vmatpush1.bf16.msra.mxu0 %v4095
    %4539 = vmatprep.subr.bf16.mxu0 %v4090
    %4540 = vmatpush1.bf16.msra.mxu0 %v4089
    %4541 = vmatprep.subr.bf16.mxu0 %v4180
    %4542 = vmatpush2.bf16.msra.mxu0 %v4179
    %4543 = vmatprep.subr.bf16.mxu0 %v4174
    %4544 = vmatpush2.bf16.msra.mxu0 %v4173
    %4545 = vmatprep.subr.bf16.mxu0 %v4168
    %4546 = vmatpush2.bf16.msra.mxu0 %v4167
    %4547 = vmatprep.subr.bf16.mxu0 %v4162
    %4548 = vmatpush2.bf16.msra.mxu0 %v4161
    %4549 = vmatprep.subr.bf16.mxu0 %v4156
    %4550 = vmatpush2.bf16.msra.mxu0 %v4155
    %4551 = vmatprep.subr.bf16.mxu0 %v4150
    %4552 = vmatpush2.bf16.msra.mxu0 %v4149
    %4553 = vmatprep.subr.bf16.mxu0 %v4144
    %4554 = vmatpush2.bf16.msra.mxu0 %v4143
    %4555 = vmatprep.subr.bf16.mxu0 %v4138
    %4556 = vmatpush2.bf16.msra.mxu0 %v4137
    %4557 = vmatprep.mubr.bf16.mxu0 %v3700
    %4558 = vmatmul.mubr.bf16.gmra.mxu0 %v3699
    %v4559 = vpop.f32.mrf.mxu0
    %v4560 = vadd.f32 %v4519, %v4559
    %v4561 = vpop.f32.mrf.mxu0
    %v4562 = vadd.f32 %v4521, %v4561
    %v4563 = vpop.f32.mrf.mxu0
    %v4564 = vpop.f32.mrf.mxu0
    %4565 = vdwg.mxu0
    %4566 = vmatprep.subr.bf16.mxu0 %v4228
    %4567 = vmatpush1.bf16.msra.mxu0 %v4227
    %4568 = vmatprep.subr.bf16.mxu0 %v4222
    %4569 = vmatpush1.bf16.msra.mxu0 %v4221
    %4570 = vmatprep.subr.bf16.mxu0 %v4216
    %4571 = vmatpush1.bf16.msra.mxu0 %v4215
    %4572 = vmatprep.subr.bf16.mxu0 %v4210
    %4573 = vmatpush1.bf16.msra.mxu0 %v4209
    %4574 = vmatprep.subr.bf16.mxu0 %v4204
    %4575 = vmatpush1.bf16.msra.mxu0 %v4203
    %4576 = vmatprep.subr.bf16.mxu0 %v4198
    %4577 = vmatpush1.bf16.msra.mxu0 %v4197
    %4578 = vmatprep.subr.bf16.mxu0 %v4192
    %4579 = vmatpush1.bf16.msra.mxu0 %v4191
    %4580 = vmatprep.subr.bf16.mxu0 %v4186
    %4581 = vmatpush1.bf16.msra.mxu0 %v4185
    %4582 = vmatprep.subr.bf16.mxu0 %v4276
    %4583 = vmatpush2.bf16.msra.mxu0 %v4275
    %4584 = vmatprep.subr.bf16.mxu0 %v4270
    %4585 = vmatpush2.bf16.msra.mxu0 %v4269
    %4586 = vmatprep.subr.bf16.mxu0 %v4264
    %4587 = vmatpush2.bf16.msra.mxu0 %v4263
    %4588 = vmatprep.subr.bf16.mxu0 %v4258
    %4589 = vmatpush2.bf16.msra.mxu0 %v4257
    %4590 = vmatprep.subr.bf16.mxu0 %v4252
    %4591 = vmatpush2.bf16.msra.mxu0 %v4251
    %4592 = vmatprep.subr.bf16.mxu0 %v4246
    %4593 = vmatpush2.bf16.msra.mxu0 %v4245
    %4594 = vmatprep.subr.bf16.mxu0 %v4240
    %4595 = vmatpush2.bf16.msra.mxu0 %v4239
    %4596 = vmatprep.subr.bf16.mxu0 %v4234
    %4597 = vmatpush2.bf16.msra.mxu0 %v4233
    %4598 = vmatprep.mubr.bf16.mxu0 %v3702
    %4599 = vmatmul.mubr.bf16.gmra.mxu0 %v3701
    %v4600 = vpop.f32.mrf.mxu0
    %v4601 = vadd.f32 %v4560, %v4600
    %v4602 = vpop.f32.mrf.mxu0
    %v4603 = vadd.f32 %v4562, %v4602
    %v4604 = vpop.f32.mrf.mxu0
    %v4605 = vpop.f32.mrf.mxu0
    %4606 = vdwg.mxu0
    %4607 = vmatprep.subr.bf16.mxu0 %v3942
    %4608 = vmatpush1.bf16.msra.mxu0 %v3941
    %4609 = vmatprep.subr.bf16.mxu0 %v3936
    %4610 = vmatpush1.bf16.msra.mxu0 %v3935
    %4611 = vmatprep.subr.bf16.mxu0 %v3930
    %4612 = vmatpush1.bf16.msra.mxu0 %v3929
    %4613 = vmatprep.subr.bf16.mxu0 %v3924
    %4614 = vmatpush1.bf16.msra.mxu0 %v3923
    %4615 = vmatprep.subr.bf16.mxu0 %v3918
    %4616 = vmatpush1.bf16.msra.mxu0 %v3917
    %4617 = vmatprep.subr.bf16.mxu0 %v3912
    %4618 = vmatpush1.bf16.msra.mxu0 %v3911
    %4619 = vmatprep.subr.bf16.mxu0 %v3906
    %4620 = vmatpush1.bf16.msra.mxu0 %v3905
    %4621 = vmatprep.subr.bf16.mxu0 %v3900
    %4622 = vmatpush1.bf16.msra.mxu0 %v3899
    %4623 = vmatprep.subr.bf16.mxu0 %v3990
    %4624 = vmatpush2.bf16.msra.mxu0 %v3989
    %4625 = vmatprep.subr.bf16.mxu0 %v3984
    %4626 = vmatpush2.bf16.msra.mxu0 %v3983
    %4627 = vmatprep.subr.bf16.mxu0 %v3978
    %4628 = vmatpush2.bf16.msra.mxu0 %v3977
    %4629 = vmatprep.subr.bf16.mxu0 %v3972
    %4630 = vmatpush2.bf16.msra.mxu0 %v3971
    %4631 = vmatprep.subr.bf16.mxu0 %v3966
    %4632 = vmatpush2.bf16.msra.mxu0 %v3965
    %4633 = vmatprep.subr.bf16.mxu0 %v3960
    %4634 = vmatpush2.bf16.msra.mxu0 %v3959
    %4635 = vmatprep.subr.bf16.mxu0 %v3954
    %4636 = vmatpush2.bf16.msra.mxu0 %v3953
    %4637 = vmatprep.subr.bf16.mxu0 %v3948
    %4638 = vmatpush2.bf16.msra.mxu0 %v3947
    %4639 = vmatprep.mubr.bf16.mxu0 %v3696
    %4640 = vmatmul.mubr.bf16.gmra.mxu0 %v3695
    %v4641 = vpop.f32.mrf.mxu0
    %v4642 = vadd.f32 0.0, %v4641
    %v4643 = vpop.f32.mrf.mxu0
    %v4644 = vadd.f32 0.0, %v4643
    %v4645 = vpop.f32.mrf.mxu0
    %v4646 = vpop.f32.mrf.mxu0
    %4647 = vdwg.mxu0
    %4648 = vmatprep.subr.bf16.mxu0 %v4038
    %4649 = vmatpush1.bf16.msra.mxu0 %v4037
    %4650 = vmatprep.subr.bf16.mxu0 %v4032
    %4651 = vmatpush1.bf16.msra.mxu0 %v4031
    %4652 = vmatprep.subr.bf16.mxu0 %v4026
    %4653 = vmatpush1.bf16.msra.mxu0 %v4025
    %4654 = vmatprep.subr.bf16.mxu0 %v4020
    %4655 = vmatpush1.bf16.msra.mxu0 %v4019
    %4656 = vmatprep.subr.bf16.mxu0 %v4014
    %4657 = vmatpush1.bf16.msra.mxu0 %v4013
    %4658 = vmatprep.subr.bf16.mxu0 %v4008
    %4659 = vmatpush1.bf16.msra.mxu0 %v4007
    %4660 = vmatprep.subr.bf16.mxu0 %v4002
    %4661 = vmatpush1.bf16.msra.mxu0 %v4001
    %4662 = vmatprep.subr.bf16.mxu0 %v3996
    %4663 = vmatpush1.bf16.msra.mxu0 %v3995
    %4664 = vmatprep.subr.bf16.mxu0 %v4086
    %4665 = vmatpush2.bf16.msra.mxu0 %v4085
    %4666 = vmatprep.subr.bf16.mxu0 %v4080
    %4667 = vmatpush2.bf16.msra.mxu0 %v4079
    %4668 = vmatprep.subr.bf16.mxu0 %v4074
    %4669 = vmatpush2.bf16.msra.mxu0 %v4073
    %4670 = vmatprep.subr.bf16.mxu0 %v4068
    %4671 = vmatpush2.bf16.msra.mxu0 %v4067
    %4672 = vmatprep.subr.bf16.mxu0 %v4062
    %4673 = vmatpush2.bf16.msra.mxu0 %v4061
    %4674 = vmatprep.subr.bf16.mxu0 %v4056
    %4675 = vmatpush2.bf16.msra.mxu0 %v4055
    %4676 = vmatprep.subr.bf16.mxu0 %v4050
    %4677 = vmatpush2.bf16.msra.mxu0 %v4049
    %4678 = vmatprep.subr.bf16.mxu0 %v4044
    %4679 = vmatpush2.bf16.msra.mxu0 %v4043
    %4680 = vmatprep.mubr.bf16.mxu0 %v3698
    %4681 = vmatmul.mubr.bf16.gmra.mxu0 %v3697
    %v4682 = vpop.f32.mrf.mxu0
    %v4683 = vadd.f32 %v4642, %v4682
    %v4684 = vpop.f32.mrf.mxu0
    %v4685 = vadd.f32 %v4644, %v4684
    %v4686 = vpop.f32.mrf.mxu0
    %v4687 = vpop.f32.mrf.mxu0
    %4688 = vdwg.mxu0
    %4689 = vmatprep.subr.bf16.mxu0 %v4134
    %4690 = vmatpush1.bf16.msra.mxu0 %v4133
    %4691 = vmatprep.subr.bf16.mxu0 %v4128
    %4692 = vmatpush1.bf16.msra.mxu0 %v4127
    %4693 = vmatprep.subr.bf16.mxu0 %v4122
    %4694 = vmatpush1.bf16.msra.mxu0 %v4121
    %4695 = vmatprep.subr.bf16.mxu0 %v4116
    %4696 = vmatpush1.bf16.msra.mxu0 %v4115
    %4697 = vmatprep.subr.bf16.mxu0 %v4110
    %4698 = vmatpush1.bf16.msra.mxu0 %v4109
    %4699 = vmatprep.subr.bf16.mxu0 %v4104
    %4700 = vmatpush1.bf16.msra.mxu0 %v4103
    %4701 = vmatprep.subr.bf16.mxu0 %v4098
    %4702 = vmatpush1.bf16.msra.mxu0 %v4097
    %4703 = vmatprep.subr.bf16.mxu0 %v4092
    %4704 = vmatpush1.bf16.msra.mxu0 %v4091
    %4705 = vmatprep.subr.bf16.mxu0 %v4182
    %4706 = vmatpush2.bf16.msra.mxu0 %v4181
    %4707 = vmatprep.subr.bf16.mxu0 %v4176
    %4708 = vmatpush2.bf16.msra.mxu0 %v4175
    %4709 = vmatprep.subr.bf16.mxu0 %v4170
    %4710 = vmatpush2.bf16.msra.mxu0 %v4169
    %4711 = vmatprep.subr.bf16.mxu0 %v4164
    %4712 = vmatpush2.bf16.msra.mxu0 %v4163
    %4713 = vmatprep.subr.bf16.mxu0 %v4158
    %4714 = vmatpush2.bf16.msra.mxu0 %v4157
    %4715 = vmatprep.subr.bf16.mxu0 %v4152
    %4716 = vmatpush2.bf16.msra.mxu0 %v4151
    %4717 = vmatprep.subr.bf16.mxu0 %v4146
    %4718 = vmatpush2.bf16.msra.mxu0 %v4145
    %4719 = vmatprep.subr.bf16.mxu0 %v4140
    %4720 = vmatpush2.bf16.msra.mxu0 %v4139
    %4721 = vmatprep.mubr.bf16.mxu0 %v3700
    %4722 = vmatmul.mubr.bf16.gmra.mxu0 %v3699
    %v4723 = vpop.f32.mrf.mxu0
    %v4724 = vadd.f32 %v4683, %v4723
    %v4725 = vpop.f32.mrf.mxu0
    %v4726 = vadd.f32 %v4685, %v4725
    %v4727 = vpop.f32.mrf.mxu0
    %v4728 = vpop.f32.mrf.mxu0
    %4729 = vdwg.mxu0
    %4730 = vmatprep.subr.bf16.mxu0 %v4230
    %4731 = vmatpush1.bf16.msra.mxu0 %v4229
    %4732 = vmatprep.subr.bf16.mxu0 %v4224
    %4733 = vmatpush1.bf16.msra.mxu0 %v4223
    %4734 = vmatprep.subr.bf16.mxu0 %v4218
    %4735 = vmatpush1.bf16.msra.mxu0 %v4217
    %4736 = vmatprep.subr.bf16.mxu0 %v4212
    %4737 = vmatpush1.bf16.msra.mxu0 %v4211
    %4738 = vmatprep.subr.bf16.mxu0 %v4206
    %4739 = vmatpush1.bf16.msra.mxu0 %v4205
    %4740 = vmatprep.subr.bf16.mxu0 %v4200
    %4741 = vmatpush1.bf16.msra.mxu0 %v4199
    %4742 = vmatprep.subr.bf16.mxu0 %v4194
    %4743 = vmatpush1.bf16.msra.mxu0 %v4193
    %4744 = vmatprep.subr.bf16.mxu0 %v4188
    %4745 = vmatpush1.bf16.msra.mxu0 %v4187
    %4746 = vmatprep.subr.bf16.mxu0 %v4278
    %4747 = vmatpush2.bf16.msra.mxu0 %v4277
    %4748 = vmatprep.subr.bf16.mxu0 %v4272
    %4749 = vmatpush2.bf16.msra.mxu0 %v4271
    %4750 = vmatprep.subr.bf16.mxu0 %v4266
    %4751 = vmatpush2.bf16.msra.mxu0 %v4265
    %4752 = vmatprep.subr.bf16.mxu0 %v4260
    %4753 = vmatpush2.bf16.msra.mxu0 %v4259
    %4754 = vmatprep.subr.bf16.mxu0 %v4254
    %4755 = vmatpush2.bf16.msra.mxu0 %v4253
    %4756 = vmatprep.subr.bf16.mxu0 %v4248
    %4757 = vmatpush2.bf16.msra.mxu0 %v4247
    %4758 = vmatprep.subr.bf16.mxu0 %v4242
    %4759 = vmatpush2.bf16.msra.mxu0 %v4241
    %4760 = vmatprep.subr.bf16.mxu0 %v4236
    %4761 = vmatpush2.bf16.msra.mxu0 %v4235
    %4762 = vmatprep.mubr.bf16.mxu0 %v3702
    %4763 = vmatmul.mubr.bf16.gmra.mxu0 %v3701
    %v4764 = vpop.f32.mrf.mxu0
    %v4765 = vadd.f32 %v4724, %v4764
    %v4766 = vpop.f32.mrf.mxu0
    %v4767 = vadd.f32 %v4726, %v4766
    %v4768 = vpop.f32.mrf.mxu0
    %v4769 = vpop.f32.mrf.mxu0
    %4770 = vdwg.mxu0
    %v4772 = vlaneseq
    %v4773 = vshrl.u32 %v4772, 7
    %v4774 = vsub.s32 0, %v4773
    %v4775 = vrot.slane %v106, %v4774
    %v4776 = vlaneseq
    %v4777 = vshrl.u32 %v4776, 7
    %v4778 = vsub.s32 1, %v4777
    %v4779 = vrot.slane %v106, %v4778
    %v4780 = vlaneseq
    %v4781 = vshrl.u32 %v4780, 7
    %v4782 = vsub.s32 2, %v4781
    %v4783 = vrot.slane %v106, %v4782
    %v4784 = vlaneseq
    %v4785 = vshrl.u32 %v4784, 7
    %v4786 = vsub.s32 3, %v4785
    %v4787 = vrot.slane %v106, %v4786
    %v4788 = vlaneseq
    %v4789 = vshrl.u32 %v4788, 7
    %v4790 = vsub.s32 4, %v4789
    %v4791 = vrot.slane %v106, %v4790
    %v4792 = vlaneseq
    %v4793 = vshrl.u32 %v4792, 7
    %v4794 = vsub.s32 5, %v4793
    %v4795 = vrot.slane %v106, %v4794
    %v4802 = vmul.f32 %v4437, %v4775
    %v4803 = vmul.f32 %v4439, %v4779
    %v4804 = vmul.f32 %v4601, %v4783
    %v4805 = vmul.f32 %v4603, %v4787
    %v4806 = vmul.f32 %v4765, %v4791
    %v4807 = vmul.f32 %v4767, %v4795
    %v4809 = vlaneseq
    %v4810 = vshrl.u32 %v4809, 7
    %v4811 = vsub.s32 0, %v4810
    %v4812 = vrot.slane %v104, %v4811
    %v4813 = vlaneseq
    %v4814 = vshrl.u32 %v4813, 7
    %v4815 = vsub.s32 1, %v4814
    %v4816 = vrot.slane %v104, %v4815
    %v4817 = vlaneseq
    %v4818 = vshrl.u32 %v4817, 7
    %v4819 = vsub.s32 2, %v4818
    %v4820 = vrot.slane %v104, %v4819
    %v4821 = vlaneseq
    %v4822 = vshrl.u32 %v4821, 7
    %v4823 = vsub.s32 3, %v4822
    %v4824 = vrot.slane %v104, %v4823
    %v4825 = vlaneseq
    %v4826 = vshrl.u32 %v4825, 7
    %v4827 = vsub.s32 4, %v4826
    %v4828 = vrot.slane %v104, %v4827
    %v4829 = vlaneseq
    %v4830 = vshrl.u32 %v4829, 7
    %v4831 = vsub.s32 5, %v4830
    %v4832 = vrot.slane %v104, %v4831
    %v4839 = vadd.f32 %v4802, %v4812
    %v4840 = vadd.f32 %v4803, %v4816
    %v4841 = vadd.f32 %v4804, %v4820
    %v4842 = vadd.f32 %v4805, %v4824
    %v4843 = vadd.f32 %v4806, %v4828
    %v4844 = vadd.f32 %v4807, %v4832
    %4845 = vst [vmem:[#allocation13] sm:$0xff] %v4839
    %4846 = vst [vmem:[#allocation13 + $0x8] sm:$0xff] %v4840
    %4847 = vst [vmem:[#allocation13 + $0x10] sm:$0xff] %v4841
    %4848 = vst [vmem:[#allocation13 + $0x18] sm:$0xff] %v4842
    %4849 = vst [vmem:[#allocation13 + $0x20] sm:$0xff] %v4843
    %4850 = vst [vmem:[#allocation13 + $0x28] sm:$0xff] %v4844
    // Predicated region
    $region42: #{tpu_custom_call.1} parent=1 // pred_check
      _
    $region43: #{tpu_custom_call.1} parent=1 // pred_check_branch
      %4852 = sbr.rel (0) target = $region45
    $region44: #{tpu_custom_call.1} parent=1 // pred_region
      %s4854 = ssub.s32 768, 768
      %4855 = vsyncadd [#allocation7], %s4854
      %s4857 = sshll.u32 [#allocation13], 4
      %s4858 = int_to_ptr.vmem [resolvable:$true] %s4857
      %4860 = dma.vmem_to_hbm [thread:$0]  %s4858, 768, %s6, [#allocation7]
    $region45: #{tpu_custom_call.1} parent=1 // pred_fallthru
      _
    // Predicated region
    $region46: #{tpu_custom_call.1} parent=1 // pred_check
      _
    $region47: #{tpu_custom_call.1} parent=1 // pred_check_branch
      %4862 = sbr.rel (0) target = $region49
    $region48: #{tpu_custom_call.1} parent=1 // pred_region
      %4863 = dma.done [#allocation7], 768
    $region49: #{tpu_custom_call.1} parent=1 // pred_fallthru
      _
    %4864 = vsyncpa [#allocation6], 1
    %4865 = vsyncpa [#allocation9], 1
    %4866 = vsyncpa [#allocation12], 1
    %4867 = vsyncpa [#allocation7], 1
  %4868 = vsyncmov [#allocation4]
  %s4869 = vpop.sfrf %4868
  %p4870 = scmp.eq.s32.totalorder %s4869, 0
  %p4871 = pneg %p4870
  %4873 = shalt.err (%p4871)
  %s4874 = scalar_lea.sflag [#allocation4], 1
  %4875 = vsyncmov %s4874
  %s4876 = vpop.sfrf %4875
  %p4877 = scmp.eq.s32.totalorder %s4876, 0
  %p4878 = pneg %p4877
  %4880 = shalt.err (%p4878)

</llo_original>
